<compile_context>
chip_gen: v6e
topology: v6e:2x2x1
jax: 0.10.0
libtpu: 0.0.40
codegen_flags: <defaults>
</compile_context>

<pallas_src>
import jax
import jax.numpy as jnp
from jax import lax
from jax.experimental import pallas as pl
from jax.experimental.pallas import tpu as pltpu

_LANE = 128
_SUB = 8


def _round_up(n, m):
    return (n + m - 1) // m * m


def _chunk_len(t, cap):
    """Largest divisor of t that is <= cap (keeps chunk loops exact)."""
    for d in range(min(cap, t), 0, -1):
        if t % d == 0:
            return d
    return t


def _physical_vmem_bytes():
    try:
        return int(pltpu.get_tpu_info().vmem_capacity_bytes)
    except Exception:
        pass
    try:
        kind = jax.devices()[0].device_kind.lower()
    except Exception:
        kind = ""
    if "v7" in kind or "7x" in kind:
        return 64 * 2 ** 20
    return 128 * 2 ** 20


def _replicated_spec(shape):
    n = len(shape)
    index_map = lambda i, _n=n: (0,) * _n
    try:
        # Constant index_map -> single buffer is enough; halves weight VMEM.
        return pl.BlockSpec(shape, index_map, pipeline_mode=pl.Buffered(1))
    except Exception:
        return pl.BlockSpec(shape, index_map)


def _make_gru_decoder_kernel(compute_dtype, unroll):
    cdt = compute_dtype

    def kernel(x_ref,        # (T, Bb, HinP)  compute_dtype
               conv_wT_ref,  # (HinP, Cp)     compute_dtype (pre-transposed)
               conv_b_ref,   # (1, Cp)        f32
               gamma_ref,    # (1, Cp)        f32
               beta_ref,     # (1, Cp)        f32
               w_i_ref,      # (Cp, 3Hp)      compute_dtype [W_ir|W_iz|W_in]^T
               b_i_ref,      # (1, 3Hp)       f32 [b_ir+b_hr | b_iz+b_hz | b_in]
               w_h_ref,      # (Hp, 3Hp)      compute_dtype [W_hr|W_hz|W_hn]^T
               b_hn_ref,     # (1, Hp)        f32
               lin_w_ref,    # (Hp, Cp)       compute_dtype (pre-transposed)
               lin_b_ref,    # (1, Cp)        f32
               out_ref,      # (T, Bb, Cp)    f32
               gates_ref,    # scratch (Tc, Bb, 3Hp) f32
               hbuf_ref):    # scratch (Tc, Bb, Hp)  compute_dtype
        T, Bb, HinP = x_ref.shape
        Hp = w_h_ref.shape[0]
        Cp = conv_wT_ref.shape[1]
        Tc = gates_ref.shape[0]
        n_tc = T // Tc

        def conv_chunk(c):
            # Conv1d(kernel_size=1) on one time chunk: (Tc*Bb, HinP)@(HinP, Cp).
            x2d = x_ref[pl.ds(c * Tc, Tc)].reshape(Tc * Bb, HinP)
            y = jnp.dot(x2d, conv_wT_ref[...],
                        preferred_element_type=jnp.float32) + conv_b_ref[...]
            return y.reshape(Tc, Bb, Cp)

        # ---- pass 1: InstanceNorm statistics over time (chunked sum / sumsq) ----
        s = jnp.zeros((Bb, Cp), jnp.float32)
        ss = jnp.zeros((Bb, Cp), jnp.float32)
        for c in range(n_tc):
            y = conv_chunk(c)
            s = s + jnp.sum(y, axis=0)
            ss = ss + jnp.sum(y * y, axis=0)
        mean = s * (1.0 / T)
        var = jnp.maximum(ss * (1.0 / T) - mean * mean, 0.0)   # biased variance
        rstd = lax.rsqrt(var + 1e-5)
        scale = gamma_ref[...] * rstd                  # (Bb, Cp)
        shift = beta_ref[...] - mean * scale           # (Bb, Cp)

        b_hn_b = jnp.broadcast_to(b_hn_ref[...], (Bb, Hp))   # hoisted broadcast

        # ---- pass 2: reversed-time GRU, chunk by chunk (h carried across) ----
        # Iterating chunks last->first and t = Tc-1..0 inside each chunk visits
        # global time T-1..0 in order, which equals flip -> GRU -> flip-back of
        # the PyTorch forward (batch_first, h0 = 0).
        h = jnp.zeros((Bb, Hp), jnp.float32)
        for c in range(n_tc - 1, -1, -1):
            y = conv_chunk(c)
            y = jnp.maximum(y * scale + shift, 0.0)    # IN affine + ReLU
            # Dropout: inference mode -> identity.
            gi = jnp.dot(y.reshape(Tc * Bb, Cp).astype(cdt), w_i_ref[...],
                         preferred_element_type=jnp.float32) + b_i_ref[...]
            gates_ref[...] = gi.reshape(Tc, Bb, 3 * Hp)

            def step(i, h_prev):
                t = Tc - 1 - i
                gi_t = gates_ref[t]                    # (Bb, 3Hp) f32
                gh = jnp.dot(h_prev.astype(cdt), w_h_ref[...],
                             preferred_element_type=jnp.float32)
                r = jax.nn.sigmoid(gi_t[:, :Hp] + gh[:, :Hp])
                z = jax.nn.sigmoid(gi_t[:, Hp:2 * Hp] + gh[:, Hp:2 * Hp])
                n = jnp.tanh(gi_t[:, 2 * Hp:] + r * (gh[:, 2 * Hp:] + b_hn_b))
                h_new = (1.0 - z) * n + z * h_prev
                hbuf_ref[t] = h_new.astype(hbuf_ref.dtype)
                return h_new

            h = lax.fori_loop(0, Tc, step, h, unroll=unroll)

            # reconstr: Linear(Hp -> Cp) on the chunk, lane-dense store.
            o = jnp.dot(hbuf_ref[...].reshape(Tc * Bb, Hp), lin_w_ref[...],
                        preferred_element_type=jnp.float32) + lin_b_ref[...]
            out_ref[pl.ds(c * Tc, Tc)] = o.reshape(Tc, Bb, Cp)

    return kernel


def gru_decoder_forward(x, params, *, compute_dtype=jnp.bfloat16,
                        batch_block=None, time_chunk=64):
    """x: (B, hidden_size, T) float32 -> (B, n_channels, T) float32.

    compute_dtype=bf16 (default) for production sizes; the small-shape
    correctness check below passes compute_dtype=float32.
    """
    B, Hin, T = x.shape
    C = params["conv_w"].shape[0]
    H = params["w_hh"].shape[1]

    # ---- padded / blocked sizes -------------------------------------------
    Cp = _round_up(C, _LANE)
    Hp = _round_up(H, _LANE)
    HinP = _round_up(Hin, _LANE)
    Tc = _chunk_len(T, time_chunk)

    # ---- generation-aware VMEM budget -> batch block selection -------------
    cbytes = jnp.dtype(compute_dtype).itemsize
    phys_vmem = _physical_vmem_bytes()
    usable = phys_vmem - 12 * 2 ** 20          # headroom for compiler scratch
    budget = int(usable * 0.85)

    def est_bytes(bb_):
        in_blk = 2 * T * bb_ * HinP * cbytes               # double-buffered in
        out_blk = 2 * T * bb_ * Cp * 4                     # double-buffered out
        wts = (HinP * Cp + Cp * 3 * Hp + Hp * 3 * Hp + Hp * Cp) * cbytes \
            + (4 * Cp + 3 * Hp + Hp) * 4                   # single-buffered
        scratch = Tc * bb_ * 3 * Hp * 4 + Tc * bb_ * Hp * cbytes
        temps = Tc * bb_ * (2 * Cp + 3 * Hp) * 4 + 6 * bb_ * Cp * 4
        return in_blk + out_blk + wts + scratch + temps

    if batch_block is None:
        bb = min(_round_up(B, _SUB), 128)
        if phys_vmem <= 64 * 2 ** 20 and B >= 2 * _SUB:
            # v7x: 2 TensorCores share the chip -> keep >= 2 grid blocks.
            bb = min(bb, _round_up(-(-B // 2), _SUB))
    else:
        bb = _round_up(batch_block, _SUB)
    while bb > _SUB and est_bytes(bb) > budget:
        bb -= _SUB
    Bp = _round_up(B, bb)
    vmem_limit = int(min(max(est_bytes(bb) * 5 // 4, 32 * 2 ** 20), usable))

    # ---- parameter plumbing (glue): split / transpose / zero-pad / cast ----
    def pad2(a, r, c):
        return jnp.pad(a, ((0, r - a.shape[0]), (0, c - a.shape[1])))

    def pad1(v, n):
        return jnp.pad(v, (0, n - v.shape[0]))

    w_ih, w_hh = params["w_ih"], params["w_hh"]          # (3H, C), (3H, H)
    b_ih, b_hh = params["b_ih"], params["b_hh"]          # (3H,)

    w_i = jnp.concatenate([pad2(w_ih[0:H].T, Cp, Hp),
                           pad2(w_ih[H:2 * H].T, Cp, Hp),
                           pad2(w_ih[2 * H:3 * H].T, Cp, Hp)],
                          axis=1).astype(compute_dtype)                  # (Cp, 3Hp)
    w_h = jnp.concatenate([pad2(w_hh[0:H].T, Hp, Hp),
                           pad2(w_hh[H:2 * H].T, Hp, Hp),
                           pad2(w_hh[2 * H:3 * H].T, Hp, Hp)],
                          axis=1).astype(compute_dtype)                  # (Hp, 3Hp)
    b_i = jnp.concatenate([pad1(b_ih[0:H] + b_hh[0:H], Hp),
                           pad1(b_ih[H:2 * H] + b_hh[H:2 * H], Hp),
                           pad1(b_ih[2 * H:3 * H], Hp)]).reshape(1, 3 * Hp)
    b_hn = pad1(b_hh[2 * H:3 * H], Hp).reshape(1, Hp)

    conv_wT = pad2(params["conv_w"][:, :, 0].T, HinP, Cp).astype(compute_dtype)
    conv_b = pad1(params["conv_b"], Cp).reshape(1, Cp)
    gamma = pad1(params["in_gamma"], Cp).reshape(1, Cp)
    beta = pad1(params["in_beta"], Cp).reshape(1, Cp)
    lin_w = pad2(params["lin_w"].T, Hp, Cp).astype(compute_dtype)        # (Hp, Cp)
    lin_b = pad1(params["lin_b"], Cp).reshape(1, Cp)

    # x: (B, Hin, T) -> (T, Bp, HinP), zero-padded, pre-cast (layout glue in XLA).
    x_tbh = jnp.transpose(x, (2, 0, 1))
    x_tbh = jnp.pad(x_tbh, ((0, 0), (0, Bp - B), (0, HinP - Hin)))
    x_tbh = x_tbh.astype(compute_dtype)

    unroll = True if Tc <= 32 else 8
    kernel = _make_gru_decoder_kernel(compute_dtype, unroll)

    grid_spec = pltpu.PrefetchScalarGridSpec(
        num_scalar_prefetch=0,
        grid=(Bp // bb,),
        in_specs=[
            pl.BlockSpec((T, bb, HinP), lambda i: (0, i, 0)),
            _replicated_spec((HinP, Cp)),
            _replicated_spec((1, Cp)), _replicated_spec((1, Cp)),
            _replicated_spec((1, Cp)),
            _replicated_spec((Cp, 3 * Hp)), _replicated_spec((1, 3 * Hp)),
            _replicated_spec((Hp, 3 * Hp)), _replicated_spec((1, Hp)),
            _replicated_spec((Hp, Cp)), _replicated_spec((1, Cp)),
        ],
        out_specs=pl.BlockSpec((T, bb, Cp), lambda i: (0, i, 0)),
        scratch_shapes=[
            pltpu.VMEM((Tc, bb, 3 * Hp), jnp.float32),
            pltpu.VMEM((Tc, bb, Hp), compute_dtype),
        ],
    )
    out_tbc = pl.pallas_call(
        kernel,
        out_shape=jax.ShapeDtypeStruct((T, Bp, Cp), jnp.float32),
        grid_spec=grid_spec,
        compiler_params=pltpu.CompilerParams(
            dimension_semantics=("parallel",),
            vmem_limit_bytes=vmem_limit),
    )(x_tbh, conv_wT, conv_b, gamma, beta, w_i, b_i, w_h, b_hn, lin_w, lin_b)

    # back to PyTorch NCL layout: (T, Bp, Cp) -> (B, C, T)  (free layout in XLA)
    return jnp.transpose(out_tbc[:, :B, :C], (1, 2, 0))


def init_params(key, n_channels, hidden_size, hidden_gru_size):
    C, Hin, H = n_channels, hidden_size, hidden_gru_size
    ks = jax.random.split(key, 8)

    def u(k, shape, scale):
        return jax.random.uniform(k, shape, jnp.float32, -scale, scale)

    return dict(
        conv_w=u(ks[0], (C, Hin, 1), 1.0 / Hin ** 0.5),   # nn.Conv1d weight
        conv_b=u(ks[1], (C,), 1.0 / Hin ** 0.5),
        in_gamma=jnp.ones((C,), jnp.float32),             # InstanceNorm1d affine defaults
        in_beta=jnp.zeros((C,), jnp.float32),
        w_ih=u(ks[2], (3 * H, C), 1.0 / H ** 0.5),        # GRU weight_ih_l0
        w_hh=u(ks[3], (3 * H, H), 1.0 / H ** 0.5),        # GRU weight_hh_l0
        b_ih=u(ks[4], (3 * H,), 1.0 / H ** 0.5),
        b_hh=u(ks[5], (3 * H,), 1.0 / H ** 0.5),
        lin_w=u(ks[6], (C, H), 1.0 / H ** 0.5),           # reconstr Linear
        lin_b=u(ks[7], (C,), 1.0 / H ** 0.5),
    )


def reference_forward(x, params):
    """Pure-JAX reference matching the PyTorch forward (eval mode)."""
    H = params["w_hh"].shape[1]
    with jax.default_matmul_precision("highest"):
        conv_w = params["conv_w"][:, :, 0]
        y = jnp.einsum("ch,bht->bct", conv_w, x) + params["conv_b"][None, :, None]
        mean = jnp.mean(y, axis=2, keepdims=True)
        var = jnp.mean((y - mean) ** 2, axis=2, keepdims=True)
        y = (y - mean) / jnp.sqrt(var + 1e-5)
        y = params["in_gamma"][None, :, None] * y + params["in_beta"][None, :, None]
        y = jnp.maximum(y, 0.0)
        x_btc = jnp.transpose(y, (0, 2, 1))
        x_rev = x_btc[:, ::-1, :]
        w_ih, w_hh = params["w_ih"], params["w_hh"]
        b_ih, b_hh = params["b_ih"], params["b_hh"]

        def step(h, xt):
            gi = xt @ w_ih.T + b_ih
            gh = h @ w_hh.T + b_hh
            r = jax.nn.sigmoid(gi[:, :H] + gh[:, :H])
            z = jax.nn.sigmoid(gi[:, H:2 * H] + gh[:, H:2 * H])
            n = jnp.tanh(gi[:, 2 * H:] + r * gh[:, 2 * H:])
            hn = (1.0 - z) * n + z * h
            return hn, hn

        h0 = jnp.zeros((x.shape[0], H), jnp.float32)
        _, outs = lax.scan(step, h0, jnp.transpose(x_rev, (1, 0, 2)))
        out = jnp.transpose(outs, (1, 0, 2))[:, ::-1, :]
        z = out @ params["lin_w"].T + params["lin_b"]
        return jnp.transpose(z, (0, 2, 1))


if __name__ == "__main__":
    # n_channels=4, n_time_samples=16, hidden_size=8, hidden_gru_size=0 -> n_channels
    B, C, T, Hin = 2, 4, 16, 8
    H = C

    key = jax.random.PRNGKey(0)
    kx, kp = jax.random.split(key)
    x = jax.random.normal(kx, (B, Hin, T), jnp.float32)
    params = init_params(kp, C, Hin, H)

    out = gru_decoder_forward(x, params, compute_dtype=jnp.float32)
    out = jax.block_until_ready(out)
    assert out.shape == (B, C, T)

    ref = reference_forward(x, params)
    err = float(jnp.max(jnp.abs(out - ref)))
    if not bool(jnp.allclose(out, ref, atol=1e-3, rtol=1e-3)):
        raise AssertionError(f"kernel vs reference mismatch, max abs err = {err}")

    print("KERNEL_OK")
</pallas_src>

<mosaic_0001>
module attributes {stable_mosaic.version = 11 : i64} {
  func.func @kernel(%arg0: i32, %arg1: memref<16x8x128xf32, #tpu.memory_space<vmem>>, %arg2: memref<128x128xf32, #tpu.memory_space<vmem>>, %arg3: memref<1x128xf32, #tpu.memory_space<vmem>>, %arg4: memref<1x128xf32, #tpu.memory_space<vmem>>, %arg5: memref<1x128xf32, #tpu.memory_space<vmem>>, %arg6: memref<128x384xf32, #tpu.memory_space<vmem>>, %arg7: memref<1x384xf32, #tpu.memory_space<vmem>>, %arg8: memref<128x384xf32, #tpu.memory_space<vmem>>, %arg9: memref<1x128xf32, #tpu.memory_space<vmem>>, %arg10: memref<128x128xf32, #tpu.memory_space<vmem>>, %arg11: memref<1x128xf32, #tpu.memory_space<vmem>>, %arg12: memref<16x8x128xf32, #tpu.memory_space<vmem>>, %arg13: memref<16x8x384xf32, #tpu.memory_space<vmem>>, %arg14: memref<16x8x128xf32, #tpu.memory_space<vmem>>) attributes {dimension_semantics = [#tpu.dimension_semantics<parallel>], iteration_bounds = array<i64: 1>, scalar_prefetch = 0 : i64, scratch_operands = 2 : i64, tpu.core_type = #tpu.core_type<tc>, window_params = [{transform_indices = @transform_0, window_bounds = array<i64: 16, 8, 128>}, {pipeline_mode = #tpu.pipeline_mode<synchronous>, transform_indices = @transform_1, window_bounds = array<i64: 128, 128>}, {pipeline_mode = #tpu.pipeline_mode<synchronous>, transform_indices = @transform_2, window_bounds = array<i64: 1, 128>}, {pipeline_mode = #tpu.pipeline_mode<synchronous>, transform_indices = @transform_3, window_bounds = array<i64: 1, 128>}, {pipeline_mode = #tpu.pipeline_mode<synchronous>, transform_indices = @transform_4, window_bounds = array<i64: 1, 128>}, {pipeline_mode = #tpu.pipeline_mode<synchronous>, transform_indices = @transform_5, window_bounds = array<i64: 128, 384>}, {pipeline_mode = #tpu.pipeline_mode<synchronous>, transform_indices = @transform_6, window_bounds = array<i64: 1, 384>}, {pipeline_mode = #tpu.pipeline_mode<synchronous>, transform_indices = @transform_7, window_bounds = array<i64: 128, 384>}, {pipeline_mode = #tpu.pipeline_mode<synchronous>, transform_indices = @transform_8, window_bounds = array<i64: 1, 128>}, {pipeline_mode = #tpu.pipeline_mode<synchronous>, transform_indices = @transform_9, window_bounds = array<i64: 128, 128>}, {pipeline_mode = #tpu.pipeline_mode<synchronous>, transform_indices = @transform_10, window_bounds = array<i64: 1, 128>}, {transform_indices = @transform_11, window_bounds = array<i64: 16, 8, 128>}]} {
    %cst = arith.constant 0.000000e+00 : f32
    %0 = vector.broadcast %cst : f32 to vector<8x128xf32>
    %cst_0 = arith.constant 0.000000e+00 : f32
    %1 = vector.broadcast %cst_0 : f32 to vector<8x128xf32>
    %c0 = arith.constant 0 : index
    %c0_1 = arith.constant 0 : index
    %c0_2 = arith.constant 0 : index
    %2 = vector.load %arg1[%c0, %c0_1, %c0_2] : memref<16x8x128xf32, #tpu.memory_space<vmem>>, vector<16x8x128xf32>
    %3 = vector.shape_cast %2 : vector<16x8x128xf32> to vector<128x128xf32>
    %c0_3 = arith.constant 0 : index
    %c0_4 = arith.constant 0 : index
    %4 = vector.load %arg2[%c0_3, %c0_4] : memref<128x128xf32, #tpu.memory_space<vmem>>, vector<128x128xf32>
    %cst_5 = arith.constant dense<0.000000e+00> : vector<128x128xf32>
    %5 = tpu.matmul %3, %4, %cst_5 {dimension_numbers = #tpu.dot_dimension_numbers<[1], [0], [0], [1], [0, 0, 1, 1], [], []>} : vector<128x128xf32>, vector<128x128xf32>, vector<128x128xf32> -> vector<128x128xf32>
    %c0_6 = arith.constant 0 : index
    %c0_7 = arith.constant 0 : index
    %6 = vector.load %arg3[%c0_6, %c0_7] : memref<1x128xf32, #tpu.memory_space<vmem>>, vector<1x128xf32>
    %7 = vector.broadcast %6 : vector<1x128xf32> to vector<128x128xf32>
    %8 = arith.addf %5, %7 : vector<128x128xf32>
    %9 = vector.shape_cast %8 : vector<128x128xf32> to vector<16x8x128xf32>
    %cst_8 = arith.constant dense<0.000000e+00> : vector<8x128xf32>
    %10 = vector.multi_reduction <add>, %9, %cst_8 [0] : vector<16x8x128xf32> to vector<8x128xf32>
    %11 = arith.addf %0, %10 : vector<8x128xf32>
    %12 = arith.mulf %9, %9 : vector<16x8x128xf32>
    %cst_9 = arith.constant dense<0.000000e+00> : vector<8x128xf32>
    %13 = vector.multi_reduction <add>, %12, %cst_9 [0] : vector<16x8x128xf32> to vector<8x128xf32>
    %14 = arith.addf %1, %13 : vector<8x128xf32>
    %cst_10 = arith.constant 6.250000e-02 : f32
    %15 = vector.broadcast %cst_10 : f32 to vector<8x128xf32>
    %16 = arith.mulf %11, %15 : vector<8x128xf32>
    %cst_11 = arith.constant 6.250000e-02 : f32
    %17 = vector.broadcast %cst_11 : f32 to vector<8x128xf32>
    %18 = arith.mulf %14, %17 : vector<8x128xf32>
    %19 = arith.mulf %16, %16 : vector<8x128xf32>
    %20 = arith.subf %18, %19 : vector<8x128xf32>
    %cst_12 = arith.constant 0.000000e+00 : f32
    %21 = vector.broadcast %cst_12 : f32 to vector<8x128xf32>
    %22 = arith.maximumf %20, %21 : vector<8x128xf32>
    %cst_13 = arith.constant 9.99999974E-6 : f32
    %23 = vector.broadcast %cst_13 : f32 to vector<8x128xf32>
    %24 = arith.addf %22, %23 : vector<8x128xf32>
    %25 = math.rsqrt %24 : vector<8x128xf32>
    %c0_14 = arith.constant 0 : index
    %c0_15 = arith.constant 0 : index
    %26 = vector.load %arg4[%c0_14, %c0_15] : memref<1x128xf32, #tpu.memory_space<vmem>>, vector<1x128xf32>
    %27 = vector.broadcast %26 : vector<1x128xf32> to vector<8x128xf32>
    %28 = arith.mulf %27, %25 : vector<8x128xf32>
    %c0_16 = arith.constant 0 : index
    %c0_17 = arith.constant 0 : index
    %29 = vector.load %arg5[%c0_16, %c0_17] : memref<1x128xf32, #tpu.memory_space<vmem>>, vector<1x128xf32>
    %30 = arith.mulf %16, %28 : vector<8x128xf32>
    %31 = vector.broadcast %29 : vector<1x128xf32> to vector<8x128xf32>
    %32 = arith.subf %31, %30 : vector<8x128xf32>
    %c0_18 = arith.constant 0 : index
    %c0_19 = arith.constant 0 : index
    %33 = vector.load %arg9[%c0_18, %c0_19] : memref<1x128xf32, #tpu.memory_space<vmem>>, vector<1x128xf32>
    %34 = vector.shape_cast %33 : vector<1x128xf32> to vector<1x128xf32>
    %35 = vector.broadcast %34 : vector<1x128xf32> to vector<8x128xf32>
    %cst_20 = arith.constant 0.000000e+00 : f32
    %36 = vector.broadcast %cst_20 : f32 to vector<8x128xf32>
    %c0_21 = arith.constant 0 : index
    %c0_22 = arith.constant 0 : index
    %c0_23 = arith.constant 0 : index
    %37 = vector.load %arg1[%c0_21, %c0_22, %c0_23] : memref<16x8x128xf32, #tpu.memory_space<vmem>>, vector<16x8x128xf32>
    %38 = vector.shape_cast %37 : vector<16x8x128xf32> to vector<128x128xf32>
    %c0_24 = arith.constant 0 : index
    %c0_25 = arith.constant 0 : index
    %39 = vector.load %arg2[%c0_24, %c0_25] : memref<128x128xf32, #tpu.memory_space<vmem>>, vector<128x128xf32>
    %cst_26 = arith.constant dense<0.000000e+00> : vector<128x128xf32>
    %40 = tpu.matmul %38, %39, %cst_26 {dimension_numbers = #tpu.dot_dimension_numbers<[1], [0], [0], [1], [0, 0, 1, 1], [], []>} : vector<128x128xf32>, vector<128x128xf32>, vector<128x128xf32> -> vector<128x128xf32>
    %c0_27 = arith.constant 0 : index
    %c0_28 = arith.constant 0 : index
    %41 = vector.load %arg3[%c0_27, %c0_28] : memref<1x128xf32, #tpu.memory_space<vmem>>, vector<1x128xf32>
    %42 = vector.broadcast %41 : vector<1x128xf32> to vector<128x128xf32>
    %43 = arith.addf %40, %42 : vector<128x128xf32>
    %44 = vector.shape_cast %43 : vector<128x128xf32> to vector<16x8x128xf32>
    %45 = vector.shape_cast %28 : vector<8x128xf32> to vector<1x8x128xf32>
    %46 = vector.broadcast %45 : vector<1x8x128xf32> to vector<16x8x128xf32>
    %47 = arith.mulf %44, %46 : vector<16x8x128xf32>
    %48 = vector.shape_cast %32 : vector<8x128xf32> to vector<1x8x128xf32>
    %49 = vector.broadcast %48 : vector<1x8x128xf32> to vector<16x8x128xf32>
    %50 = arith.addf %47, %49 : vector<16x8x128xf32>
    %cst_29 = arith.constant 0.000000e+00 : f32
    %51 = vector.broadcast %cst_29 : f32 to vector<16x8x128xf32>
    %52 = arith.maximumf %50, %51 : vector<16x8x128xf32>
    %53 = vector.shape_cast %52 : vector<16x8x128xf32> to vector<128x128xf32>
    %c0_30 = arith.constant 0 : index
    %c0_31 = arith.constant 0 : index
    %54 = vector.load %arg6[%c0_30, %c0_31] : memref<128x384xf32, #tpu.memory_space<vmem>>, vector<128x384xf32>
    %cst_32 = arith.constant dense<0.000000e+00> : vector<128x384xf32>
    %55 = tpu.matmul %53, %54, %cst_32 {dimension_numbers = #tpu.dot_dimension_numbers<[1], [0], [0], [1], [0, 0, 1, 1], [], []>} : vector<128x128xf32>, vector<128x384xf32>, vector<128x384xf32> -> vector<128x384xf32>
    %c0_33 = arith.constant 0 : index
    %c0_34 = arith.constant 0 : index
    %56 = vector.load %arg7[%c0_33, %c0_34] : memref<1x384xf32, #tpu.memory_space<vmem>>, vector<1x384xf32>
    %57 = vector.broadcast %56 : vector<1x384xf32> to vector<128x384xf32>
    %58 = arith.addf %55, %57 : vector<128x384xf32>
    %59 = vector.shape_cast %58 : vector<128x384xf32> to vector<16x8x384xf32>
    %c0_35 = arith.constant 0 : index
    %c0_36 = arith.constant 0 : index
    %c0_37 = arith.constant 0 : index
    %60 = vector.load %arg13[%c0_35, %c0_36, %c0_37] : memref<16x8x384xf32, #tpu.memory_space<vmem>>, vector<16x8x384xf32>
    tpu.vector_store %arg13[%c0_35, %c0_36, %c0_37], %59 {strides = array<i32>} : memref<16x8x384xf32, #tpu.memory_space<vmem>>, vector<16x8x384xf32>,
    %c0_i32 = arith.constant 0 : i32
    %c15_i32 = arith.constant 15 : i32
    %61 = arith.subi %c15_i32, %c0_i32 : i32
    %62 = arith.index_cast %61 : i32 to index
    %c0_38 = arith.constant 0 : index
    %c0_39 = arith.constant 0 : index
    %63 = vector.load %arg13[%62, %c0_38, %c0_39] : memref<16x8x384xf32, #tpu.memory_space<vmem>>, vector<1x8x384xf32>
    %64 = vector.shape_cast %63 : vector<1x8x384xf32> to vector<8x384xf32>
    %c0_40 = arith.constant 0 : index
    %c0_41 = arith.constant 0 : index
    %65 = vector.load %arg8[%c0_40, %c0_41] : memref<128x384xf32, #tpu.memory_space<vmem>>, vector<128x384xf32>
    %cst_42 = arith.constant dense<0.000000e+00> : vector<8x384xf32>
    %66 = tpu.matmul %36, %65, %cst_42 {dimension_numbers = #tpu.dot_dimension_numbers<[1], [0], [0], [1], [0, 0, 1, 1], [], []>} : vector<8x128xf32>, vector<128x384xf32>, vector<8x384xf32> -> vector<8x384xf32>
    %67 = vector.extract_strided_slice %64 {offsets = [0, 0], sizes = [8, 128], strides = [1, 1]} : vector<8x384xf32> to vector<8x128xf32>
    %68 = vector.extract_strided_slice %66 {offsets = [0, 0], sizes = [8, 128], strides = [1, 1]} : vector<8x384xf32> to vector<8x128xf32>
    %69 = arith.addf %67, %68 : vector<8x128xf32>
    %70 = arith.negf %69 : vector<8x128xf32>
    %71 = math.exp %70 : vector<8x128xf32>
    %cst_43 = arith.constant 1.000000e+00 : f32
    %72 = vector.broadcast %cst_43 : f32 to vector<8x128xf32>
    %73 = arith.addf %72, %71 : vector<8x128xf32>
    %74 = arith.divf %72, %73 : vector<8x128xf32>
    %75 = vector.extract_strided_slice %64 {offsets = [0, 128], sizes = [8, 128], strides = [1, 1]} : vector<8x384xf32> to vector<8x128xf32>
    %76 = vector.extract_strided_slice %66 {offsets = [0, 128], sizes = [8, 128], strides = [1, 1]} : vector<8x384xf32> to vector<8x128xf32>
    %77 = arith.addf %75, %76 : vector<8x128xf32>
    %78 = arith.negf %77 : vector<8x128xf32>
    %79 = math.exp %78 : vector<8x128xf32>
    %cst_44 = arith.constant 1.000000e+00 : f32
    %80 = vector.broadcast %cst_44 : f32 to vector<8x128xf32>
    %81 = arith.addf %80, %79 : vector<8x128xf32>
    %82 = arith.divf %80, %81 : vector<8x128xf32>
    %83 = vector.extract_strided_slice %64 {offsets = [0, 256], sizes = [8, 128], strides = [1, 1]} : vector<8x384xf32> to vector<8x128xf32>
    %84 = vector.extract_strided_slice %66 {offsets = [0, 256], sizes = [8, 128], strides = [1, 1]} : vector<8x384xf32> to vector<8x128xf32>
    %85 = arith.addf %84, %35 : vector<8x128xf32>
    %86 = arith.mulf %74, %85 : vector<8x128xf32>
    %87 = arith.addf %83, %86 : vector<8x128xf32>
    %88 = math.tanh %87 : vector<8x128xf32>
    %cst_45 = arith.constant 1.000000e+00 : f32
    %89 = vector.broadcast %cst_45 : f32 to vector<8x128xf32>
    %90 = arith.subf %89, %82 : vector<8x128xf32>
    %91 = arith.mulf %90, %88 : vector<8x128xf32>
    %92 = arith.mulf %82, %36 : vector<8x128xf32>
    %93 = arith.addf %91, %92 : vector<8x128xf32>
    %94 = arith.index_cast %61 : i32 to index
    %c0_46 = arith.constant 0 : index
    %c0_47 = arith.constant 0 : index
    %95 = vector.load %arg14[%94, %c0_46, %c0_47] : memref<16x8x128xf32, #tpu.memory_space<vmem>>, vector<1x8x128xf32>
    %96 = vector.shape_cast %95 : vector<1x8x128xf32> to vector<8x128xf32>
    %97 = vector.shape_cast %93 : vector<8x128xf32> to vector<1x8x128xf32>
    tpu.vector_store %arg14[%94, %c0_46, %c0_47], %97 {strides = array<i32>} : memref<16x8x128xf32, #tpu.memory_space<vmem>>, vector<1x8x128xf32>,
    %c1_i32 = arith.constant 1 : i32
    %c15_i32_48 = arith.constant 15 : i32
    %98 = arith.subi %c15_i32_48, %c1_i32 : i32
    %99 = arith.index_cast %98 : i32 to index
    %c0_49 = arith.constant 0 : index
    %c0_50 = arith.constant 0 : index
    %100 = vector.load %arg13[%99, %c0_49, %c0_50] : memref<16x8x384xf32, #tpu.memory_space<vmem>>, vector<1x8x384xf32>
    %101 = vector.shape_cast %100 : vector<1x8x384xf32> to vector<8x384xf32>
    %c0_51 = arith.constant 0 : index
    %c0_52 = arith.constant 0 : index
    %102 = vector.load %arg8[%c0_51, %c0_52] : memref<128x384xf32, #tpu.memory_space<vmem>>, vector<128x384xf32>
    %cst_53 = arith.constant dense<0.000000e+00> : vector<8x384xf32>
    %103 = tpu.matmul %93, %102, %cst_53 {dimension_numbers = #tpu.dot_dimension_numbers<[1], [0], [0], [1], [0, 0, 1, 1], [], []>} : vector<8x128xf32>, vector<128x384xf32>, vector<8x384xf32> -> vector<8x384xf32>
    %104 = vector.extract_strided_slice %101 {offsets = [0, 0], sizes = [8, 128], strides = [1, 1]} : vector<8x384xf32> to vector<8x128xf32>
    %105 = vector.extract_strided_slice %103 {offsets = [0, 0], sizes = [8, 128], strides = [1, 1]} : vector<8x384xf32> to vector<8x128xf32>
    %106 = arith.addf %104, %105 : vector<8x128xf32>
    %107 = arith.negf %106 : vector<8x128xf32>
    %108 = math.exp %107 : vector<8x128xf32>
    %cst_54 = arith.constant 1.000000e+00 : f32
    %109 = vector.broadcast %cst_54 : f32 to vector<8x128xf32>
    %110 = arith.addf %109, %108 : vector<8x128xf32>
    %111 = arith.divf %109, %110 : vector<8x128xf32>
    %112 = vector.extract_strided_slice %101 {offsets = [0, 128], sizes = [8, 128], strides = [1, 1]} : vector<8x384xf32> to vector<8x128xf32>
    %113 = vector.extract_strided_slice %103 {offsets = [0, 128], sizes = [8, 128], strides = [1, 1]} : vector<8x384xf32> to vector<8x128xf32>
    %114 = arith.addf %112, %113 : vector<8x128xf32>
    %115 = arith.negf %114 : vector<8x128xf32>
    %116 = math.exp %115 : vector<8x128xf32>
    %cst_55 = arith.constant 1.000000e+00 : f32
    %117 = vector.broadcast %cst_55 : f32 to vector<8x128xf32>
    %118 = arith.addf %117, %116 : vector<8x128xf32>
    %119 = arith.divf %117, %118 : vector<8x128xf32>
    %120 = vector.extract_strided_slice %101 {offsets = [0, 256], sizes = [8, 128], strides = [1, 1]} : vector<8x384xf32> to vector<8x128xf32>
    %121 = vector.extract_strided_slice %103 {offsets = [0, 256], sizes = [8, 128], strides = [1, 1]} : vector<8x384xf32> to vector<8x128xf32>
    %122 = arith.addf %121, %35 : vector<8x128xf32>
    %123 = arith.mulf %111, %122 : vector<8x128xf32>
    %124 = arith.addf %120, %123 : vector<8x128xf32>
    %125 = math.tanh %124 : vector<8x128xf32>
    %cst_56 = arith.constant 1.000000e+00 : f32
    %126 = vector.broadcast %cst_56 : f32 to vector<8x128xf32>
    %127 = arith.subf %126, %119 : vector<8x128xf32>
    %128 = arith.mulf %127, %125 : vector<8x128xf32>
    %129 = arith.mulf %119, %93 : vector<8x128xf32>
    %130 = arith.addf %128, %129 : vector<8x128xf32>
    %131 = arith.index_cast %98 : i32 to index
    %c0_57 = arith.constant 0 : index
    %c0_58 = arith.constant 0 : index
    %132 = vector.load %arg14[%131, %c0_57, %c0_58] : memref<16x8x128xf32, #tpu.memory_space<vmem>>, vector<1x8x128xf32>
    %133 = vector.shape_cast %132 : vector<1x8x128xf32> to vector<8x128xf32>
    %134 = vector.shape_cast %130 : vector<8x128xf32> to vector<1x8x128xf32>
    tpu.vector_store %arg14[%131, %c0_57, %c0_58], %134 {strides = array<i32>} : memref<16x8x128xf32, #tpu.memory_space<vmem>>, vector<1x8x128xf32>,
    %c2_i32 = arith.constant 2 : i32
    %c15_i32_59 = arith.constant 15 : i32
    %135 = arith.subi %c15_i32_59, %c2_i32 : i32
    %136 = arith.index_cast %135 : i32 to index
    %c0_60 = arith.constant 0 : index
    %c0_61 = arith.constant 0 : index
    %137 = vector.load %arg13[%136, %c0_60, %c0_61] : memref<16x8x384xf32, #tpu.memory_space<vmem>>, vector<1x8x384xf32>
    %138 = vector.shape_cast %137 : vector<1x8x384xf32> to vector<8x384xf32>
    %c0_62 = arith.constant 0 : index
    %c0_63 = arith.constant 0 : index
    %139 = vector.load %arg8[%c0_62, %c0_63] : memref<128x384xf32, #tpu.memory_space<vmem>>, vector<128x384xf32>
    %cst_64 = arith.constant dense<0.000000e+00> : vector<8x384xf32>
    %140 = tpu.matmul %130, %139, %cst_64 {dimension_numbers = #tpu.dot_dimension_numbers<[1], [0], [0], [1], [0, 0, 1, 1], [], []>} : vector<8x128xf32>, vector<128x384xf32>, vector<8x384xf32> -> vector<8x384xf32>
    %141 = vector.extract_strided_slice %138 {offsets = [0, 0], sizes = [8, 128], strides = [1, 1]} : vector<8x384xf32> to vector<8x128xf32>
    %142 = vector.extract_strided_slice %140 {offsets = [0, 0], sizes = [8, 128], strides = [1, 1]} : vector<8x384xf32> to vector<8x128xf32>
    %143 = arith.addf %141, %142 : vector<8x128xf32>
    %144 = arith.negf %143 : vector<8x128xf32>
    %145 = math.exp %144 : vector<8x128xf32>
    %cst_65 = arith.constant 1.000000e+00 : f32
    %146 = vector.broadcast %cst_65 : f32 to vector<8x128xf32>
    %147 = arith.addf %146, %145 : vector<8x128xf32>
    %148 = arith.divf %146, %147 : vector<8x128xf32>
    %149 = vector.extract_strided_slice %138 {offsets = [0, 128], sizes = [8, 128], strides = [1, 1]} : vector<8x384xf32> to vector<8x128xf32>
    %150 = vector.extract_strided_slice %140 {offsets = [0, 128], sizes = [8, 128], strides = [1, 1]} : vector<8x384xf32> to vector<8x128xf32>
    %151 = arith.addf %149, %150 : vector<8x128xf32>
    %152 = arith.negf %151 : vector<8x128xf32>
    %153 = math.exp %152 : vector<8x128xf32>
    %cst_66 = arith.constant 1.000000e+00 : f32
    %154 = vector.broadcast %cst_66 : f32 to vector<8x128xf32>
    %155 = arith.addf %154, %153 : vector<8x128xf32>
    %156 = arith.divf %154, %155 : vector<8x128xf32>
    %157 = vector.extract_strided_slice %138 {offsets = [0, 256], sizes = [8, 128], strides = [1, 1]} : vector<8x384xf32> to vector<8x128xf32>
    %158 = vector.extract_strided_slice %140 {offsets = [0, 256], sizes = [8, 128], strides = [1, 1]} : vector<8x384xf32> to vector<8x128xf32>
    %159 = arith.addf %158, %35 : vector<8x128xf32>
    %160 = arith.mulf %148, %159 : vector<8x128xf32>
    %161 = arith.addf %157, %160 : vector<8x128xf32>
    %162 = math.tanh %161 : vector<8x128xf32>
    %cst_67 = arith.constant 1.000000e+00 : f32
    %163 = vector.broadcast %cst_67 : f32 to vector<8x128xf32>
    %164 = arith.subf %163, %156 : vector<8x128xf32>
    %165 = arith.mulf %164, %162 : vector<8x128xf32>
    %166 = arith.mulf %156, %130 : vector<8x128xf32>
    %167 = arith.addf %165, %166 : vector<8x128xf32>
    %168 = arith.index_cast %135 : i32 to index
    %c0_68 = arith.constant 0 : index
    %c0_69 = arith.constant 0 : index
    %169 = vector.load %arg14[%168, %c0_68, %c0_69] : memref<16x8x128xf32, #tpu.memory_space<vmem>>, vector<1x8x128xf32>
    %170 = vector.shape_cast %169 : vector<1x8x128xf32> to vector<8x128xf32>
    %171 = vector.shape_cast %167 : vector<8x128xf32> to vector<1x8x128xf32>
    tpu.vector_store %arg14[%168, %c0_68, %c0_69], %171 {strides = array<i32>} : memref<16x8x128xf32, #tpu.memory_space<vmem>>, vector<1x8x128xf32>,
    %c3_i32 = arith.constant 3 : i32
    %c15_i32_70 = arith.constant 15 : i32
    %172 = arith.subi %c15_i32_70, %c3_i32 : i32
    %173 = arith.index_cast %172 : i32 to index
    %c0_71 = arith.constant 0 : index
    %c0_72 = arith.constant 0 : index
    %174 = vector.load %arg13[%173, %c0_71, %c0_72] : memref<16x8x384xf32, #tpu.memory_space<vmem>>, vector<1x8x384xf32>
    %175 = vector.shape_cast %174 : vector<1x8x384xf32> to vector<8x384xf32>
    %c0_73 = arith.constant 0 : index
    %c0_74 = arith.constant 0 : index
    %176 = vector.load %arg8[%c0_73, %c0_74] : memref<128x384xf32, #tpu.memory_space<vmem>>, vector<128x384xf32>
    %cst_75 = arith.constant dense<0.000000e+00> : vector<8x384xf32>
    %177 = tpu.matmul %167, %176, %cst_75 {dimension_numbers = #tpu.dot_dimension_numbers<[1], [0], [0], [1], [0, 0, 1, 1], [], []>} : vector<8x128xf32>, vector<128x384xf32>, vector<8x384xf32> -> vector<8x384xf32>
    %178 = vector.extract_strided_slice %175 {offsets = [0, 0], sizes = [8, 128], strides = [1, 1]} : vector<8x384xf32> to vector<8x128xf32>
    %179 = vector.extract_strided_slice %177 {offsets = [0, 0], sizes = [8, 128], strides = [1, 1]} : vector<8x384xf32> to vector<8x128xf32>
    %180 = arith.addf %178, %179 : vector<8x128xf32>
    %181 = arith.negf %180 : vector<8x128xf32>
    %182 = math.exp %181 : vector<8x128xf32>
    %cst_76 = arith.constant 1.000000e+00 : f32
    %183 = vector.broadcast %cst_76 : f32 to vector<8x128xf32>
    %184 = arith.addf %183, %182 : vector<8x128xf32>
    %185 = arith.divf %183, %184 : vector<8x128xf32>
    %186 = vector.extract_strided_slice %175 {offsets = [0, 128], sizes = [8, 128], strides = [1, 1]} : vector<8x384xf32> to vector<8x128xf32>
    %187 = vector.extract_strided_slice %177 {offsets = [0, 128], sizes = [8, 128], strides = [1, 1]} : vector<8x384xf32> to vector<8x128xf32>
    %188 = arith.addf %186, %187 : vector<8x128xf32>
    %189 = arith.negf %188 : vector<8x128xf32>
    %190 = math.exp %189 : vector<8x128xf32>
    %cst_77 = arith.constant 1.000000e+00 : f32
    %191 = vector.broadcast %cst_77 : f32 to vector<8x128xf32>
    %192 = arith.addf %191, %190 : vector<8x128xf32>
    %193 = arith.divf %191, %192 : vector<8x128xf32>
    %194 = vector.extract_strided_slice %175 {offsets = [0, 256], sizes = [8, 128], strides = [1, 1]} : vector<8x384xf32> to vector<8x128xf32>
    %195 = vector.extract_strided_slice %177 {offsets = [0, 256], sizes = [8, 128], strides = [1, 1]} : vector<8x384xf32> to vector<8x128xf32>
    %196 = arith.addf %195, %35 : vector<8x128xf32>
    %197 = arith.mulf %185, %196 : vector<8x128xf32>
    %198 = arith.addf %194, %197 : vector<8x128xf32>
    %199 = math.tanh %198 : vector<8x128xf32>
    %cst_78 = arith.constant 1.000000e+00 : f32
    %200 = vector.broadcast %cst_78 : f32 to vector<8x128xf32>
    %201 = arith.subf %200, %193 : vector<8x128xf32>
    %202 = arith.mulf %201, %199 : vector<8x128xf32>
    %203 = arith.mulf %193, %167 : vector<8x128xf32>
    %204 = arith.addf %202, %203 : vector<8x128xf32>
    %205 = arith.index_cast %172 : i32 to index
    %c0_79 = arith.constant 0 : index
    %c0_80 = arith.constant 0 : index
    %206 = vector.load %arg14[%205, %c0_79, %c0_80] : memref<16x8x128xf32, #tpu.memory_space<vmem>>, vector<1x8x128xf32>
    %207 = vector.shape_cast %206 : vector<1x8x128xf32> to vector<8x128xf32>
    %208 = vector.shape_cast %204 : vector<8x128xf32> to vector<1x8x128xf32>
    tpu.vector_store %arg14[%205, %c0_79, %c0_80], %208 {strides = array<i32>} : memref<16x8x128xf32, #tpu.memory_space<vmem>>, vector<1x8x128xf32>,
    %c4_i32 = arith.constant 4 : i32
    %c15_i32_81 = arith.constant 15 : i32
    %209 = arith.subi %c15_i32_81, %c4_i32 : i32
    %210 = arith.index_cast %209 : i32 to index
    %c0_82 = arith.constant 0 : index
    %c0_83 = arith.constant 0 : index
    %211 = vector.load %arg13[%210, %c0_82, %c0_83] : memref<16x8x384xf32, #tpu.memory_space<vmem>>, vector<1x8x384xf32>
    %212 = vector.shape_cast %211 : vector<1x8x384xf32> to vector<8x384xf32>
    %c0_84 = arith.constant 0 : index
    %c0_85 = arith.constant 0 : index
    %213 = vector.load %arg8[%c0_84, %c0_85] : memref<128x384xf32, #tpu.memory_space<vmem>>, vector<128x384xf32>
    %cst_86 = arith.constant dense<0.000000e+00> : vector<8x384xf32>
    %214 = tpu.matmul %204, %213, %cst_86 {dimension_numbers = #tpu.dot_dimension_numbers<[1], [0], [0], [1], [0, 0, 1, 1], [], []>} : vector<8x128xf32>, vector<128x384xf32>, vector<8x384xf32> -> vector<8x384xf32>
    %215 = vector.extract_strided_slice %212 {offsets = [0, 0], sizes = [8, 128], strides = [1, 1]} : vector<8x384xf32> to vector<8x128xf32>
    %216 = vector.extract_strided_slice %214 {offsets = [0, 0], sizes = [8, 128], strides = [1, 1]} : vector<8x384xf32> to vector<8x128xf32>
    %217 = arith.addf %215, %216 : vector<8x128xf32>
    %218 = arith.negf %217 : vector<8x128xf32>
    %219 = math.exp %218 : vector<8x128xf32>
    %cst_87 = arith.constant 1.000000e+00 : f32
    %220 = vector.broadcast %cst_87 : f32 to vector<8x128xf32>
    %221 = arith.addf %220, %219 : vector<8x128xf32>
    %222 = arith.divf %220, %221 : vector<8x128xf32>
    %223 = vector.extract_strided_slice %212 {offsets = [0, 128], sizes = [8, 128], strides = [1, 1]} : vector<8x384xf32> to vector<8x128xf32>
    %224 = vector.extract_strided_slice %214 {offsets = [0, 128], sizes = [8, 128], strides = [1, 1]} : vector<8x384xf32> to vector<8x128xf32>
    %225 = arith.addf %223, %224 : vector<8x128xf32>
    %226 = arith.negf %225 : vector<8x128xf32>
    %227 = math.exp %226 : vector<8x128xf32>
    %cst_88 = arith.constant 1.000000e+00 : f32
    %228 = vector.broadcast %cst_88 : f32 to vector<8x128xf32>
    %229 = arith.addf %228, %227 : vector<8x128xf32>
    %230 = arith.divf %228, %229 : vector<8x128xf32>
    %231 = vector.extract_strided_slice %212 {offsets = [0, 256], sizes = [8, 128], strides = [1, 1]} : vector<8x384xf32> to vector<8x128xf32>
    %232 = vector.extract_strided_slice %214 {offsets = [0, 256], sizes = [8, 128], strides = [1, 1]} : vector<8x384xf32> to vector<8x128xf32>
    %233 = arith.addf %232, %35 : vector<8x128xf32>
    %234 = arith.mulf %222, %233 : vector<8x128xf32>
    %235 = arith.addf %231, %234 : vector<8x128xf32>
    %236 = math.tanh %235 : vector<8x128xf32>
    %cst_89 = arith.constant 1.000000e+00 : f32
    %237 = vector.broadcast %cst_89 : f32 to vector<8x128xf32>
    %238 = arith.subf %237, %230 : vector<8x128xf32>
    %239 = arith.mulf %238, %236 : vector<8x128xf32>
    %240 = arith.mulf %230, %204 : vector<8x128xf32>
    %241 = arith.addf %239, %240 : vector<8x128xf32>
    %242 = arith.index_cast %209 : i32 to index
    %c0_90 = arith.constant 0 : index
    %c0_91 = arith.constant 0 : index
    %243 = vector.load %arg14[%242, %c0_90, %c0_91] : memref<16x8x128xf32, #tpu.memory_space<vmem>>, vector<1x8x128xf32>
    %244 = vector.shape_cast %243 : vector<1x8x128xf32> to vector<8x128xf32>
    %245 = vector.shape_cast %241 : vector<8x128xf32> to vector<1x8x128xf32>
    tpu.vector_store %arg14[%242, %c0_90, %c0_91], %245 {strides = array<i32>} : memref<16x8x128xf32, #tpu.memory_space<vmem>>, vector<1x8x128xf32>,
    %c5_i32 = arith.constant 5 : i32
    %c15_i32_92 = arith.constant 15 : i32
    %246 = arith.subi %c15_i32_92, %c5_i32 : i32
    %247 = arith.index_cast %246 : i32 to index
    %c0_93 = arith.constant 0 : index
    %c0_94 = arith.constant 0 : index
    %248 = vector.load %arg13[%247, %c0_93, %c0_94] : memref<16x8x384xf32, #tpu.memory_space<vmem>>, vector<1x8x384xf32>
    %249 = vector.shape_cast %248 : vector<1x8x384xf32> to vector<8x384xf32>
    %c0_95 = arith.constant 0 : index
    %c0_96 = arith.constant 0 : index
    %250 = vector.load %arg8[%c0_95, %c0_96] : memref<128x384xf32, #tpu.memory_space<vmem>>, vector<128x384xf32>
    %cst_97 = arith.constant dense<0.000000e+00> : vector<8x384xf32>
    %251 = tpu.matmul %241, %250, %cst_97 {dimension_numbers = #tpu.dot_dimension_numbers<[1], [0], [0], [1], [0, 0, 1, 1], [], []>} : vector<8x128xf32>, vector<128x384xf32>, vector<8x384xf32> -> vector<8x384xf32>
    %252 = vector.extract_strided_slice %249 {offsets = [0, 0], sizes = [8, 128], strides = [1, 1]} : vector<8x384xf32> to vector<8x128xf32>
    %253 = vector.extract_strided_slice %251 {offsets = [0, 0], sizes = [8, 128], strides = [1, 1]} : vector<8x384xf32> to vector<8x128xf32>
    %254 = arith.addf %252, %253 : vector<8x128xf32>
    %255 = arith.negf %254 : vector<8x128xf32>
    %256 = math.exp %255 : vector<8x128xf32>
    %cst_98 = arith.constant 1.000000e+00 : f32
    %257 = vector.broadcast %cst_98 : f32 to vector<8x128xf32>
    %258 = arith.addf %257, %256 : vector<8x128xf32>
    %259 = arith.divf %257, %258 : vector<8x128xf32>
    %260 = vector.extract_strided_slice %249 {offsets = [0, 128], sizes = [8, 128], strides = [1, 1]} : vector<8x384xf32> to vector<8x128xf32>
    %261 = vector.extract_strided_slice %251 {offsets = [0, 128], sizes = [8, 128], strides = [1, 1]} : vector<8x384xf32> to vector<8x128xf32>
    %262 = arith.addf %260, %261 : vector<8x128xf32>
    %263 = arith.negf %262 : vector<8x128xf32>
    %264 = math.exp %263 : vector<8x128xf32>
    %cst_99 = arith.constant 1.000000e+00 : f32
    %265 = vector.broadcast %cst_99 : f32 to vector<8x128xf32>
    %266 = arith.addf %265, %264 : vector<8x128xf32>
    %267 = arith.divf %265, %266 : vector<8x128xf32>
    %268 = vector.extract_strided_slice %249 {offsets = [0, 256], sizes = [8, 128], strides = [1, 1]} : vector<8x384xf32> to vector<8x128xf32>
    %269 = vector.extract_strided_slice %251 {offsets = [0, 256], sizes = [8, 128], strides = [1, 1]} : vector<8x384xf32> to vector<8x128xf32>
    %270 = arith.addf %269, %35 : vector<8x128xf32>
    %271 = arith.mulf %259, %270 : vector<8x128xf32>
    %272 = arith.addf %268, %271 : vector<8x128xf32>
    %273 = math.tanh %272 : vector<8x128xf32>
    %cst_100 = arith.constant 1.000000e+00 : f32
    %274 = vector.broadcast %cst_100 : f32 to vector<8x128xf32>
    %275 = arith.subf %274, %267 : vector<8x128xf32>
    %276 = arith.mulf %275, %273 : vector<8x128xf32>
    %277 = arith.mulf %267, %241 : vector<8x128xf32>
    %278 = arith.addf %276, %277 : vector<8x128xf32>
    %279 = arith.index_cast %246 : i32 to index
    %c0_101 = arith.constant 0 : index
    %c0_102 = arith.constant 0 : index
    %280 = vector.load %arg14[%279, %c0_101, %c0_102] : memref<16x8x128xf32, #tpu.memory_space<vmem>>, vector<1x8x128xf32>
    %281 = vector.shape_cast %280 : vector<1x8x128xf32> to vector<8x128xf32>
    %282 = vector.shape_cast %278 : vector<8x128xf32> to vector<1x8x128xf32>
    tpu.vector_store %arg14[%279, %c0_101, %c0_102], %282 {strides = array<i32>} : memref<16x8x128xf32, #tpu.memory_space<vmem>>, vector<1x8x128xf32>,
    %c6_i32 = arith.constant 6 : i32
    %c15_i32_103 = arith.constant 15 : i32
    %283 = arith.subi %c15_i32_103, %c6_i32 : i32
    %284 = arith.index_cast %283 : i32 to index
    %c0_104 = arith.constant 0 : index
    %c0_105 = arith.constant 0 : index
    %285 = vector.load %arg13[%284, %c0_104, %c0_105] : memref<16x8x384xf32, #tpu.memory_space<vmem>>, vector<1x8x384xf32>
    %286 = vector.shape_cast %285 : vector<1x8x384xf32> to vector<8x384xf32>
    %c0_106 = arith.constant 0 : index
    %c0_107 = arith.constant 0 : index
    %287 = vector.load %arg8[%c0_106, %c0_107] : memref<128x384xf32, #tpu.memory_space<vmem>>, vector<128x384xf32>
    %cst_108 = arith.constant dense<0.000000e+00> : vector<8x384xf32>
    %288 = tpu.matmul %278, %287, %cst_108 {dimension_numbers = #tpu.dot_dimension_numbers<[1], [0], [0], [1], [0, 0, 1, 1], [], []>} : vector<8x128xf32>, vector<128x384xf32>, vector<8x384xf32> -> vector<8x384xf32>
    %289 = vector.extract_strided_slice %286 {offsets = [0, 0], sizes = [8, 128], strides = [1, 1]} : vector<8x384xf32> to vector<8x128xf32>
    %290 = vector.extract_strided_slice %288 {offsets = [0, 0], sizes = [8, 128], strides = [1, 1]} : vector<8x384xf32> to vector<8x128xf32>
    %291 = arith.addf %289, %290 : vector<8x128xf32>
    %292 = arith.negf %291 : vector<8x128xf32>
    %293 = math.exp %292 : vector<8x128xf32>
    %cst_109 = arith.constant 1.000000e+00 : f32
    %294 = vector.broadcast %cst_109 : f32 to vector<8x128xf32>
    %295 = arith.addf %294, %293 : vector<8x128xf32>
    %296 = arith.divf %294, %295 : vector<8x128xf32>
    %297 = vector.extract_strided_slice %286 {offsets = [0, 128], sizes = [8, 128], strides = [1, 1]} : vector<8x384xf32> to vector<8x128xf32>
    %298 = vector.extract_strided_slice %288 {offsets = [0, 128], sizes = [8, 128], strides = [1, 1]} : vector<8x384xf32> to vector<8x128xf32>
    %299 = arith.addf %297, %298 : vector<8x128xf32>
    %300 = arith.negf %299 : vector<8x128xf32>
    %301 = math.exp %300 : vector<8x128xf32>
    %cst_110 = arith.constant 1.000000e+00 : f32
    %302 = vector.broadcast %cst_110 : f32 to vector<8x128xf32>
    %303 = arith.addf %302, %301 : vector<8x128xf32>
    %304 = arith.divf %302, %303 : vector<8x128xf32>
    %305 = vector.extract_strided_slice %286 {offsets = [0, 256], sizes = [8, 128], strides = [1, 1]} : vector<8x384xf32> to vector<8x128xf32>
    %306 = vector.extract_strided_slice %288 {offsets = [0, 256], sizes = [8, 128], strides = [1, 1]} : vector<8x384xf32> to vector<8x128xf32>
    %307 = arith.addf %306, %35 : vector<8x128xf32>
    %308 = arith.mulf %296, %307 : vector<8x128xf32>
    %309 = arith.addf %305, %308 : vector<8x128xf32>
    %310 = math.tanh %309 : vector<8x128xf32>
    %cst_111 = arith.constant 1.000000e+00 : f32
    %311 = vector.broadcast %cst_111 : f32 to vector<8x128xf32>
    %312 = arith.subf %311, %304 : vector<8x128xf32>
    %313 = arith.mulf %312, %310 : vector<8x128xf32>
    %314 = arith.mulf %304, %278 : vector<8x128xf32>
    %315 = arith.addf %313, %314 : vector<8x128xf32>
    %316 = arith.index_cast %283 : i32 to index
    %c0_112 = arith.constant 0 : index
    %c0_113 = arith.constant 0 : index
    %317 = vector.load %arg14[%316, %c0_112, %c0_113] : memref<16x8x128xf32, #tpu.memory_space<vmem>>, vector<1x8x128xf32>
    %318 = vector.shape_cast %317 : vector<1x8x128xf32> to vector<8x128xf32>
    %319 = vector.shape_cast %315 : vector<8x128xf32> to vector<1x8x128xf32>
    tpu.vector_store %arg14[%316, %c0_112, %c0_113], %319 {strides = array<i32>} : memref<16x8x128xf32, #tpu.memory_space<vmem>>, vector<1x8x128xf32>,
    %c7_i32 = arith.constant 7 : i32
    %c15_i32_114 = arith.constant 15 : i32
    %320 = arith.subi %c15_i32_114, %c7_i32 : i32
    %321 = arith.index_cast %320 : i32 to index
    %c0_115 = arith.constant 0 : index
    %c0_116 = arith.constant 0 : index
    %322 = vector.load %arg13[%321, %c0_115, %c0_116] : memref<16x8x384xf32, #tpu.memory_space<vmem>>, vector<1x8x384xf32>
    %323 = vector.shape_cast %322 : vector<1x8x384xf32> to vector<8x384xf32>
    %c0_117 = arith.constant 0 : index
    %c0_118 = arith.constant 0 : index
    %324 = vector.load %arg8[%c0_117, %c0_118] : memref<128x384xf32, #tpu.memory_space<vmem>>, vector<128x384xf32>
    %cst_119 = arith.constant dense<0.000000e+00> : vector<8x384xf32>
    %325 = tpu.matmul %315, %324, %cst_119 {dimension_numbers = #tpu.dot_dimension_numbers<[1], [0], [0], [1], [0, 0, 1, 1], [], []>} : vector<8x128xf32>, vector<128x384xf32>, vector<8x384xf32> -> vector<8x384xf32>
    %326 = vector.extract_strided_slice %323 {offsets = [0, 0], sizes = [8, 128], strides = [1, 1]} : vector<8x384xf32> to vector<8x128xf32>
    %327 = vector.extract_strided_slice %325 {offsets = [0, 0], sizes = [8, 128], strides = [1, 1]} : vector<8x384xf32> to vector<8x128xf32>
    %328 = arith.addf %326, %327 : vector<8x128xf32>
    %329 = arith.negf %328 : vector<8x128xf32>
    %330 = math.exp %329 : vector<8x128xf32>
    %cst_120 = arith.constant 1.000000e+00 : f32
    %331 = vector.broadcast %cst_120 : f32 to vector<8x128xf32>
    %332 = arith.addf %331, %330 : vector<8x128xf32>
    %333 = arith.divf %331, %332 : vector<8x128xf32>
    %334 = vector.extract_strided_slice %323 {offsets = [0, 128], sizes = [8, 128], strides = [1, 1]} : vector<8x384xf32> to vector<8x128xf32>
    %335 = vector.extract_strided_slice %325 {offsets = [0, 128], sizes = [8, 128], strides = [1, 1]} : vector<8x384xf32> to vector<8x128xf32>
    %336 = arith.addf %334, %335 : vector<8x128xf32>
    %337 = arith.negf %336 : vector<8x128xf32>
    %338 = math.exp %337 : vector<8x128xf32>
    %cst_121 = arith.constant 1.000000e+00 : f32
    %339 = vector.broadcast %cst_121 : f32 to vector<8x128xf32>
    %340 = arith.addf %339, %338 : vector<8x128xf32>
    %341 = arith.divf %339, %340 : vector<8x128xf32>
    %342 = vector.extract_strided_slice %323 {offsets = [0, 256], sizes = [8, 128], strides = [1, 1]} : vector<8x384xf32> to vector<8x128xf32>
    %343 = vector.extract_strided_slice %325 {offsets = [0, 256], sizes = [8, 128], strides = [1, 1]} : vector<8x384xf32> to vector<8x128xf32>
    %344 = arith.addf %343, %35 : vector<8x128xf32>
    %345 = arith.mulf %333, %344 : vector<8x128xf32>
    %346 = arith.addf %342, %345 : vector<8x128xf32>
    %347 = math.tanh %346 : vector<8x128xf32>
    %cst_122 = arith.constant 1.000000e+00 : f32
    %348 = vector.broadcast %cst_122 : f32 to vector<8x128xf32>
    %349 = arith.subf %348, %341 : vector<8x128xf32>
    %350 = arith.mulf %349, %347 : vector<8x128xf32>
    %351 = arith.mulf %341, %315 : vector<8x128xf32>
    %352 = arith.addf %350, %351 : vector<8x128xf32>
    %353 = arith.index_cast %320 : i32 to index
    %c0_123 = arith.constant 0 : index
    %c0_124 = arith.constant 0 : index
    %354 = vector.load %arg14[%353, %c0_123, %c0_124] : memref<16x8x128xf32, #tpu.memory_space<vmem>>, vector<1x8x128xf32>
    %355 = vector.shape_cast %354 : vector<1x8x128xf32> to vector<8x128xf32>
    %356 = vector.shape_cast %352 : vector<8x128xf32> to vector<1x8x128xf32>
    tpu.vector_store %arg14[%353, %c0_123, %c0_124], %356 {strides = array<i32>} : memref<16x8x128xf32, #tpu.memory_space<vmem>>, vector<1x8x128xf32>,
    %c8_i32 = arith.constant 8 : i32
    %c15_i32_125 = arith.constant 15 : i32
    %357 = arith.subi %c15_i32_125, %c8_i32 : i32
    %358 = arith.index_cast %357 : i32 to index
    %c0_126 = arith.constant 0 : index
    %c0_127 = arith.constant 0 : index
    %359 = vector.load %arg13[%358, %c0_126, %c0_127] : memref<16x8x384xf32, #tpu.memory_space<vmem>>, vector<1x8x384xf32>
    %360 = vector.shape_cast %359 : vector<1x8x384xf32> to vector<8x384xf32>
    %c0_128 = arith.constant 0 : index
    %c0_129 = arith.constant 0 : index
    %361 = vector.load %arg8[%c0_128, %c0_129] : memref<128x384xf32, #tpu.memory_space<vmem>>, vector<128x384xf32>
    %cst_130 = arith.constant dense<0.000000e+00> : vector<8x384xf32>
    %362 = tpu.matmul %352, %361, %cst_130 {dimension_numbers = #tpu.dot_dimension_numbers<[1], [0], [0], [1], [0, 0, 1, 1], [], []>} : vector<8x128xf32>, vector<128x384xf32>, vector<8x384xf32> -> vector<8x384xf32>
    %363 = vector.extract_strided_slice %360 {offsets = [0, 0], sizes = [8, 128], strides = [1, 1]} : vector<8x384xf32> to vector<8x128xf32>
    %364 = vector.extract_strided_slice %362 {offsets = [0, 0], sizes = [8, 128], strides = [1, 1]} : vector<8x384xf32> to vector<8x128xf32>
    %365 = arith.addf %363, %364 : vector<8x128xf32>
    %366 = arith.negf %365 : vector<8x128xf32>
    %367 = math.exp %366 : vector<8x128xf32>
    %cst_131 = arith.constant 1.000000e+00 : f32
    %368 = vector.broadcast %cst_131 : f32 to vector<8x128xf32>
    %369 = arith.addf %368, %367 : vector<8x128xf32>
    %370 = arith.divf %368, %369 : vector<8x128xf32>
    %371 = vector.extract_strided_slice %360 {offsets = [0, 128], sizes = [8, 128], strides = [1, 1]} : vector<8x384xf32> to vector<8x128xf32>
    %372 = vector.extract_strided_slice %362 {offsets = [0, 128], sizes = [8, 128], strides = [1, 1]} : vector<8x384xf32> to vector<8x128xf32>
    %373 = arith.addf %371, %372 : vector<8x128xf32>
    %374 = arith.negf %373 : vector<8x128xf32>
    %375 = math.exp %374 : vector<8x128xf32>
    %cst_132 = arith.constant 1.000000e+00 : f32
    %376 = vector.broadcast %cst_132 : f32 to vector<8x128xf32>
    %377 = arith.addf %376, %375 : vector<8x128xf32>
    %378 = arith.divf %376, %377 : vector<8x128xf32>
    %379 = vector.extract_strided_slice %360 {offsets = [0, 256], sizes = [8, 128], strides = [1, 1]} : vector<8x384xf32> to vector<8x128xf32>
    %380 = vector.extract_strided_slice %362 {offsets = [0, 256], sizes = [8, 128], strides = [1, 1]} : vector<8x384xf32> to vector<8x128xf32>
    %381 = arith.addf %380, %35 : vector<8x128xf32>
    %382 = arith.mulf %370, %381 : vector<8x128xf32>
    %383 = arith.addf %379, %382 : vector<8x128xf32>
    %384 = math.tanh %383 : vector<8x128xf32>
    %cst_133 = arith.constant 1.000000e+00 : f32
    %385 = vector.broadcast %cst_133 : f32 to vector<8x128xf32>
    %386 = arith.subf %385, %378 : vector<8x128xf32>
    %387 = arith.mulf %386, %384 : vector<8x128xf32>
    %388 = arith.mulf %378, %352 : vector<8x128xf32>
    %389 = arith.addf %387, %388 : vector<8x128xf32>
    %390 = arith.index_cast %357 : i32 to index
    %c0_134 = arith.constant 0 : index
    %c0_135 = arith.constant 0 : index
    %391 = vector.load %arg14[%390, %c0_134, %c0_135] : memref<16x8x128xf32, #tpu.memory_space<vmem>>, vector<1x8x128xf32>
    %392 = vector.shape_cast %391 : vector<1x8x128xf32> to vector<8x128xf32>
    %393 = vector.shape_cast %389 : vector<8x128xf32> to vector<1x8x128xf32>
    tpu.vector_store %arg14[%390, %c0_134, %c0_135], %393 {strides = array<i32>} : memref<16x8x128xf32, #tpu.memory_space<vmem>>, vector<1x8x128xf32>,
    %c9_i32 = arith.constant 9 : i32
    %c15_i32_136 = arith.constant 15 : i32
    %394 = arith.subi %c15_i32_136, %c9_i32 : i32
    %395 = arith.index_cast %394 : i32 to index
    %c0_137 = arith.constant 0 : index
    %c0_138 = arith.constant 0 : index
    %396 = vector.load %arg13[%395, %c0_137, %c0_138] : memref<16x8x384xf32, #tpu.memory_space<vmem>>, vector<1x8x384xf32>
    %397 = vector.shape_cast %396 : vector<1x8x384xf32> to vector<8x384xf32>
    %c0_139 = arith.constant 0 : index
    %c0_140 = arith.constant 0 : index
    %398 = vector.load %arg8[%c0_139, %c0_140] : memref<128x384xf32, #tpu.memory_space<vmem>>, vector<128x384xf32>
    %cst_141 = arith.constant dense<0.000000e+00> : vector<8x384xf32>
    %399 = tpu.matmul %389, %398, %cst_141 {dimension_numbers = #tpu.dot_dimension_numbers<[1], [0], [0], [1], [0, 0, 1, 1], [], []>} : vector<8x128xf32>, vector<128x384xf32>, vector<8x384xf32> -> vector<8x384xf32>
    %400 = vector.extract_strided_slice %397 {offsets = [0, 0], sizes = [8, 128], strides = [1, 1]} : vector<8x384xf32> to vector<8x128xf32>
    %401 = vector.extract_strided_slice %399 {offsets = [0, 0], sizes = [8, 128], strides = [1, 1]} : vector<8x384xf32> to vector<8x128xf32>
    %402 = arith.addf %400, %401 : vector<8x128xf32>
    %403 = arith.negf %402 : vector<8x128xf32>
    %404 = math.exp %403 : vector<8x128xf32>
    %cst_142 = arith.constant 1.000000e+00 : f32
    %405 = vector.broadcast %cst_142 : f32 to vector<8x128xf32>
    %406 = arith.addf %405, %404 : vector<8x128xf32>
    %407 = arith.divf %405, %406 : vector<8x128xf32>
    %408 = vector.extract_strided_slice %397 {offsets = [0, 128], sizes = [8, 128], strides = [1, 1]} : vector<8x384xf32> to vector<8x128xf32>
    %409 = vector.extract_strided_slice %399 {offsets = [0, 128], sizes = [8, 128], strides = [1, 1]} : vector<8x384xf32> to vector<8x128xf32>
    %410 = arith.addf %408, %409 : vector<8x128xf32>
    %411 = arith.negf %410 : vector<8x128xf32>
    %412 = math.exp %411 : vector<8x128xf32>
    %cst_143 = arith.constant 1.000000e+00 : f32
    %413 = vector.broadcast %cst_143 : f32 to vector<8x128xf32>
    %414 = arith.addf %413, %412 : vector<8x128xf32>
    %415 = arith.divf %413, %414 : vector<8x128xf32>
    %416 = vector.extract_strided_slice %397 {offsets = [0, 256], sizes = [8, 128], strides = [1, 1]} : vector<8x384xf32> to vector<8x128xf32>
    %417 = vector.extract_strided_slice %399 {offsets = [0, 256], sizes = [8, 128], strides = [1, 1]} : vector<8x384xf32> to vector<8x128xf32>
    %418 = arith.addf %417, %35 : vector<8x128xf32>
    %419 = arith.mulf %407, %418 : vector<8x128xf32>
    %420 = arith.addf %416, %419 : vector<8x128xf32>
    %421 = math.tanh %420 : vector<8x128xf32>
    %cst_144 = arith.constant 1.000000e+00 : f32
    %422 = vector.broadcast %cst_144 : f32 to vector<8x128xf32>
    %423 = arith.subf %422, %415 : vector<8x128xf32>
    %424 = arith.mulf %423, %421 : vector<8x128xf32>
    %425 = arith.mulf %415, %389 : vector<8x128xf32>
    %426 = arith.addf %424, %425 : vector<8x128xf32>
    %427 = arith.index_cast %394 : i32 to index
    %c0_145 = arith.constant 0 : index
    %c0_146 = arith.constant 0 : index
    %428 = vector.load %arg14[%427, %c0_145, %c0_146] : memref<16x8x128xf32, #tpu.memory_space<vmem>>, vector<1x8x128xf32>
    %429 = vector.shape_cast %428 : vector<1x8x128xf32> to vector<8x128xf32>
    %430 = vector.shape_cast %426 : vector<8x128xf32> to vector<1x8x128xf32>
    tpu.vector_store %arg14[%427, %c0_145, %c0_146], %430 {strides = array<i32>} : memref<16x8x128xf32, #tpu.memory_space<vmem>>, vector<1x8x128xf32>,
    %c10_i32 = arith.constant 10 : i32
    %c15_i32_147 = arith.constant 15 : i32
    %431 = arith.subi %c15_i32_147, %c10_i32 : i32
    %432 = arith.index_cast %431 : i32 to index
    %c0_148 = arith.constant 0 : index
    %c0_149 = arith.constant 0 : index
    %433 = vector.load %arg13[%432, %c0_148, %c0_149] : memref<16x8x384xf32, #tpu.memory_space<vmem>>, vector<1x8x384xf32>
    %434 = vector.shape_cast %433 : vector<1x8x384xf32> to vector<8x384xf32>
    %c0_150 = arith.constant 0 : index
    %c0_151 = arith.constant 0 : index
    %435 = vector.load %arg8[%c0_150, %c0_151] : memref<128x384xf32, #tpu.memory_space<vmem>>, vector<128x384xf32>
    %cst_152 = arith.constant dense<0.000000e+00> : vector<8x384xf32>
    %436 = tpu.matmul %426, %435, %cst_152 {dimension_numbers = #tpu.dot_dimension_numbers<[1], [0], [0], [1], [0, 0, 1, 1], [], []>} : vector<8x128xf32>, vector<128x384xf32>, vector<8x384xf32> -> vector<8x384xf32>
    %437 = vector.extract_strided_slice %434 {offsets = [0, 0], sizes = [8, 128], strides = [1, 1]} : vector<8x384xf32> to vector<8x128xf32>
    %438 = vector.extract_strided_slice %436 {offsets = [0, 0], sizes = [8, 128], strides = [1, 1]} : vector<8x384xf32> to vector<8x128xf32>
    %439 = arith.addf %437, %438 : vector<8x128xf32>
    %440 = arith.negf %439 : vector<8x128xf32>
    %441 = math.exp %440 : vector<8x128xf32>
    %cst_153 = arith.constant 1.000000e+00 : f32
    %442 = vector.broadcast %cst_153 : f32 to vector<8x128xf32>
    %443 = arith.addf %442, %441 : vector<8x128xf32>
    %444 = arith.divf %442, %443 : vector<8x128xf32>
    %445 = vector.extract_strided_slice %434 {offsets = [0, 128], sizes = [8, 128], strides = [1, 1]} : vector<8x384xf32> to vector<8x128xf32>
    %446 = vector.extract_strided_slice %436 {offsets = [0, 128], sizes = [8, 128], strides = [1, 1]} : vector<8x384xf32> to vector<8x128xf32>
    %447 = arith.addf %445, %446 : vector<8x128xf32>
    %448 = arith.negf %447 : vector<8x128xf32>
    %449 = math.exp %448 : vector<8x128xf32>
    %cst_154 = arith.constant 1.000000e+00 : f32
    %450 = vector.broadcast %cst_154 : f32 to vector<8x128xf32>
    %451 = arith.addf %450, %449 : vector<8x128xf32>
    %452 = arith.divf %450, %451 : vector<8x128xf32>
    %453 = vector.extract_strided_slice %434 {offsets = [0, 256], sizes = [8, 128], strides = [1, 1]} : vector<8x384xf32> to vector<8x128xf32>
    %454 = vector.extract_strided_slice %436 {offsets = [0, 256], sizes = [8, 128], strides = [1, 1]} : vector<8x384xf32> to vector<8x128xf32>
    %455 = arith.addf %454, %35 : vector<8x128xf32>
    %456 = arith.mulf %444, %455 : vector<8x128xf32>
    %457 = arith.addf %453, %456 : vector<8x128xf32>
    %458 = math.tanh %457 : vector<8x128xf32>
    %cst_155 = arith.constant 1.000000e+00 : f32
    %459 = vector.broadcast %cst_155 : f32 to vector<8x128xf32>
    %460 = arith.subf %459, %452 : vector<8x128xf32>
    %461 = arith.mulf %460, %458 : vector<8x128xf32>
    %462 = arith.mulf %452, %426 : vector<8x128xf32>
    %463 = arith.addf %461, %462 : vector<8x128xf32>
    %464 = arith.index_cast %431 : i32 to index
    %c0_156 = arith.constant 0 : index
    %c0_157 = arith.constant 0 : index
    %465 = vector.load %arg14[%464, %c0_156, %c0_157] : memref<16x8x128xf32, #tpu.memory_space<vmem>>, vector<1x8x128xf32>
    %466 = vector.shape_cast %465 : vector<1x8x128xf32> to vector<8x128xf32>
    %467 = vector.shape_cast %463 : vector<8x128xf32> to vector<1x8x128xf32>
    tpu.vector_store %arg14[%464, %c0_156, %c0_157], %467 {strides = array<i32>} : memref<16x8x128xf32, #tpu.memory_space<vmem>>, vector<1x8x128xf32>,
    %c11_i32 = arith.constant 11 : i32
    %c15_i32_158 = arith.constant 15 : i32
    %468 = arith.subi %c15_i32_158, %c11_i32 : i32
    %469 = arith.index_cast %468 : i32 to index
    %c0_159 = arith.constant 0 : index
    %c0_160 = arith.constant 0 : index
    %470 = vector.load %arg13[%469, %c0_159, %c0_160] : memref<16x8x384xf32, #tpu.memory_space<vmem>>, vector<1x8x384xf32>
    %471 = vector.shape_cast %470 : vector<1x8x384xf32> to vector<8x384xf32>
    %c0_161 = arith.constant 0 : index
    %c0_162 = arith.constant 0 : index
    %472 = vector.load %arg8[%c0_161, %c0_162] : memref<128x384xf32, #tpu.memory_space<vmem>>, vector<128x384xf32>
    %cst_163 = arith.constant dense<0.000000e+00> : vector<8x384xf32>
    %473 = tpu.matmul %463, %472, %cst_163 {dimension_numbers = #tpu.dot_dimension_numbers<[1], [0], [0], [1], [0, 0, 1, 1], [], []>} : vector<8x128xf32>, vector<128x384xf32>, vector<8x384xf32> -> vector<8x384xf32>
    %474 = vector.extract_strided_slice %471 {offsets = [0, 0], sizes = [8, 128], strides = [1, 1]} : vector<8x384xf32> to vector<8x128xf32>
    %475 = vector.extract_strided_slice %473 {offsets = [0, 0], sizes = [8, 128], strides = [1, 1]} : vector<8x384xf32> to vector<8x128xf32>
    %476 = arith.addf %474, %475 : vector<8x128xf32>
    %477 = arith.negf %476 : vector<8x128xf32>
    %478 = math.exp %477 : vector<8x128xf32>
    %cst_164 = arith.constant 1.000000e+00 : f32
    %479 = vector.broadcast %cst_164 : f32 to vector<8x128xf32>
    %480 = arith.addf %479, %478 : vector<8x128xf32>
    %481 = arith.divf %479, %480 : vector<8x128xf32>
    %482 = vector.extract_strided_slice %471 {offsets = [0, 128], sizes = [8, 128], strides = [1, 1]} : vector<8x384xf32> to vector<8x128xf32>
    %483 = vector.extract_strided_slice %473 {offsets = [0, 128], sizes = [8, 128], strides = [1, 1]} : vector<8x384xf32> to vector<8x128xf32>
    %484 = arith.addf %482, %483 : vector<8x128xf32>
    %485 = arith.negf %484 : vector<8x128xf32>
    %486 = math.exp %485 : vector<8x128xf32>
    %cst_165 = arith.constant 1.000000e+00 : f32
    %487 = vector.broadcast %cst_165 : f32 to vector<8x128xf32>
    %488 = arith.addf %487, %486 : vector<8x128xf32>
    %489 = arith.divf %487, %488 : vector<8x128xf32>
    %490 = vector.extract_strided_slice %471 {offsets = [0, 256], sizes = [8, 128], strides = [1, 1]} : vector<8x384xf32> to vector<8x128xf32>
    %491 = vector.extract_strided_slice %473 {offsets = [0, 256], sizes = [8, 128], strides = [1, 1]} : vector<8x384xf32> to vector<8x128xf32>
    %492 = arith.addf %491, %35 : vector<8x128xf32>
    %493 = arith.mulf %481, %492 : vector<8x128xf32>
    %494 = arith.addf %490, %493 : vector<8x128xf32>
    %495 = math.tanh %494 : vector<8x128xf32>
    %cst_166 = arith.constant 1.000000e+00 : f32
    %496 = vector.broadcast %cst_166 : f32 to vector<8x128xf32>
    %497 = arith.subf %496, %489 : vector<8x128xf32>
    %498 = arith.mulf %497, %495 : vector<8x128xf32>
    %499 = arith.mulf %489, %463 : vector<8x128xf32>
    %500 = arith.addf %498, %499 : vector<8x128xf32>
    %501 = arith.index_cast %468 : i32 to index
    %c0_167 = arith.constant 0 : index
    %c0_168 = arith.constant 0 : index
    %502 = vector.load %arg14[%501, %c0_167, %c0_168] : memref<16x8x128xf32, #tpu.memory_space<vmem>>, vector<1x8x128xf32>
    %503 = vector.shape_cast %502 : vector<1x8x128xf32> to vector<8x128xf32>
    %504 = vector.shape_cast %500 : vector<8x128xf32> to vector<1x8x128xf32>
    tpu.vector_store %arg14[%501, %c0_167, %c0_168], %504 {strides = array<i32>} : memref<16x8x128xf32, #tpu.memory_space<vmem>>, vector<1x8x128xf32>,
    %c12_i32 = arith.constant 12 : i32
    %c15_i32_169 = arith.constant 15 : i32
    %505 = arith.subi %c15_i32_169, %c12_i32 : i32
    %506 = arith.index_cast %505 : i32 to index
    %c0_170 = arith.constant 0 : index
    %c0_171 = arith.constant 0 : index
    %507 = vector.load %arg13[%506, %c0_170, %c0_171] : memref<16x8x384xf32, #tpu.memory_space<vmem>>, vector<1x8x384xf32>
    %508 = vector.shape_cast %507 : vector<1x8x384xf32> to vector<8x384xf32>
    %c0_172 = arith.constant 0 : index
    %c0_173 = arith.constant 0 : index
    %509 = vector.load %arg8[%c0_172, %c0_173] : memref<128x384xf32, #tpu.memory_space<vmem>>, vector<128x384xf32>
    %cst_174 = arith.constant dense<0.000000e+00> : vector<8x384xf32>
    %510 = tpu.matmul %500, %509, %cst_174 {dimension_numbers = #tpu.dot_dimension_numbers<[1], [0], [0], [1], [0, 0, 1, 1], [], []>} : vector<8x128xf32>, vector<128x384xf32>, vector<8x384xf32> -> vector<8x384xf32>
    %511 = vector.extract_strided_slice %508 {offsets = [0, 0], sizes = [8, 128], strides = [1, 1]} : vector<8x384xf32> to vector<8x128xf32>
    %512 = vector.extract_strided_slice %510 {offsets = [0, 0], sizes = [8, 128], strides = [1, 1]} : vector<8x384xf32> to vector<8x128xf32>
    %513 = arith.addf %511, %512 : vector<8x128xf32>
    %514 = arith.negf %513 : vector<8x128xf32>
    %515 = math.exp %514 : vector<8x128xf32>
    %cst_175 = arith.constant 1.000000e+00 : f32
    %516 = vector.broadcast %cst_175 : f32 to vector<8x128xf32>
    %517 = arith.addf %516, %515 : vector<8x128xf32>
    %518 = arith.divf %516, %517 : vector<8x128xf32>
    %519 = vector.extract_strided_slice %508 {offsets = [0, 128], sizes = [8, 128], strides = [1, 1]} : vector<8x384xf32> to vector<8x128xf32>
    %520 = vector.extract_strided_slice %510 {offsets = [0, 128], sizes = [8, 128], strides = [1, 1]} : vector<8x384xf32> to vector<8x128xf32>
    %521 = arith.addf %519, %520 : vector<8x128xf32>
    %522 = arith.negf %521 : vector<8x128xf32>
    %523 = math.exp %522 : vector<8x128xf32>
    %cst_176 = arith.constant 1.000000e+00 : f32
    %524 = vector.broadcast %cst_176 : f32 to vector<8x128xf32>
    %525 = arith.addf %524, %523 : vector<8x128xf32>
    %526 = arith.divf %524, %525 : vector<8x128xf32>
    %527 = vector.extract_strided_slice %508 {offsets = [0, 256], sizes = [8, 128], strides = [1, 1]} : vector<8x384xf32> to vector<8x128xf32>
    %528 = vector.extract_strided_slice %510 {offsets = [0, 256], sizes = [8, 128], strides = [1, 1]} : vector<8x384xf32> to vector<8x128xf32>
    %529 = arith.addf %528, %35 : vector<8x128xf32>
    %530 = arith.mulf %518, %529 : vector<8x128xf32>
    %531 = arith.addf %527, %530 : vector<8x128xf32>
    %532 = math.tanh %531 : vector<8x128xf32>
    %cst_177 = arith.constant 1.000000e+00 : f32
    %533 = vector.broadcast %cst_177 : f32 to vector<8x128xf32>
    %534 = arith.subf %533, %526 : vector<8x128xf32>
    %535 = arith.mulf %534, %532 : vector<8x128xf32>
    %536 = arith.mulf %526, %500 : vector<8x128xf32>
    %537 = arith.addf %535, %536 : vector<8x128xf32>
    %538 = arith.index_cast %505 : i32 to index
    %c0_178 = arith.constant 0 : index
    %c0_179 = arith.constant 0 : index
    %539 = vector.load %arg14[%538, %c0_178, %c0_179] : memref<16x8x128xf32, #tpu.memory_space<vmem>>, vector<1x8x128xf32>
    %540 = vector.shape_cast %539 : vector<1x8x128xf32> to vector<8x128xf32>
    %541 = vector.shape_cast %537 : vector<8x128xf32> to vector<1x8x128xf32>
    tpu.vector_store %arg14[%538, %c0_178, %c0_179], %541 {strides = array<i32>} : memref<16x8x128xf32, #tpu.memory_space<vmem>>, vector<1x8x128xf32>,
    %c13_i32 = arith.constant 13 : i32
    %c15_i32_180 = arith.constant 15 : i32
    %542 = arith.subi %c15_i32_180, %c13_i32 : i32
    %543 = arith.index_cast %542 : i32 to index
    %c0_181 = arith.constant 0 : index
    %c0_182 = arith.constant 0 : index
    %544 = vector.load %arg13[%543, %c0_181, %c0_182] : memref<16x8x384xf32, #tpu.memory_space<vmem>>, vector<1x8x384xf32>
    %545 = vector.shape_cast %544 : vector<1x8x384xf32> to vector<8x384xf32>
    %c0_183 = arith.constant 0 : index
    %c0_184 = arith.constant 0 : index
    %546 = vector.load %arg8[%c0_183, %c0_184] : memref<128x384xf32, #tpu.memory_space<vmem>>, vector<128x384xf32>
    %cst_185 = arith.constant dense<0.000000e+00> : vector<8x384xf32>
    %547 = tpu.matmul %537, %546, %cst_185 {dimension_numbers = #tpu.dot_dimension_numbers<[1], [0], [0], [1], [0, 0, 1, 1], [], []>} : vector<8x128xf32>, vector<128x384xf32>, vector<8x384xf32> -> vector<8x384xf32>
    %548 = vector.extract_strided_slice %545 {offsets = [0, 0], sizes = [8, 128], strides = [1, 1]} : vector<8x384xf32> to vector<8x128xf32>
    %549 = vector.extract_strided_slice %547 {offsets = [0, 0], sizes = [8, 128], strides = [1, 1]} : vector<8x384xf32> to vector<8x128xf32>
    %550 = arith.addf %548, %549 : vector<8x128xf32>
    %551 = arith.negf %550 : vector<8x128xf32>
    %552 = math.exp %551 : vector<8x128xf32>
    %cst_186 = arith.constant 1.000000e+00 : f32
    %553 = vector.broadcast %cst_186 : f32 to vector<8x128xf32>
    %554 = arith.addf %553, %552 : vector<8x128xf32>
    %555 = arith.divf %553, %554 : vector<8x128xf32>
    %556 = vector.extract_strided_slice %545 {offsets = [0, 128], sizes = [8, 128], strides = [1, 1]} : vector<8x384xf32> to vector<8x128xf32>
    %557 = vector.extract_strided_slice %547 {offsets = [0, 128], sizes = [8, 128], strides = [1, 1]} : vector<8x384xf32> to vector<8x128xf32>
    %558 = arith.addf %556, %557 : vector<8x128xf32>
    %559 = arith.negf %558 : vector<8x128xf32>
    %560 = math.exp %559 : vector<8x128xf32>
    %cst_187 = arith.constant 1.000000e+00 : f32
    %561 = vector.broadcast %cst_187 : f32 to vector<8x128xf32>
    %562 = arith.addf %561, %560 : vector<8x128xf32>
    %563 = arith.divf %561, %562 : vector<8x128xf32>
    %564 = vector.extract_strided_slice %545 {offsets = [0, 256], sizes = [8, 128], strides = [1, 1]} : vector<8x384xf32> to vector<8x128xf32>
    %565 = vector.extract_strided_slice %547 {offsets = [0, 256], sizes = [8, 128], strides = [1, 1]} : vector<8x384xf32> to vector<8x128xf32>
    %566 = arith.addf %565, %35 : vector<8x128xf32>
    %567 = arith.mulf %555, %566 : vector<8x128xf32>
    %568 = arith.addf %564, %567 : vector<8x128xf32>
    %569 = math.tanh %568 : vector<8x128xf32>
    %cst_188 = arith.constant 1.000000e+00 : f32
    %570 = vector.broadcast %cst_188 : f32 to vector<8x128xf32>
    %571 = arith.subf %570, %563 : vector<8x128xf32>
    %572 = arith.mulf %571, %569 : vector<8x128xf32>
    %573 = arith.mulf %563, %537 : vector<8x128xf32>
    %574 = arith.addf %572, %573 : vector<8x128xf32>
    %575 = arith.index_cast %542 : i32 to index
    %c0_189 = arith.constant 0 : index
    %c0_190 = arith.constant 0 : index
    %576 = vector.load %arg14[%575, %c0_189, %c0_190] : memref<16x8x128xf32, #tpu.memory_space<vmem>>, vector<1x8x128xf32>
    %577 = vector.shape_cast %576 : vector<1x8x128xf32> to vector<8x128xf32>
    %578 = vector.shape_cast %574 : vector<8x128xf32> to vector<1x8x128xf32>
    tpu.vector_store %arg14[%575, %c0_189, %c0_190], %578 {strides = array<i32>} : memref<16x8x128xf32, #tpu.memory_space<vmem>>, vector<1x8x128xf32>,
    %c14_i32 = arith.constant 14 : i32
    %c15_i32_191 = arith.constant 15 : i32
    %579 = arith.subi %c15_i32_191, %c14_i32 : i32
    %580 = arith.index_cast %579 : i32 to index
    %c0_192 = arith.constant 0 : index
    %c0_193 = arith.constant 0 : index
    %581 = vector.load %arg13[%580, %c0_192, %c0_193] : memref<16x8x384xf32, #tpu.memory_space<vmem>>, vector<1x8x384xf32>
    %582 = vector.shape_cast %581 : vector<1x8x384xf32> to vector<8x384xf32>
    %c0_194 = arith.constant 0 : index
    %c0_195 = arith.constant 0 : index
    %583 = vector.load %arg8[%c0_194, %c0_195] : memref<128x384xf32, #tpu.memory_space<vmem>>, vector<128x384xf32>
    %cst_196 = arith.constant dense<0.000000e+00> : vector<8x384xf32>
    %584 = tpu.matmul %574, %583, %cst_196 {dimension_numbers = #tpu.dot_dimension_numbers<[1], [0], [0], [1], [0, 0, 1, 1], [], []>} : vector<8x128xf32>, vector<128x384xf32>, vector<8x384xf32> -> vector<8x384xf32>
    %585 = vector.extract_strided_slice %582 {offsets = [0, 0], sizes = [8, 128], strides = [1, 1]} : vector<8x384xf32> to vector<8x128xf32>
    %586 = vector.extract_strided_slice %584 {offsets = [0, 0], sizes = [8, 128], strides = [1, 1]} : vector<8x384xf32> to vector<8x128xf32>
    %587 = arith.addf %585, %586 : vector<8x128xf32>
    %588 = arith.negf %587 : vector<8x128xf32>
    %589 = math.exp %588 : vector<8x128xf32>
    %cst_197 = arith.constant 1.000000e+00 : f32
    %590 = vector.broadcast %cst_197 : f32 to vector<8x128xf32>
    %591 = arith.addf %590, %589 : vector<8x128xf32>
    %592 = arith.divf %590, %591 : vector<8x128xf32>
    %593 = vector.extract_strided_slice %582 {offsets = [0, 128], sizes = [8, 128], strides = [1, 1]} : vector<8x384xf32> to vector<8x128xf32>
    %594 = vector.extract_strided_slice %584 {offsets = [0, 128], sizes = [8, 128], strides = [1, 1]} : vector<8x384xf32> to vector<8x128xf32>
    %595 = arith.addf %593, %594 : vector<8x128xf32>
    %596 = arith.negf %595 : vector<8x128xf32>
    %597 = math.exp %596 : vector<8x128xf32>
    %cst_198 = arith.constant 1.000000e+00 : f32
    %598 = vector.broadcast %cst_198 : f32 to vector<8x128xf32>
    %599 = arith.addf %598, %597 : vector<8x128xf32>
    %600 = arith.divf %598, %599 : vector<8x128xf32>
    %601 = vector.extract_strided_slice %582 {offsets = [0, 256], sizes = [8, 128], strides = [1, 1]} : vector<8x384xf32> to vector<8x128xf32>
    %602 = vector.extract_strided_slice %584 {offsets = [0, 256], sizes = [8, 128], strides = [1, 1]} : vector<8x384xf32> to vector<8x128xf32>
    %603 = arith.addf %602, %35 : vector<8x128xf32>
    %604 = arith.mulf %592, %603 : vector<8x128xf32>
    %605 = arith.addf %601, %604 : vector<8x128xf32>
    %606 = math.tanh %605 : vector<8x128xf32>
    %cst_199 = arith.constant 1.000000e+00 : f32
    %607 = vector.broadcast %cst_199 : f32 to vector<8x128xf32>
    %608 = arith.subf %607, %600 : vector<8x128xf32>
    %609 = arith.mulf %608, %606 : vector<8x128xf32>
    %610 = arith.mulf %600, %574 : vector<8x128xf32>
    %611 = arith.addf %609, %610 : vector<8x128xf32>
    %612 = arith.index_cast %579 : i32 to index
    %c0_200 = arith.constant 0 : index
    %c0_201 = arith.constant 0 : index
    %613 = vector.load %arg14[%612, %c0_200, %c0_201] : memref<16x8x128xf32, #tpu.memory_space<vmem>>, vector<1x8x128xf32>
    %614 = vector.shape_cast %613 : vector<1x8x128xf32> to vector<8x128xf32>
    %615 = vector.shape_cast %611 : vector<8x128xf32> to vector<1x8x128xf32>
    tpu.vector_store %arg14[%612, %c0_200, %c0_201], %615 {strides = array<i32>} : memref<16x8x128xf32, #tpu.memory_space<vmem>>, vector<1x8x128xf32>,
    %c15_i32_202 = arith.constant 15 : i32
    %c15_i32_203 = arith.constant 15 : i32
    %616 = arith.subi %c15_i32_203, %c15_i32_202 : i32
    %617 = arith.index_cast %616 : i32 to index
    %c0_204 = arith.constant 0 : index
    %c0_205 = arith.constant 0 : index
    %618 = vector.load %arg13[%617, %c0_204, %c0_205] : memref<16x8x384xf32, #tpu.memory_space<vmem>>, vector<1x8x384xf32>
    %619 = vector.shape_cast %618 : vector<1x8x384xf32> to vector<8x384xf32>
    %c0_206 = arith.constant 0 : index
    %c0_207 = arith.constant 0 : index
    %620 = vector.load %arg8[%c0_206, %c0_207] : memref<128x384xf32, #tpu.memory_space<vmem>>, vector<128x384xf32>
    %cst_208 = arith.constant dense<0.000000e+00> : vector<8x384xf32>
    %621 = tpu.matmul %611, %620, %cst_208 {dimension_numbers = #tpu.dot_dimension_numbers<[1], [0], [0], [1], [0, 0, 1, 1], [], []>} : vector<8x128xf32>, vector<128x384xf32>, vector<8x384xf32> -> vector<8x384xf32>
    %622 = vector.extract_strided_slice %619 {offsets = [0, 0], sizes = [8, 128], strides = [1, 1]} : vector<8x384xf32> to vector<8x128xf32>
    %623 = vector.extract_strided_slice %621 {offsets = [0, 0], sizes = [8, 128], strides = [1, 1]} : vector<8x384xf32> to vector<8x128xf32>
    %624 = arith.addf %622, %623 : vector<8x128xf32>
    %625 = arith.negf %624 : vector<8x128xf32>
    %626 = math.exp %625 : vector<8x128xf32>
    %cst_209 = arith.constant 1.000000e+00 : f32
    %627 = vector.broadcast %cst_209 : f32 to vector<8x128xf32>
    %628 = arith.addf %627, %626 : vector<8x128xf32>
    %629 = arith.divf %627, %628 : vector<8x128xf32>
    %630 = vector.extract_strided_slice %619 {offsets = [0, 128], sizes = [8, 128], strides = [1, 1]} : vector<8x384xf32> to vector<8x128xf32>
    %631 = vector.extract_strided_slice %621 {offsets = [0, 128], sizes = [8, 128], strides = [1, 1]} : vector<8x384xf32> to vector<8x128xf32>
    %632 = arith.addf %630, %631 : vector<8x128xf32>
    %633 = arith.negf %632 : vector<8x128xf32>
    %634 = math.exp %633 : vector<8x128xf32>
    %cst_210 = arith.constant 1.000000e+00 : f32
    %635 = vector.broadcast %cst_210 : f32 to vector<8x128xf32>
    %636 = arith.addf %635, %634 : vector<8x128xf32>
    %637 = arith.divf %635, %636 : vector<8x128xf32>
    %638 = vector.extract_strided_slice %619 {offsets = [0, 256], sizes = [8, 128], strides = [1, 1]} : vector<8x384xf32> to vector<8x128xf32>
    %639 = vector.extract_strided_slice %621 {offsets = [0, 256], sizes = [8, 128], strides = [1, 1]} : vector<8x384xf32> to vector<8x128xf32>
    %640 = arith.addf %639, %35 : vector<8x128xf32>
    %641 = arith.mulf %629, %640 : vector<8x128xf32>
    %642 = arith.addf %638, %641 : vector<8x128xf32>
    %643 = math.tanh %642 : vector<8x128xf32>
    %cst_211 = arith.constant 1.000000e+00 : f32
    %644 = vector.broadcast %cst_211 : f32 to vector<8x128xf32>
    %645 = arith.subf %644, %637 : vector<8x128xf32>
    %646 = arith.mulf %645, %643 : vector<8x128xf32>
    %647 = arith.mulf %637, %611 : vector<8x128xf32>
    %648 = arith.addf %646, %647 : vector<8x128xf32>
    %649 = arith.index_cast %616 : i32 to index
    %c0_212 = arith.constant 0 : index
    %c0_213 = arith.constant 0 : index
    %650 = vector.load %arg14[%649, %c0_212, %c0_213] : memref<16x8x128xf32, #tpu.memory_space<vmem>>, vector<1x8x128xf32>
    %651 = vector.shape_cast %650 : vector<1x8x128xf32> to vector<8x128xf32>
    %652 = vector.shape_cast %648 : vector<8x128xf32> to vector<1x8x128xf32>
    tpu.vector_store %arg14[%649, %c0_212, %c0_213], %652 {strides = array<i32>} : memref<16x8x128xf32, #tpu.memory_space<vmem>>, vector<1x8x128xf32>,
    %c16_i32 = arith.constant 16 : i32
    %c0_214 = arith.constant 0 : index
    %c0_215 = arith.constant 0 : index
    %c0_216 = arith.constant 0 : index
    %653 = vector.load %arg14[%c0_214, %c0_215, %c0_216] : memref<16x8x128xf32, #tpu.memory_space<vmem>>, vector<16x8x128xf32>
    %654 = vector.shape_cast %653 : vector<16x8x128xf32> to vector<128x128xf32>
    %c0_217 = arith.constant 0 : index
    %c0_218 = arith.constant 0 : index
    %655 = vector.load %arg10[%c0_217, %c0_218] : memref<128x128xf32, #tpu.memory_space<vmem>>, vector<128x128xf32>
    %cst_219 = arith.constant dense<0.000000e+00> : vector<128x128xf32>
    %656 = tpu.matmul %654, %655, %cst_219 {dimension_numbers = #tpu.dot_dimension_numbers<[1], [0], [0], [1], [0, 0, 1, 1], [], []>} : vector<128x128xf32>, vector<128x128xf32>, vector<128x128xf32> -> vector<128x128xf32>
    %c0_220 = arith.constant 0 : index
    %c0_221 = arith.constant 0 : index
    %657 = vector.load %arg11[%c0_220, %c0_221] : memref<1x128xf32, #tpu.memory_space<vmem>>, vector<1x128xf32>
    %658 = vector.broadcast %657 : vector<1x128xf32> to vector<128x128xf32>
    %659 = arith.addf %656, %658 : vector<128x128xf32>
    %660 = vector.shape_cast %659 : vector<128x128xf32> to vector<16x8x128xf32>
    %c0_222 = arith.constant 0 : index
    %c0_223 = arith.constant 0 : index
    %c0_224 = arith.constant 0 : index
    %661 = vector.load %arg12[%c0_222, %c0_223, %c0_224] : memref<16x8x128xf32, #tpu.memory_space<vmem>>, vector<16x8x128xf32>
    tpu.vector_store %arg12[%c0_222, %c0_223, %c0_224], %660 {strides = array<i32>} : memref<16x8x128xf32, #tpu.memory_space<vmem>>, vector<16x8x128xf32>,
    return
  }
  func.func @transform_0(%arg0: i32) -> (i32, i32, i32) {
    %c0_i32 = arith.constant 0 : i32
    %c0_i32_0 = arith.constant 0 : i32
    %c0_i32_1 = arith.constant 0 : i32
    return %c0_i32, %arg0, %c0_i32_0 : i32, i32, i32
  }
  func.func @transform_1(%arg0: i32) -> (i32, i32) {
    %c0_i32 = arith.constant 0 : i32
    %c0_i32_0 = arith.constant 0 : i32
    %c0_i32_1 = arith.constant 0 : i32
    return %c0_i32, %c0_i32_0 : i32, i32
  }
  func.func @transform_2(%arg0: i32) -> (i32, i32) {
    %c0_i32 = arith.constant 0 : i32
    %c0_i32_0 = arith.constant 0 : i32
    %c0_i32_1 = arith.constant 0 : i32
    return %c0_i32, %c0_i32_0 : i32, i32
  }
  func.func @transform_3(%arg0: i32) -> (i32, i32) {
    %c0_i32 = arith.constant 0 : i32
    %c0_i32_0 = arith.constant 0 : i32
    %c0_i32_1 = arith.constant 0 : i32
    return %c0_i32, %c0_i32_0 : i32, i32
  }
  func.func @transform_4(%arg0: i32) -> (i32, i32) {
    %c0_i32 = arith.constant 0 : i32
    %c0_i32_0 = arith.constant 0 : i32
    %c0_i32_1 = arith.constant 0 : i32
    return %c0_i32, %c0_i32_0 : i32, i32
  }
  func.func @transform_5(%arg0: i32) -> (i32, i32) {
    %c0_i32 = arith.constant 0 : i32
    %c0_i32_0 = arith.constant 0 : i32
    %c0_i32_1 = arith.constant 0 : i32
    return %c0_i32, %c0_i32_0 : i32, i32
  }
  func.func @transform_6(%arg0: i32) -> (i32, i32) {
    %c0_i32 = arith.constant 0 : i32
    %c0_i32_0 = arith.constant 0 : i32
    %c0_i32_1 = arith.constant 0 : i32
    return %c0_i32, %c0_i32_0 : i32, i32
  }
  func.func @transform_7(%arg0: i32) -> (i32, i32) {
    %c0_i32 = arith.constant 0 : i32
    %c0_i32_0 = arith.constant 0 : i32
    %c0_i32_1 = arith.constant 0 : i32
    return %c0_i32, %c0_i32_0 : i32, i32
  }
  func.func @transform_8(%arg0: i32) -> (i32, i32) {
    %c0_i32 = arith.constant 0 : i32
    %c0_i32_0 = arith.constant 0 : i32
    %c0_i32_1 = arith.constant 0 : i32
    return %c0_i32, %c0_i32_0 : i32, i32
  }
  func.func @transform_9(%arg0: i32) -> (i32, i32) {
    %c0_i32 = arith.constant 0 : i32
    %c0_i32_0 = arith.constant 0 : i32
    %c0_i32_1 = arith.constant 0 : i32
    return %c0_i32, %c0_i32_0 : i32, i32
  }
  func.func @transform_10(%arg0: i32) -> (i32, i32) {
    %c0_i32 = arith.constant 0 : i32
    %c0_i32_0 = arith.constant 0 : i32
    %c0_i32_1 = arith.constant 0 : i32
    return %c0_i32, %c0_i32_0 : i32, i32
  }
  func.func @transform_11(%arg0: i32) -> (i32, i32, i32) {
    %c0_i32 = arith.constant 0 : i32
    %c0_i32_0 = arith.constant 0 : i32
    %c0_i32_1 = arith.constant 0 : i32
    return %c0_i32, %arg0, %c0_i32_0 : i32, i32, i32
  }
}

</mosaic_0001>

<llo_original>
// kernel: tpu_custom_call.1
$region0: #{tpu_custom_call.1}
  #allocation0 [shape = 'u32[]', space=smem, size = 0x4, offset = 0x4, fixed_abs, tag = 'smem constant byte address 0x4 - core index']
  #allocation1 [shape = 'u32[144,128]{1,0:T(1,128)}', space=vmem, size = 0x12000, scoped, tag = 'internal scratch']
  #allocation2 [shape = 'f32[16,8,384]{2,1,0:T(8,128)}', space=vmem, size = 0x30000, scoped, tag = 'scratch operand']
  #allocation3 [shape = 'f32[16,8,128]{2,1,0:T(8,128)}', space=vmem, size = 0x10000, scoped, tag = 'scratch operand']
  %s0 = inlined_call_operand.hbm [shape: f32[16,8,128], index: 0, kind: input, shape index: {}]
  %s1 = inlined_call_operand.hbm [shape: f32[128,128], index: 1, kind: input, shape index: {}]
  %s2 = inlined_call_operand.vmem [shape: f32[1,128], index: 2, kind: input, shape index: {}]
  %s3 = inlined_call_operand.vmem [shape: f32[1,128], index: 3, kind: input, shape index: {}]
  %s4 = inlined_call_operand.vmem [shape: f32[1,128], index: 4, kind: input, shape index: {}]
  %s5 = inlined_call_operand.hbm [shape: f32[128,384], index: 5, kind: input, shape index: {}]
  %s6 = inlined_call_operand.vmem [shape: f32[1,384], index: 6, kind: input, shape index: {}]
  %s7 = inlined_call_operand.hbm [shape: f32[128,384], index: 7, kind: input, shape index: {}]
  %s8 = inlined_call_operand.vmem [shape: f32[1,128], index: 8, kind: input, shape index: {}]
  %s9 = inlined_call_operand.hbm [shape: f32[128,128], index: 9, kind: input, shape index: {}]
  %s10 = inlined_call_operand.vmem [shape: f32[1,128], index: 10, kind: input, shape index: {}]
  %s11 = inlined_call_operand.hbm [shape: f32[16,8,128], index: 11, kind: output, shape index: {}]
  %s12 = sld [smem:[#allocation0]]
  $region74: #{tpu_custom_call.1} parent=0
    _
  %s14 = ssub.s32 1, %s12
  %s15 = scalar_select 0, %s14, %s12
  $region1: #{tpu_custom_call.1} parent=0
    #allocation4 [shape = 'u8[65536]{0}', space=vmem, size = 0x10000, scoped, tag = 'input window, operand 0, single buffered']
    #allocation5 [shape = 's32[1]{0}', space=sflag, size = 0x4, scoped, tag = 'scoped memory for tpu_custom_call.1']
    #allocation6 [shape = 's32[1]{0}', space=sflag, size = 0x4, scoped, tag = 'scoped memory for tpu_custom_call.1']
    #allocation7 [shape = 'u8[65536]{0}', space=vmem, size = 0x10000, scoped, tag = 'input window, operand 1, single buffered']
    #allocation8 [shape = 's32[1]{0}', space=sflag, size = 0x4, scoped, tag = 'scoped memory for tpu_custom_call.1']
    #allocation9 [shape = 'u8[196608]{0}', space=vmem, size = 0x30000, scoped, tag = 'input window, operand 5, single buffered']
    #allocation10 [shape = 'u8[196608]{0}', space=vmem, size = 0x30000, scoped, tag = 'input window, operand 7, single buffered']
    #allocation11 [shape = 's32[1]{0}', space=sflag, size = 0x4, scoped, tag = 'scoped memory for tpu_custom_call.1']
    #allocation12 [shape = 'u8[65536]{0}', space=vmem, size = 0x10000, scoped, tag = 'input window, operand 9, single buffered']
    #allocation13 [shape = 'u8[65536]{0}', space=vmem, size = 0x10000, scoped, tag = 'output window, operand 0, single buffered']
    %16 = vsyncpa [#allocation5], 0
    %17 = vsyncpa [#allocation8], 0
    %18 = vsyncpa [#allocation11], 0
    %19 = vsyncpa [#allocation6], 0
    // Predicated region
    $region2: #{tpu_custom_call.1} parent=1 // pred_check
      _
    $region3: #{tpu_custom_call.1} parent=1 // pred_check_branch
      %21 = sbr.rel (0) target = $region5
    $region4: #{tpu_custom_call.1} parent=1 // pred_region
      %s23 = ssub.s32 2048, 2048
      %24 = vsyncadd [#allocation5], %s23
      %s25 = sshll.u32 [#allocation4], 4
      %s26 = int_to_ptr.vmem [resolvable:$true] %s25
      %31 = dma.hbm_to_vmem [thread:$0]  %s0, 2048, %s26, [#allocation5], 128, 128, 8
    $region5: #{tpu_custom_call.1} parent=1 // pred_fallthru
      _
    // Predicated region
    $region6: #{tpu_custom_call.1} parent=1 // pred_check
      _
    $region7: #{tpu_custom_call.1} parent=1 // pred_check_branch
      %33 = sbr.rel (0) target = $region9
    $region8: #{tpu_custom_call.1} parent=1 // pred_region
      %s35 = ssub.s32 2048, 2048
      %36 = vsyncadd [#allocation8], %s35
      %s37 = sshll.u32 [#allocation7], 4
      %s38 = int_to_ptr.vmem [resolvable:$true] %s37
      %43 = dma.hbm_to_vmem [thread:$0]  %s1, 2048, %s38, [#allocation8], 128, 128, 8
    $region9: #{tpu_custom_call.1} parent=1 // pred_fallthru
      _
    // Predicated region
    $region10: #{tpu_custom_call.1} parent=1 // pred_check
      _
    $region11: #{tpu_custom_call.1} parent=1 // pred_check_branch
      %45 = sbr.rel (0) target = $region13
    $region12: #{tpu_custom_call.1} parent=1 // pred_region
      _
    $region13: #{tpu_custom_call.1} parent=1 // pred_fallthru
      _
    // Predicated region
    $region14: #{tpu_custom_call.1} parent=1 // pred_check
      _
    $region15: #{tpu_custom_call.1} parent=1 // pred_check_branch
      %47 = sbr.rel (0) target = $region17
    $region16: #{tpu_custom_call.1} parent=1 // pred_region
      _
    $region17: #{tpu_custom_call.1} parent=1 // pred_fallthru
      _
    // Predicated region
    $region18: #{tpu_custom_call.1} parent=1 // pred_check
      _
    $region19: #{tpu_custom_call.1} parent=1 // pred_check_branch
      %49 = sbr.rel (0) target = $region21
    $region20: #{tpu_custom_call.1} parent=1 // pred_region
      _
    $region21: #{tpu_custom_call.1} parent=1 // pred_fallthru
      _
    // Predicated region
    $region22: #{tpu_custom_call.1} parent=1 // pred_check
      _
    $region23: #{tpu_custom_call.1} parent=1 // pred_check_branch
      %51 = sbr.rel (0) target = $region25
    $region24: #{tpu_custom_call.1} parent=1 // pred_region
      %s53 = ssub.s32 6144, 6144
      %54 = vsyncadd [#allocation8], %s53
      %s55 = sshll.u32 [#allocation9], 4
      %s56 = int_to_ptr.vmem [resolvable:$true] %s55
      %61 = dma.hbm_to_vmem [thread:$0]  %s5, 6144, %s56, [#allocation8], 384, 384, 24
    $region25: #{tpu_custom_call.1} parent=1 // pred_fallthru
      _
    // Predicated region
    $region26: #{tpu_custom_call.1} parent=1 // pred_check
      _
    $region27: #{tpu_custom_call.1} parent=1 // pred_check_branch
      %63 = sbr.rel (0) target = $region29
    $region28: #{tpu_custom_call.1} parent=1 // pred_region
      _
    $region29: #{tpu_custom_call.1} parent=1 // pred_fallthru
      _
    // Predicated region
    $region30: #{tpu_custom_call.1} parent=1 // pred_check
      _
    $region31: #{tpu_custom_call.1} parent=1 // pred_check_branch
      %65 = sbr.rel (0) target = $region33
    $region32: #{tpu_custom_call.1} parent=1 // pred_region
      %s67 = ssub.s32 6144, 6144
      %68 = vsyncadd [#allocation11], %s67
      %s69 = sshll.u32 [#allocation10], 4
      %s70 = int_to_ptr.vmem [resolvable:$true] %s69
      %75 = dma.hbm_to_vmem [thread:$0]  %s7, 6144, %s70, [#allocation11], 384, 384, 24
    $region33: #{tpu_custom_call.1} parent=1 // pred_fallthru
      _
    // Predicated region
    $region34: #{tpu_custom_call.1} parent=1 // pred_check
      _
    $region35: #{tpu_custom_call.1} parent=1 // pred_check_branch
      %77 = sbr.rel (0) target = $region37
    $region36: #{tpu_custom_call.1} parent=1 // pred_region
      _
    $region37: #{tpu_custom_call.1} parent=1 // pred_fallthru
      _
    // Predicated region
    $region38: #{tpu_custom_call.1} parent=1 // pred_check
      _
    $region39: #{tpu_custom_call.1} parent=1 // pred_check_branch
      %79 = sbr.rel (0) target = $region41
    $region40: #{tpu_custom_call.1} parent=1 // pred_region
      %s81 = ssub.s32 2048, 2048
      %82 = vsyncadd [#allocation11], %s81
      %s83 = sshll.u32 [#allocation12], 4
      %s84 = int_to_ptr.vmem [resolvable:$true] %s83
      %89 = dma.hbm_to_vmem [thread:$0]  %s9, 2048, %s84, [#allocation11], 128, 128, 8
    $region41: #{tpu_custom_call.1} parent=1 // pred_fallthru
      _
    // Predicated region
    $region42: #{tpu_custom_call.1} parent=1 // pred_check
      _
    $region43: #{tpu_custom_call.1} parent=1 // pred_check_branch
      %91 = sbr.rel (0) target = $region45
    $region44: #{tpu_custom_call.1} parent=1 // pred_region
      _
    $region45: #{tpu_custom_call.1} parent=1 // pred_fallthru
      _
    // Predicated region
    $region46: #{tpu_custom_call.1} parent=1 // pred_check
      _
    $region47: #{tpu_custom_call.1} parent=1 // pred_check_branch
      %93 = sbr.rel (0) target = $region49
    $region48: #{tpu_custom_call.1} parent=1 // pred_region
      %94 = dma.done [#allocation5], 2048
    $region49: #{tpu_custom_call.1} parent=1 // pred_fallthru
      _
    // Predicated region
    $region50: #{tpu_custom_call.1} parent=1 // pred_check
      _
    $region51: #{tpu_custom_call.1} parent=1 // pred_check_branch
      %96 = sbr.rel (0) target = $region53
    $region52: #{tpu_custom_call.1} parent=1 // pred_region
      %97 = dma.done [#allocation8], 2048
    $region53: #{tpu_custom_call.1} parent=1 // pred_fallthru
      _
    // Predicated region
    $region54: #{tpu_custom_call.1} parent=1 // pred_check
      _
    $region55: #{tpu_custom_call.1} parent=1 // pred_check_branch
      %99 = sbr.rel (0) target = $region57
    $region56: #{tpu_custom_call.1} parent=1 // pred_region
      %100 = dma.done [#allocation8], 6144
    $region57: #{tpu_custom_call.1} parent=1 // pred_fallthru
      _
    // Predicated region
    $region58: #{tpu_custom_call.1} parent=1 // pred_check
      _
    $region59: #{tpu_custom_call.1} parent=1 // pred_check_branch
      %102 = sbr.rel (0) target = $region61
    $region60: #{tpu_custom_call.1} parent=1 // pred_region
      %103 = dma.done [#allocation11], 6144
    $region61: #{tpu_custom_call.1} parent=1 // pred_fallthru
      _
    // Predicated region
    $region62: #{tpu_custom_call.1} parent=1 // pred_check
      _
    $region63: #{tpu_custom_call.1} parent=1 // pred_check_branch
      %105 = sbr.rel (0) target = $region65
    $region64: #{tpu_custom_call.1} parent=1 // pred_region
      %106 = dma.done [#allocation11], 2048
    $region65: #{tpu_custom_call.1} parent=1 // pred_fallthru
      _
    %v107 = vld [vmem:[#allocation4] sm:$0xff]
    %v108 = vld [vmem:[#allocation4 + $0x8] sm:$0xff]
    %v109 = vld [vmem:[#allocation4 + $0x10] sm:$0xff]
    %v110 = vld [vmem:[#allocation4 + $0x18] sm:$0xff]
    %v111 = vld [vmem:[#allocation4 + $0x20] sm:$0xff]
    %v112 = vld [vmem:[#allocation4 + $0x28] sm:$0xff]
    %v113 = vld [vmem:[#allocation4 + $0x30] sm:$0xff]
    %v114 = vld [vmem:[#allocation4 + $0x38] sm:$0xff]
    %v115 = vld [vmem:[#allocation4 + $0x40] sm:$0xff]
    %v116 = vld [vmem:[#allocation4 + $0x48] sm:$0xff]
    %v117 = vld [vmem:[#allocation4 + $0x50] sm:$0xff]
    %v118 = vld [vmem:[#allocation4 + $0x58] sm:$0xff]
    %v119 = vld [vmem:[#allocation4 + $0x60] sm:$0xff]
    %v120 = vld [vmem:[#allocation4 + $0x68] sm:$0xff]
    %v121 = vld [vmem:[#allocation4 + $0x70] sm:$0xff]
    %v122 = vld [vmem:[#allocation4 + $0x78] sm:$0xff]
    %v123 = vld [vmem:[#allocation7] sm:$0xff]
    %v124 = vld [vmem:[#allocation7 + $0x8] sm:$0xff]
    %v125 = vld [vmem:[#allocation7 + $0x10] sm:$0xff]
    %v126 = vld [vmem:[#allocation7 + $0x18] sm:$0xff]
    %v127 = vld [vmem:[#allocation7 + $0x20] sm:$0xff]
    %v128 = vld [vmem:[#allocation7 + $0x28] sm:$0xff]
    %v129 = vld [vmem:[#allocation7 + $0x30] sm:$0xff]
    %v130 = vld [vmem:[#allocation7 + $0x38] sm:$0xff]
    %v131 = vld [vmem:[#allocation7 + $0x40] sm:$0xff]
    %v132 = vld [vmem:[#allocation7 + $0x48] sm:$0xff]
    %v133 = vld [vmem:[#allocation7 + $0x50] sm:$0xff]
    %v134 = vld [vmem:[#allocation7 + $0x58] sm:$0xff]
    %v135 = vld [vmem:[#allocation7 + $0x60] sm:$0xff]
    %v136 = vld [vmem:[#allocation7 + $0x68] sm:$0xff]
    %v137 = vld [vmem:[#allocation7 + $0x70] sm:$0xff]
    %v138 = vld [vmem:[#allocation7 + $0x78] sm:$0xff]
    %v139 = vld [vmem:[%s2] sm:$0x1]
    %v141 = vlaneseq
    %v142 = vshrl.u32 %v141, 7
    %v143 = vsub.s32 0, %v142
    %v144 = vrot.slane %v139, %v143
    %146 = vmatprep.subr.mxu0 0.0
    %147 = vmatpush1.msra.mxu0 %v138
    %148 = vmatprep.subr.mxu0 0.0
    %149 = vmatpush1.msra.mxu0 %v137
    %150 = vmatprep.subr.mxu0 0.0
    %151 = vmatpush1.msra.mxu0 %v136
    %152 = vmatprep.subr.mxu0 0.0
    %153 = vmatpush1.msra.mxu0 %v135
    %154 = vmatprep.subr.mxu0 0.0
    %155 = vmatpush1.msra.mxu0 %v134
    %156 = vmatprep.subr.mxu0 0.0
    %157 = vmatpush1.msra.mxu0 %v133
    %158 = vmatprep.subr.mxu0 0.0
    %159 = vmatpush1.msra.mxu0 %v132
    %160 = vmatprep.subr.mxu0 0.0
    %161 = vmatpush1.msra.mxu0 %v131
    %162 = vmatprep.subr.mxu0 0.0
    %163 = vmatpush1.msra.mxu0 %v130
    %164 = vmatprep.subr.mxu0 0.0
    %165 = vmatpush1.msra.mxu0 %v129
    %166 = vmatprep.subr.mxu0 0.0
    %167 = vmatpush1.msra.mxu0 %v128
    %168 = vmatprep.subr.mxu0 0.0
    %169 = vmatpush1.msra.mxu0 %v127
    %170 = vmatprep.subr.mxu0 0.0
    %171 = vmatpush1.msra.mxu0 %v126
    %172 = vmatprep.subr.mxu0 0.0
    %173 = vmatpush1.msra.mxu0 %v125
    %174 = vmatprep.subr.mxu0 0.0
    %175 = vmatpush1.msra.mxu0 %v124
    %176 = vmatprep.subr.mxu0 0.0
    %177 = vmatpush1.msra.mxu0 %v123
    %178 = vmatprep.subr.mxu0 0.0
    %179 = vmatpush2.msra.mxu0 0.0
    %180 = vmatprep.subr.mxu0 0.0
    %181 = vmatpush2.msra.mxu0 0.0
    %182 = vmatprep.subr.mxu0 0.0
    %183 = vmatpush2.msra.mxu0 0.0
    %184 = vmatprep.subr.mxu0 0.0
    %185 = vmatpush2.msra.mxu0 0.0
    %186 = vmatprep.subr.mxu0 0.0
    %187 = vmatpush2.msra.mxu0 0.0
    %188 = vmatprep.subr.mxu0 0.0
    %189 = vmatpush2.msra.mxu0 0.0
    %190 = vmatprep.subr.mxu0 0.0
    %191 = vmatpush2.msra.mxu0 0.0
    %192 = vmatprep.subr.mxu0 0.0
    %193 = vmatpush2.msra.mxu0 0.0
    %194 = vmatprep.subr.mxu0 0.0
    %195 = vmatpush2.msra.mxu0 0.0
    %196 = vmatprep.subr.mxu0 0.0
    %197 = vmatpush2.msra.mxu0 0.0
    %198 = vmatprep.subr.mxu0 0.0
    %199 = vmatpush2.msra.mxu0 0.0
    %200 = vmatprep.subr.mxu0 0.0
    %201 = vmatpush2.msra.mxu0 0.0
    %202 = vmatprep.subr.mxu0 0.0
    %203 = vmatpush2.msra.mxu0 0.0
    %204 = vmatprep.subr.mxu0 0.0
    %205 = vmatpush2.msra.mxu0 0.0
    %206 = vmatprep.subr.mxu0 0.0
    %207 = vmatpush2.msra.mxu0 0.0
    %208 = vmatprep.subr.mxu0 0.0
    %209 = vmatpush2.msra.mxu0 0.0
    %210 = vmatprep.mubr.f32.mxu0 0.0
    %211 = vmatmul.mubr.f32.gmra.mxu0 %v107
    %v212 = vpop.f32.mrf.mxu0
    %v213 = vadd.f32 %v144, %v212
    %v214 = vpop.f32.mrf.mxu0
    %215 = vmatprep.mubr.f32.mxu0 0.0
    %216 = vmatmul.mubr.f32.gmra.mxu0 %v108
    %v217 = vpop.f32.mrf.mxu0
    %v218 = vadd.f32 %v144, %v217
    %v219 = vpop.f32.mrf.mxu0
    %220 = vmatprep.mubr.f32.mxu0 0.0
    %221 = vmatmul.mubr.f32.gmra.mxu0 %v109
    %v222 = vpop.f32.mrf.mxu0
    %v223 = vadd.f32 %v144, %v222
    %v224 = vpop.f32.mrf.mxu0
    %225 = vmatprep.mubr.f32.mxu0 0.0
    %226 = vmatmul.mubr.f32.gmra.mxu0 %v110
    %v227 = vpop.f32.mrf.mxu0
    %v228 = vadd.f32 %v144, %v227
    %v229 = vpop.f32.mrf.mxu0
    %230 = vmatprep.mubr.f32.mxu0 0.0
    %231 = vmatmul.mubr.f32.gmra.mxu0 %v111
    %v232 = vpop.f32.mrf.mxu0
    %v233 = vadd.f32 %v144, %v232
    %v234 = vpop.f32.mrf.mxu0
    %235 = vmatprep.mubr.f32.mxu0 0.0
    %236 = vmatmul.mubr.f32.gmra.mxu0 %v112
    %v237 = vpop.f32.mrf.mxu0
    %v238 = vadd.f32 %v144, %v237
    %v239 = vpop.f32.mrf.mxu0
    %240 = vmatprep.mubr.f32.mxu0 0.0
    %241 = vmatmul.mubr.f32.gmra.mxu0 %v113
    %v242 = vpop.f32.mrf.mxu0
    %v243 = vadd.f32 %v144, %v242
    %v244 = vpop.f32.mrf.mxu0
    %245 = vmatprep.mubr.f32.mxu0 0.0
    %246 = vmatmul.mubr.f32.gmra.mxu0 %v114
    %v247 = vpop.f32.mrf.mxu0
    %v248 = vadd.f32 %v144, %v247
    %v249 = vpop.f32.mrf.mxu0
    %250 = vmatprep.mubr.f32.mxu0 0.0
    %251 = vmatmul.mubr.f32.gmra.mxu0 %v115
    %v252 = vpop.f32.mrf.mxu0
    %v253 = vadd.f32 %v144, %v252
    %v254 = vpop.f32.mrf.mxu0
    %255 = vmatprep.mubr.f32.mxu0 0.0
    %256 = vmatmul.mubr.f32.gmra.mxu0 %v116
    %v257 = vpop.f32.mrf.mxu0
    %v258 = vadd.f32 %v144, %v257
    %v259 = vpop.f32.mrf.mxu0
    %260 = vmatprep.mubr.f32.mxu0 0.0
    %261 = vmatmul.mubr.f32.gmra.mxu0 %v117
    %v262 = vpop.f32.mrf.mxu0
    %v263 = vadd.f32 %v144, %v262
    %v264 = vpop.f32.mrf.mxu0
    %265 = vmatprep.mubr.f32.mxu0 0.0
    %266 = vmatmul.mubr.f32.gmra.mxu0 %v118
    %v267 = vpop.f32.mrf.mxu0
    %v268 = vadd.f32 %v144, %v267
    %v269 = vpop.f32.mrf.mxu0
    %270 = vmatprep.mubr.f32.mxu0 0.0
    %271 = vmatmul.mubr.f32.gmra.mxu0 %v119
    %v272 = vpop.f32.mrf.mxu0
    %v273 = vadd.f32 %v144, %v272
    %v274 = vpop.f32.mrf.mxu0
    %275 = vmatprep.mubr.f32.mxu0 0.0
    %276 = vmatmul.mubr.f32.gmra.mxu0 %v120
    %v277 = vpop.f32.mrf.mxu0
    %v278 = vadd.f32 %v144, %v277
    %v279 = vpop.f32.mrf.mxu0
    %280 = vmatprep.mubr.f32.mxu0 0.0
    %281 = vmatmul.mubr.f32.gmra.mxu0 %v121
    %v282 = vpop.f32.mrf.mxu0
    %v283 = vadd.f32 %v144, %v282
    %v284 = vpop.f32.mrf.mxu0
    %285 = vmatprep.mubr.f32.mxu0 0.0
    %286 = vmatmul.mubr.f32.gmra.mxu0 %v122
    %v287 = vpop.f32.mrf.mxu0
    %v288 = vadd.f32 %v144, %v287
    %v289 = vpop.f32.mrf.mxu0
    %290 = vdwg.mxu0
    %v291 = vadd.f32 %v213, %v218
    %v292 = vadd.f32 %v291, %v223
    %v293 = vadd.f32 %v292, %v228
    %v294 = vadd.f32 %v293, %v233
    %v295 = vadd.f32 %v294, %v238
    %v296 = vadd.f32 %v295, %v243
    %v297 = vadd.f32 %v296, %v248
    %v298 = vadd.f32 %v297, %v253
    %v299 = vadd.f32 %v298, %v258
    %v300 = vadd.f32 %v299, %v263
    %v301 = vadd.f32 %v300, %v268
    %v302 = vadd.f32 %v301, %v273
    %v303 = vadd.f32 %v302, %v278
    %v304 = vadd.f32 %v303, %v283
    %v305 = vadd.f32 %v304, %v288
    %v306 = vadd.f32 %v305, 0.0
    %v307 = vmul.f32 %v213, %v213
    %v308 = vmul.f32 %v218, %v218
    %v309 = vmul.f32 %v223, %v223
    %v310 = vmul.f32 %v228, %v228
    %v311 = vmul.f32 %v233, %v233
    %v312 = vmul.f32 %v238, %v238
    %v313 = vmul.f32 %v243, %v243
    %v314 = vmul.f32 %v248, %v248
    %v315 = vmul.f32 %v253, %v253
    %v316 = vmul.f32 %v258, %v258
    %v317 = vmul.f32 %v263, %v263
    %v318 = vmul.f32 %v268, %v268
    %v319 = vmul.f32 %v273, %v273
    %v320 = vmul.f32 %v278, %v278
    %v321 = vmul.f32 %v283, %v283
    %v322 = vmul.f32 %v288, %v288
    %v323 = vadd.f32 %v307, %v308
    %v324 = vadd.f32 %v323, %v309
    %v325 = vadd.f32 %v324, %v310
    %v326 = vadd.f32 %v325, %v311
    %v327 = vadd.f32 %v326, %v312
    %v328 = vadd.f32 %v327, %v313
    %v329 = vadd.f32 %v328, %v314
    %v330 = vadd.f32 %v329, %v315
    %v331 = vadd.f32 %v330, %v316
    %v332 = vadd.f32 %v331, %v317
    %v333 = vadd.f32 %v332, %v318
    %v334 = vadd.f32 %v333, %v319
    %v335 = vadd.f32 %v334, %v320
    %v336 = vadd.f32 %v335, %v321
    %v337 = vadd.f32 %v336, %v322
    %v338 = vadd.f32 %v337, 0.0
    %v339 = vmul.f32 %v306, 0.0625
    %v340 = vmul.f32 %v338, 0.0625
    %v341 = vmul.f32 %v339, %v339
    %v342 = vsub.f32 %v340, %v341
    %v343 = vmax.f32 %v342, 0.0
    %v344 = vadd.f32 %v343, 1e-05
    %v345 = vrsqrt.pop %v344
    %v346 = vld [vmem:[%s3] sm:$0x1]
    %v348 = vlaneseq
    %v349 = vshrl.u32 %v348, 7
    %v350 = vsub.s32 0, %v349
    %v351 = vrot.slane %v346, %v350
    %v353 = vmul.f32 %v351, %v345
    %v354 = vld [vmem:[%s4] sm:$0x1]
    %v355 = vmul.f32 %v339, %v353
    %v357 = vlaneseq
    %v358 = vshrl.u32 %v357, 7
    %v359 = vsub.s32 0, %v358
    %v360 = vrot.slane %v354, %v359
    %v362 = vsub.f32 %v360, %v355
    %v363 = vld [vmem:[%s8] sm:$0x1]
    %v365 = vlaneseq
    %v366 = vshrl.u32 %v365, 7
    %v367 = vsub.s32 0, %v366
    %v368 = vrot.slane %v363, %v367
    %v370 = vmul.f32 %v213, %v353
    %v371 = vmul.f32 %v218, %v353
    %v372 = vmul.f32 %v223, %v353
    %v373 = vmul.f32 %v228, %v353
    %v374 = vmul.f32 %v233, %v353
    %v375 = vmul.f32 %v238, %v353
    %v376 = vmul.f32 %v243, %v353
    %v377 = vmul.f32 %v248, %v353
    %v378 = vmul.f32 %v253, %v353
    %v379 = vmul.f32 %v258, %v353
    %v380 = vmul.f32 %v263, %v353
    %v381 = vmul.f32 %v268, %v353
    %v382 = vmul.f32 %v273, %v353
    %v383 = vmul.f32 %v278, %v353
    %v384 = vmul.f32 %v283, %v353
    %v385 = vmul.f32 %v288, %v353
    %v386 = vadd.f32 %v370, %v362
    %v387 = vadd.f32 %v371, %v362
    %v388 = vadd.f32 %v372, %v362
    %v389 = vadd.f32 %v373, %v362
    %v390 = vadd.f32 %v374, %v362
    %v391 = vadd.f32 %v375, %v362
    %v392 = vadd.f32 %v376, %v362
    %v393 = vadd.f32 %v377, %v362
    %v394 = vadd.f32 %v378, %v362
    %v395 = vadd.f32 %v379, %v362
    %v396 = vadd.f32 %v380, %v362
    %v397 = vadd.f32 %v381, %v362
    %v398 = vadd.f32 %v382, %v362
    %v399 = vadd.f32 %v383, %v362
    %v400 = vadd.f32 %v384, %v362
    %v401 = vadd.f32 %v385, %v362
    %v402 = vmax.f32 %v386, 0.0
    %v403 = vmax.f32 %v387, 0.0
    %v404 = vmax.f32 %v388, 0.0
    %v405 = vmax.f32 %v389, 0.0
    %v406 = vmax.f32 %v390, 0.0
    %v407 = vmax.f32 %v391, 0.0
    %v408 = vmax.f32 %v392, 0.0
    %v409 = vmax.f32 %v393, 0.0
    %v410 = vmax.f32 %v394, 0.0
    %v411 = vmax.f32 %v395, 0.0
    %v412 = vmax.f32 %v396, 0.0
    %v413 = vmax.f32 %v397, 0.0
    %v414 = vmax.f32 %v398, 0.0
    %v415 = vmax.f32 %v399, 0.0
    %v416 = vmax.f32 %v400, 0.0
    %v417 = vmax.f32 %v401, 0.0
    %v418 = vld [vmem:[#allocation9] sm:$0xff]
    %v419 = vld [vmem:[#allocation9 + $0x8] sm:$0xff]
    %v420 = vld [vmem:[#allocation9 + $0x10] sm:$0xff]
    %v421 = vld [vmem:[#allocation9 + $0x18] sm:$0xff]
    %v422 = vld [vmem:[#allocation9 + $0x20] sm:$0xff]
    %v423 = vld [vmem:[#allocation9 + $0x28] sm:$0xff]
    %v424 = vld [vmem:[#allocation9 + $0x30] sm:$0xff]
    %v425 = vld [vmem:[#allocation9 + $0x38] sm:$0xff]
    %v426 = vld [vmem:[#allocation9 + $0x40] sm:$0xff]
    %v427 = vld [vmem:[#allocation9 + $0x48] sm:$0xff]
    %v428 = vld [vmem:[#allocation9 + $0x50] sm:$0xff]
    %v429 = vld [vmem:[#allocation9 + $0x58] sm:$0xff]
    %v430 = vld [vmem:[#allocation9 + $0x60] sm:$0xff]
    %v431 = vld [vmem:[#allocation9 + $0x68] sm:$0xff]
    %v432 = vld [vmem:[#allocation9 + $0x70] sm:$0xff]
    %v433 = vld [vmem:[#allocation9 + $0x78] sm:$0xff]
    %v434 = vld [vmem:[#allocation9 + $0x80] sm:$0xff]
    %v435 = vld [vmem:[#allocation9 + $0x88] sm:$0xff]
    %v436 = vld [vmem:[#allocation9 + $0x90] sm:$0xff]
    %v437 = vld [vmem:[#allocation9 + $0x98] sm:$0xff]
    %v438 = vld [vmem:[#allocation9 + $0xa0] sm:$0xff]
    %v439 = vld [vmem:[#allocation9 + $0xa8] sm:$0xff]
    %v440 = vld [vmem:[#allocation9 + $0xb0] sm:$0xff]
    %v441 = vld [vmem:[#allocation9 + $0xb8] sm:$0xff]
    %v442 = vld [vmem:[#allocation9 + $0xc0] sm:$0xff]
    %v443 = vld [vmem:[#allocation9 + $0xc8] sm:$0xff]
    %v444 = vld [vmem:[#allocation9 + $0xd0] sm:$0xff]
    %v445 = vld [vmem:[#allocation9 + $0xd8] sm:$0xff]
    %v446 = vld [vmem:[#allocation9 + $0xe0] sm:$0xff]
    %v447 = vld [vmem:[#allocation9 + $0xe8] sm:$0xff]
    %v448 = vld [vmem:[#allocation9 + $0xf0] sm:$0xff]
    %v449 = vld [vmem:[#allocation9 + $0xf8] sm:$0xff]
    %v450 = vld [vmem:[#allocation9 + $0x100] sm:$0xff]
    %v451 = vld [vmem:[#allocation9 + $0x108] sm:$0xff]
    %v452 = vld [vmem:[#allocation9 + $0x110] sm:$0xff]
    %v453 = vld [vmem:[#allocation9 + $0x118] sm:$0xff]
    %v454 = vld [vmem:[#allocation9 + $0x120] sm:$0xff]
    %v455 = vld [vmem:[#allocation9 + $0x128] sm:$0xff]
    %v456 = vld [vmem:[#allocation9 + $0x130] sm:$0xff]
    %v457 = vld [vmem:[#allocation9 + $0x138] sm:$0xff]
    %v458 = vld [vmem:[#allocation9 + $0x140] sm:$0xff]
    %v459 = vld [vmem:[#allocation9 + $0x148] sm:$0xff]
    %v460 = vld [vmem:[#allocation9 + $0x150] sm:$0xff]
    %v461 = vld [vmem:[#allocation9 + $0x158] sm:$0xff]
    %v462 = vld [vmem:[#allocation9 + $0x160] sm:$0xff]
    %v463 = vld [vmem:[#allocation9 + $0x168] sm:$0xff]
    %v464 = vld [vmem:[#allocation9 + $0x170] sm:$0xff]
    %v465 = vld [vmem:[#allocation9 + $0x178] sm:$0xff]
    %v466 = vld [vmem:[%s6] sm:$0x7]
    %v468 = vlaneseq
    %v469 = vshrl.u32 %v468, 7
    %v470 = vsub.s32 0, %v469
    %v471 = vrot.slane %v466, %v470
    %v472 = vlaneseq
    %v473 = vshrl.u32 %v472, 7
    %v474 = vsub.s32 1, %v473
    %v475 = vrot.slane %v466, %v474
    %v476 = vlaneseq
    %v477 = vshrl.u32 %v476, 7
    %v478 = vsub.s32 2, %v477
    %v479 = vrot.slane %v466, %v478
    %483 = vmatprep.subr.mxu0 %v464
    %484 = vmatpush1.msra.mxu0 %v463
    %485 = vmatprep.subr.mxu0 %v461
    %486 = vmatpush1.msra.mxu0 %v460
    %487 = vmatprep.subr.mxu0 %v458
    %488 = vmatpush1.msra.mxu0 %v457
    %489 = vmatprep.subr.mxu0 %v455
    %490 = vmatpush1.msra.mxu0 %v454
    %491 = vmatprep.subr.mxu0 %v452
    %492 = vmatpush1.msra.mxu0 %v451
    %493 = vmatprep.subr.mxu0 %v449
    %494 = vmatpush1.msra.mxu0 %v448
    %495 = vmatprep.subr.mxu0 %v446
    %496 = vmatpush1.msra.mxu0 %v445
    %497 = vmatprep.subr.mxu0 %v443
    %498 = vmatpush1.msra.mxu0 %v442
    %499 = vmatprep.subr.mxu0 %v440
    %500 = vmatpush1.msra.mxu0 %v439
    %501 = vmatprep.subr.mxu0 %v437
    %502 = vmatpush1.msra.mxu0 %v436
    %503 = vmatprep.subr.mxu0 %v434
    %504 = vmatpush1.msra.mxu0 %v433
    %505 = vmatprep.subr.mxu0 %v431
    %506 = vmatpush1.msra.mxu0 %v430
    %507 = vmatprep.subr.mxu0 %v428
    %508 = vmatpush1.msra.mxu0 %v427
    %509 = vmatprep.subr.mxu0 %v425
    %510 = vmatpush1.msra.mxu0 %v424
    %511 = vmatprep.subr.mxu0 %v422
    %512 = vmatpush1.msra.mxu0 %v421
    %513 = vmatprep.subr.mxu0 %v419
    %514 = vmatpush1.msra.mxu0 %v418
    %515 = vmatprep.subr.mxu0 0.0
    %516 = vmatpush2.msra.mxu0 0.0
    %517 = vmatprep.subr.mxu0 0.0
    %518 = vmatpush2.msra.mxu0 0.0
    %519 = vmatprep.subr.mxu0 0.0
    %520 = vmatpush2.msra.mxu0 0.0
    %521 = vmatprep.subr.mxu0 0.0
    %522 = vmatpush2.msra.mxu0 0.0
    %523 = vmatprep.subr.mxu0 0.0
    %524 = vmatpush2.msra.mxu0 0.0
    %525 = vmatprep.subr.mxu0 0.0
    %526 = vmatpush2.msra.mxu0 0.0
    %527 = vmatprep.subr.mxu0 0.0
    %528 = vmatpush2.msra.mxu0 0.0
    %529 = vmatprep.subr.mxu0 0.0
    %530 = vmatpush2.msra.mxu0 0.0
    %531 = vmatprep.subr.mxu0 0.0
    %532 = vmatpush2.msra.mxu0 0.0
    %533 = vmatprep.subr.mxu0 0.0
    %534 = vmatpush2.msra.mxu0 0.0
    %535 = vmatprep.subr.mxu0 0.0
    %536 = vmatpush2.msra.mxu0 0.0
    %537 = vmatprep.subr.mxu0 0.0
    %538 = vmatpush2.msra.mxu0 0.0
    %539 = vmatprep.subr.mxu0 0.0
    %540 = vmatpush2.msra.mxu0 0.0
    %541 = vmatprep.subr.mxu0 0.0
    %542 = vmatpush2.msra.mxu0 0.0
    %543 = vmatprep.subr.mxu0 0.0
    %544 = vmatpush2.msra.mxu0 0.0
    %545 = vmatprep.subr.mxu0 0.0
    %546 = vmatpush2.msra.mxu0 0.0
    %547 = vmatprep.mubr.f32.mxu0 0.0
    %548 = vmatmul.mubr.f32.gmra.mxu0 %v402
    %v549 = vpop.f32.mrf.mxu0
    %v550 = vadd.f32 %v471, %v549
    %v551 = vpop.f32.mrf.mxu0
    %v552 = vadd.f32 %v475, %v551
    %553 = vmatprep.mubr.f32.mxu0 0.0
    %554 = vmatmul.mubr.f32.gmra.mxu0 %v403
    %v555 = vpop.f32.mrf.mxu0
    %v556 = vadd.f32 %v471, %v555
    %v557 = vpop.f32.mrf.mxu0
    %v558 = vadd.f32 %v475, %v557
    %559 = vmatprep.mubr.f32.mxu0 0.0
    %560 = vmatmul.mubr.f32.gmra.mxu0 %v404
    %v561 = vpop.f32.mrf.mxu0
    %v562 = vadd.f32 %v471, %v561
    %v563 = vpop.f32.mrf.mxu0
    %v564 = vadd.f32 %v475, %v563
    %565 = vmatprep.mubr.f32.mxu0 0.0
    %566 = vmatmul.mubr.f32.gmra.mxu0 %v405
    %v567 = vpop.f32.mrf.mxu0
    %v568 = vadd.f32 %v471, %v567
    %v569 = vpop.f32.mrf.mxu0
    %v570 = vadd.f32 %v475, %v569
    %571 = vmatprep.mubr.f32.mxu0 0.0
    %572 = vmatmul.mubr.f32.gmra.mxu0 %v406
    %v573 = vpop.f32.mrf.mxu0
    %v574 = vadd.f32 %v471, %v573
    %v575 = vpop.f32.mrf.mxu0
    %v576 = vadd.f32 %v475, %v575
    %577 = vmatprep.mubr.f32.mxu0 0.0
    %578 = vmatmul.mubr.f32.gmra.mxu0 %v407
    %v579 = vpop.f32.mrf.mxu0
    %v580 = vadd.f32 %v471, %v579
    %v581 = vpop.f32.mrf.mxu0
    %v582 = vadd.f32 %v475, %v581
    %583 = vmatprep.mubr.f32.mxu0 0.0
    %584 = vmatmul.mubr.f32.gmra.mxu0 %v408
    %v585 = vpop.f32.mrf.mxu0
    %v586 = vadd.f32 %v471, %v585
    %v587 = vpop.f32.mrf.mxu0
    %v588 = vadd.f32 %v475, %v587
    %589 = vmatprep.mubr.f32.mxu0 0.0
    %590 = vmatmul.mubr.f32.gmra.mxu0 %v409
    %v591 = vpop.f32.mrf.mxu0
    %v592 = vadd.f32 %v471, %v591
    %v593 = vpop.f32.mrf.mxu0
    %v594 = vadd.f32 %v475, %v593
    %595 = vmatprep.mubr.f32.mxu0 0.0
    %596 = vmatmul.mubr.f32.gmra.mxu0 %v410
    %v597 = vpop.f32.mrf.mxu0
    %v598 = vadd.f32 %v471, %v597
    %v599 = vpop.f32.mrf.mxu0
    %v600 = vadd.f32 %v475, %v599
    %601 = vmatprep.mubr.f32.mxu0 0.0
    %602 = vmatmul.mubr.f32.gmra.mxu0 %v411
    %v603 = vpop.f32.mrf.mxu0
    %v604 = vadd.f32 %v471, %v603
    %v605 = vpop.f32.mrf.mxu0
    %v606 = vadd.f32 %v475, %v605
    %607 = vmatprep.mubr.f32.mxu0 0.0
    %608 = vmatmul.mubr.f32.gmra.mxu0 %v412
    %v609 = vpop.f32.mrf.mxu0
    %v610 = vadd.f32 %v471, %v609
    %v611 = vpop.f32.mrf.mxu0
    %v612 = vadd.f32 %v475, %v611
    %613 = vmatprep.mubr.f32.mxu0 0.0
    %614 = vmatmul.mubr.f32.gmra.mxu0 %v413
    %v615 = vpop.f32.mrf.mxu0
    %v616 = vadd.f32 %v471, %v615
    %v617 = vpop.f32.mrf.mxu0
    %v618 = vadd.f32 %v475, %v617
    %619 = vmatprep.mubr.f32.mxu0 0.0
    %620 = vmatmul.mubr.f32.gmra.mxu0 %v414
    %v621 = vpop.f32.mrf.mxu0
    %v622 = vadd.f32 %v471, %v621
    %v623 = vpop.f32.mrf.mxu0
    %v624 = vadd.f32 %v475, %v623
    %625 = vmatprep.mubr.f32.mxu0 0.0
    %626 = vmatmul.mubr.f32.gmra.mxu0 %v415
    %v627 = vpop.f32.mrf.mxu0
    %v628 = vadd.f32 %v471, %v627
    %v629 = vpop.f32.mrf.mxu0
    %v630 = vadd.f32 %v475, %v629
    %631 = vmatprep.mubr.f32.mxu0 0.0
    %632 = vmatmul.mubr.f32.gmra.mxu0 %v416
    %v633 = vpop.f32.mrf.mxu0
    %v634 = vadd.f32 %v471, %v633
    %v635 = vpop.f32.mrf.mxu0
    %v636 = vadd.f32 %v475, %v635
    %637 = vmatprep.mubr.f32.mxu0 0.0
    %638 = vmatmul.mubr.f32.gmra.mxu0 %v417
    %v639 = vpop.f32.mrf.mxu0
    %v640 = vadd.f32 %v471, %v639
    %v641 = vpop.f32.mrf.mxu0
    %v642 = vadd.f32 %v475, %v641
    %643 = vdwg.mxu0
    %644 = vmatprep.subr.mxu0 0.0
    %645 = vmatpush1.msra.mxu0 %v465
    %646 = vmatprep.subr.mxu0 0.0
    %647 = vmatpush1.msra.mxu0 %v462
    %648 = vmatprep.subr.mxu0 0.0
    %649 = vmatpush1.msra.mxu0 %v459
    %650 = vmatprep.subr.mxu0 0.0
    %651 = vmatpush1.msra.mxu0 %v456
    %652 = vmatprep.subr.mxu0 0.0
    %653 = vmatpush1.msra.mxu0 %v453
    %654 = vmatprep.subr.mxu0 0.0
    %655 = vmatpush1.msra.mxu0 %v450
    %656 = vmatprep.subr.mxu0 0.0
    %657 = vmatpush1.msra.mxu0 %v447
    %658 = vmatprep.subr.mxu0 0.0
    %659 = vmatpush1.msra.mxu0 %v444
    %660 = vmatprep.subr.mxu0 0.0
    %661 = vmatpush1.msra.mxu0 %v441
    %662 = vmatprep.subr.mxu0 0.0
    %663 = vmatpush1.msra.mxu0 %v438
    %664 = vmatprep.subr.mxu0 0.0
    %665 = vmatpush1.msra.mxu0 %v435
    %666 = vmatprep.subr.mxu0 0.0
    %667 = vmatpush1.msra.mxu0 %v432
    %668 = vmatprep.subr.mxu0 0.0
    %669 = vmatpush1.msra.mxu0 %v429
    %670 = vmatprep.subr.mxu0 0.0
    %671 = vmatpush1.msra.mxu0 %v426
    %672 = vmatprep.subr.mxu0 0.0
    %673 = vmatpush1.msra.mxu0 %v423
    %674 = vmatprep.subr.mxu0 0.0
    %675 = vmatpush1.msra.mxu0 %v420
    %676 = vmatprep.subr.mxu0 0.0
    %677 = vmatpush2.msra.mxu0 0.0
    %678 = vmatprep.subr.mxu0 0.0
    %679 = vmatpush2.msra.mxu0 0.0
    %680 = vmatprep.subr.mxu0 0.0
    %681 = vmatpush2.msra.mxu0 0.0
    %682 = vmatprep.subr.mxu0 0.0
    %683 = vmatpush2.msra.mxu0 0.0
    %684 = vmatprep.subr.mxu0 0.0
    %685 = vmatpush2.msra.mxu0 0.0
    %686 = vmatprep.subr.mxu0 0.0
    %687 = vmatpush2.msra.mxu0 0.0
    %688 = vmatprep.subr.mxu0 0.0
    %689 = vmatpush2.msra.mxu0 0.0
    %690 = vmatprep.subr.mxu0 0.0
    %691 = vmatpush2.msra.mxu0 0.0
    %692 = vmatprep.subr.mxu0 0.0
    %693 = vmatpush2.msra.mxu0 0.0
    %694 = vmatprep.subr.mxu0 0.0
    %695 = vmatpush2.msra.mxu0 0.0
    %696 = vmatprep.subr.mxu0 0.0
    %697 = vmatpush2.msra.mxu0 0.0
    %698 = vmatprep.subr.mxu0 0.0
    %699 = vmatpush2.msra.mxu0 0.0
    %700 = vmatprep.subr.mxu0 0.0
    %701 = vmatpush2.msra.mxu0 0.0
    %702 = vmatprep.subr.mxu0 0.0
    %703 = vmatpush2.msra.mxu0 0.0
    %704 = vmatprep.subr.mxu0 0.0
    %705 = vmatpush2.msra.mxu0 0.0
    %706 = vmatprep.subr.mxu0 0.0
    %707 = vmatpush2.msra.mxu0 0.0
    %708 = vmatprep.mubr.f32.mxu0 0.0
    %709 = vmatmul.mubr.f32.gmra.mxu0 %v402
    %v710 = vpop.f32.mrf.mxu0
    %v711 = vadd.f32 %v479, %v710
    %v712 = vpop.f32.mrf.mxu0
    %713 = vmatprep.mubr.f32.mxu0 0.0
    %714 = vmatmul.mubr.f32.gmra.mxu0 %v403
    %v715 = vpop.f32.mrf.mxu0
    %v716 = vadd.f32 %v479, %v715
    %v717 = vpop.f32.mrf.mxu0
    %718 = vmatprep.mubr.f32.mxu0 0.0
    %719 = vmatmul.mubr.f32.gmra.mxu0 %v404
    %v720 = vpop.f32.mrf.mxu0
    %v721 = vadd.f32 %v479, %v720
    %v722 = vpop.f32.mrf.mxu0
    %723 = vmatprep.mubr.f32.mxu0 0.0
    %724 = vmatmul.mubr.f32.gmra.mxu0 %v405
    %v725 = vpop.f32.mrf.mxu0
    %v726 = vadd.f32 %v479, %v725
    %v727 = vpop.f32.mrf.mxu0
    %728 = vmatprep.mubr.f32.mxu0 0.0
    %729 = vmatmul.mubr.f32.gmra.mxu0 %v406
    %v730 = vpop.f32.mrf.mxu0
    %v731 = vadd.f32 %v479, %v730
    %v732 = vpop.f32.mrf.mxu0
    %733 = vmatprep.mubr.f32.mxu0 0.0
    %734 = vmatmul.mubr.f32.gmra.mxu0 %v407
    %v735 = vpop.f32.mrf.mxu0
    %v736 = vadd.f32 %v479, %v735
    %v737 = vpop.f32.mrf.mxu0
    %738 = vmatprep.mubr.f32.mxu0 0.0
    %739 = vmatmul.mubr.f32.gmra.mxu0 %v408
    %v740 = vpop.f32.mrf.mxu0
    %v741 = vadd.f32 %v479, %v740
    %v742 = vpop.f32.mrf.mxu0
    %743 = vmatprep.mubr.f32.mxu0 0.0
    %744 = vmatmul.mubr.f32.gmra.mxu0 %v409
    %v745 = vpop.f32.mrf.mxu0
    %v746 = vadd.f32 %v479, %v745
    %v747 = vpop.f32.mrf.mxu0
    %748 = vmatprep.mubr.f32.mxu0 0.0
    %749 = vmatmul.mubr.f32.gmra.mxu0 %v410
    %v750 = vpop.f32.mrf.mxu0
    %v751 = vadd.f32 %v479, %v750
    %v752 = vpop.f32.mrf.mxu0
    %753 = vmatprep.mubr.f32.mxu0 0.0
    %754 = vmatmul.mubr.f32.gmra.mxu0 %v411
    %v755 = vpop.f32.mrf.mxu0
    %v756 = vadd.f32 %v479, %v755
    %v757 = vpop.f32.mrf.mxu0
    %758 = vmatprep.mubr.f32.mxu0 0.0
    %759 = vmatmul.mubr.f32.gmra.mxu0 %v412
    %v760 = vpop.f32.mrf.mxu0
    %v761 = vadd.f32 %v479, %v760
    %v762 = vpop.f32.mrf.mxu0
    %763 = vmatprep.mubr.f32.mxu0 0.0
    %764 = vmatmul.mubr.f32.gmra.mxu0 %v413
    %v765 = vpop.f32.mrf.mxu0
    %v766 = vadd.f32 %v479, %v765
    %v767 = vpop.f32.mrf.mxu0
    %768 = vmatprep.mubr.f32.mxu0 0.0
    %769 = vmatmul.mubr.f32.gmra.mxu0 %v414
    %v770 = vpop.f32.mrf.mxu0
    %v771 = vadd.f32 %v479, %v770
    %v772 = vpop.f32.mrf.mxu0
    %773 = vmatprep.mubr.f32.mxu0 0.0
    %774 = vmatmul.mubr.f32.gmra.mxu0 %v415
    %v775 = vpop.f32.mrf.mxu0
    %v776 = vadd.f32 %v479, %v775
    %v777 = vpop.f32.mrf.mxu0
    %778 = vmatprep.mubr.f32.mxu0 0.0
    %779 = vmatmul.mubr.f32.gmra.mxu0 %v416
    %v780 = vpop.f32.mrf.mxu0
    %v781 = vadd.f32 %v479, %v780
    %v782 = vpop.f32.mrf.mxu0
    %783 = vmatprep.mubr.f32.mxu0 0.0
    %784 = vmatmul.mubr.f32.gmra.mxu0 %v417
    %v785 = vpop.f32.mrf.mxu0
    %v786 = vadd.f32 %v479, %v785
    %v787 = vpop.f32.mrf.mxu0
    %788 = vdwg.mxu0
    %789 = vst [vmem:[#allocation2] sm:$0xff] %v550
    %790 = vst [vmem:[#allocation2 + $0x8] sm:$0xff] %v552
    %791 = vst [vmem:[#allocation2 + $0x10] sm:$0xff] %v711
    %792 = vst [vmem:[#allocation2 + $0x18] sm:$0xff] %v556
    %793 = vst [vmem:[#allocation2 + $0x20] sm:$0xff] %v558
    %794 = vst [vmem:[#allocation2 + $0x28] sm:$0xff] %v716
    %795 = vst [vmem:[#allocation2 + $0x30] sm:$0xff] %v562
    %796 = vst [vmem:[#allocation2 + $0x38] sm:$0xff] %v564
    %797 = vst [vmem:[#allocation2 + $0x40] sm:$0xff] %v721
    %798 = vst [vmem:[#allocation2 + $0x48] sm:$0xff] %v568
    %799 = vst [vmem:[#allocation2 + $0x50] sm:$0xff] %v570
    %800 = vst [vmem:[#allocation2 + $0x58] sm:$0xff] %v726
    %801 = vst [vmem:[#allocation2 + $0x60] sm:$0xff] %v574
    %802 = vst [vmem:[#allocation2 + $0x68] sm:$0xff] %v576
    %803 = vst [vmem:[#allocation2 + $0x70] sm:$0xff] %v731
    %804 = vst [vmem:[#allocation2 + $0x78] sm:$0xff] %v580
    %805 = vst [vmem:[#allocation2 + $0x80] sm:$0xff] %v582
    %806 = vst [vmem:[#allocation2 + $0x88] sm:$0xff] %v736
    %807 = vst [vmem:[#allocation2 + $0x90] sm:$0xff] %v586
    %808 = vst [vmem:[#allocation2 + $0x98] sm:$0xff] %v588
    %809 = vst [vmem:[#allocation2 + $0xa0] sm:$0xff] %v741
    %810 = vst [vmem:[#allocation2 + $0xa8] sm:$0xff] %v592
    %811 = vst [vmem:[#allocation2 + $0xb0] sm:$0xff] %v594
    %812 = vst [vmem:[#allocation2 + $0xb8] sm:$0xff] %v746
    %813 = vst [vmem:[#allocation2 + $0xc0] sm:$0xff] %v598
    %814 = vst [vmem:[#allocation2 + $0xc8] sm:$0xff] %v600
    %815 = vst [vmem:[#allocation2 + $0xd0] sm:$0xff] %v751
    %816 = vst [vmem:[#allocation2 + $0xd8] sm:$0xff] %v604
    %817 = vst [vmem:[#allocation2 + $0xe0] sm:$0xff] %v606
    %818 = vst [vmem:[#allocation2 + $0xe8] sm:$0xff] %v756
    %819 = vst [vmem:[#allocation2 + $0xf0] sm:$0xff] %v610
    %820 = vst [vmem:[#allocation2 + $0xf8] sm:$0xff] %v612
    %821 = vst [vmem:[#allocation2 + $0x100] sm:$0xff] %v761
    %822 = vst [vmem:[#allocation2 + $0x108] sm:$0xff] %v616
    %823 = vst [vmem:[#allocation2 + $0x110] sm:$0xff] %v618
    %824 = vst [vmem:[#allocation2 + $0x118] sm:$0xff] %v766
    %825 = vst [vmem:[#allocation2 + $0x120] sm:$0xff] %v622
    %826 = vst [vmem:[#allocation2 + $0x128] sm:$0xff] %v624
    %827 = vst [vmem:[#allocation2 + $0x130] sm:$0xff] %v771
    %828 = vst [vmem:[#allocation2 + $0x138] sm:$0xff] %v628
    %829 = vst [vmem:[#allocation2 + $0x140] sm:$0xff] %v630
    %830 = vst [vmem:[#allocation2 + $0x148] sm:$0xff] %v776
    %831 = vst [vmem:[#allocation2 + $0x150] sm:$0xff] %v634
    %832 = vst [vmem:[#allocation2 + $0x158] sm:$0xff] %v636
    %833 = vst [vmem:[#allocation2 + $0x160] sm:$0xff] %v781
    %834 = vst [vmem:[#allocation2 + $0x168] sm:$0xff] %v640
    %835 = vst [vmem:[#allocation2 + $0x170] sm:$0xff] %v642
    %836 = vst [vmem:[#allocation2 + $0x178] sm:$0xff] %v786
    %s837 = scalar_lea.vmem [#allocation2], 360
    %v838 = vld [vmem:[%s837] sm:$0xff]
    %v839 = vld [vmem:[%s837 + $0x8] sm:$0xff]
    %v840 = vld [vmem:[%s837 + $0x10] sm:$0xff]
    %v841 = vld [vmem:[#allocation10] sm:$0xff]
    %v842 = vld [vmem:[#allocation10 + $0x8] sm:$0xff]
    %v843 = vld [vmem:[#allocation10 + $0x10] sm:$0xff]
    %v844 = vld [vmem:[#allocation10 + $0x18] sm:$0xff]
    %v845 = vld [vmem:[#allocation10 + $0x20] sm:$0xff]
    %v846 = vld [vmem:[#allocation10 + $0x28] sm:$0xff]
    %v847 = vld [vmem:[#allocation10 + $0x30] sm:$0xff]
    %v848 = vld [vmem:[#allocation10 + $0x38] sm:$0xff]
    %v849 = vld [vmem:[#allocation10 + $0x40] sm:$0xff]
    %v850 = vld [vmem:[#allocation10 + $0x48] sm:$0xff]
    %v851 = vld [vmem:[#allocation10 + $0x50] sm:$0xff]
    %v852 = vld [vmem:[#allocation10 + $0x58] sm:$0xff]
    %v853 = vld [vmem:[#allocation10 + $0x60] sm:$0xff]
    %v854 = vld [vmem:[#allocation10 + $0x68] sm:$0xff]
    %v855 = vld [vmem:[#allocation10 + $0x70] sm:$0xff]
    %v856 = vld [vmem:[#allocation10 + $0x78] sm:$0xff]
    %v857 = vld [vmem:[#allocation10 + $0x80] sm:$0xff]
    %v858 = vld [vmem:[#allocation10 + $0x88] sm:$0xff]
    %v859 = vld [vmem:[#allocation10 + $0x90] sm:$0xff]
    %v860 = vld [vmem:[#allocation10 + $0x98] sm:$0xff]
    %v861 = vld [vmem:[#allocation10 + $0xa0] sm:$0xff]
    %v862 = vld [vmem:[#allocation10 + $0xa8] sm:$0xff]
    %v863 = vld [vmem:[#allocation10 + $0xb0] sm:$0xff]
    %v864 = vld [vmem:[#allocation10 + $0xb8] sm:$0xff]
    %v865 = vld [vmem:[#allocation10 + $0xc0] sm:$0xff]
    %v866 = vld [vmem:[#allocation10 + $0xc8] sm:$0xff]
    %v867 = vld [vmem:[#allocation10 + $0xd0] sm:$0xff]
    %v868 = vld [vmem:[#allocation10 + $0xd8] sm:$0xff]
    %v869 = vld [vmem:[#allocation10 + $0xe0] sm:$0xff]
    %v870 = vld [vmem:[#allocation10 + $0xe8] sm:$0xff]
    %v871 = vld [vmem:[#allocation10 + $0xf0] sm:$0xff]
    %v872 = vld [vmem:[#allocation10 + $0xf8] sm:$0xff]
    %v873 = vld [vmem:[#allocation10 + $0x100] sm:$0xff]
    %v874 = vld [vmem:[#allocation10 + $0x108] sm:$0xff]
    %v875 = vld [vmem:[#allocation10 + $0x110] sm:$0xff]
    %v876 = vld [vmem:[#allocation10 + $0x118] sm:$0xff]
    %v877 = vld [vmem:[#allocation10 + $0x120] sm:$0xff]
    %v878 = vld [vmem:[#allocation10 + $0x128] sm:$0xff]
    %v879 = vld [vmem:[#allocation10 + $0x130] sm:$0xff]
    %v880 = vld [vmem:[#allocation10 + $0x138] sm:$0xff]
    %v881 = vld [vmem:[#allocation10 + $0x140] sm:$0xff]
    %v882 = vld [vmem:[#allocation10 + $0x148] sm:$0xff]
    %v883 = vld [vmem:[#allocation10 + $0x150] sm:$0xff]
    %v884 = vld [vmem:[#allocation10 + $0x158] sm:$0xff]
    %v885 = vld [vmem:[#allocation10 + $0x160] sm:$0xff]
    %v886 = vld [vmem:[#allocation10 + $0x168] sm:$0xff]
    %v887 = vld [vmem:[#allocation10 + $0x170] sm:$0xff]
    %v888 = vld [vmem:[#allocation10 + $0x178] sm:$0xff]
    %889 = vmatprep.subr.mxu0 %v887
    %890 = vmatpush1.msra.mxu0 %v886
    %891 = vmatprep.subr.mxu0 %v884
    %892 = vmatpush1.msra.mxu0 %v883
    %893 = vmatprep.subr.mxu0 %v881
    %894 = vmatpush1.msra.mxu0 %v880
    %895 = vmatprep.subr.mxu0 %v878
    %896 = vmatpush1.msra.mxu0 %v877
    %897 = vmatprep.subr.mxu0 %v875
    %898 = vmatpush1.msra.mxu0 %v874
    %899 = vmatprep.subr.mxu0 %v872
    %900 = vmatpush1.msra.mxu0 %v871
    %901 = vmatprep.subr.mxu0 %v869
    %902 = vmatpush1.msra.mxu0 %v868
    %903 = vmatprep.subr.mxu0 %v866
    %904 = vmatpush1.msra.mxu0 %v865
    %905 = vmatprep.subr.mxu0 %v863
    %906 = vmatpush1.msra.mxu0 %v862
    %907 = vmatprep.subr.mxu0 %v860
    %908 = vmatpush1.msra.mxu0 %v859
    %909 = vmatprep.subr.mxu0 %v857
    %910 = vmatpush1.msra.mxu0 %v856
    %911 = vmatprep.subr.mxu0 %v854
    %912 = vmatpush1.msra.mxu0 %v853
    %913 = vmatprep.subr.mxu0 %v851
    %914 = vmatpush1.msra.mxu0 %v850
    %915 = vmatprep.subr.mxu0 %v848
    %916 = vmatpush1.msra.mxu0 %v847
    %917 = vmatprep.subr.mxu0 %v845
    %918 = vmatpush1.msra.mxu0 %v844
    %919 = vmatprep.subr.mxu0 %v842
    %920 = vmatpush1.msra.mxu0 %v841
    %921 = vmatprep.subr.mxu0 0.0
    %922 = vmatpush2.msra.mxu0 0.0
    %923 = vmatprep.subr.mxu0 0.0
    %924 = vmatpush2.msra.mxu0 0.0
    %925 = vmatprep.subr.mxu0 0.0
    %926 = vmatpush2.msra.mxu0 0.0
    %927 = vmatprep.subr.mxu0 0.0
    %928 = vmatpush2.msra.mxu0 0.0
    %929 = vmatprep.subr.mxu0 0.0
    %930 = vmatpush2.msra.mxu0 0.0
    %931 = vmatprep.subr.mxu0 0.0
    %932 = vmatpush2.msra.mxu0 0.0
    %933 = vmatprep.subr.mxu0 0.0
    %934 = vmatpush2.msra.mxu0 0.0
    %935 = vmatprep.subr.mxu0 0.0
    %936 = vmatpush2.msra.mxu0 0.0
    %937 = vmatprep.subr.mxu0 0.0
    %938 = vmatpush2.msra.mxu0 0.0
    %939 = vmatprep.subr.mxu0 0.0
    %940 = vmatpush2.msra.mxu0 0.0
    %941 = vmatprep.subr.mxu0 0.0
    %942 = vmatpush2.msra.mxu0 0.0
    %943 = vmatprep.subr.mxu0 0.0
    %944 = vmatpush2.msra.mxu0 0.0
    %945 = vmatprep.subr.mxu0 0.0
    %946 = vmatpush2.msra.mxu0 0.0
    %947 = vmatprep.subr.mxu0 0.0
    %948 = vmatpush2.msra.mxu0 0.0
    %949 = vmatprep.subr.mxu0 0.0
    %950 = vmatpush2.msra.mxu0 0.0
    %951 = vmatprep.subr.mxu0 0.0
    %952 = vmatpush2.msra.mxu0 0.0
    %953 = vmatprep.mubr.f32.mxu0 0.0
    %954 = vmatmul.mubr.f32.gmra.mxu0 0.0
    %v955 = vpop.f32.mrf.mxu0
    %v956 = vadd.f32 0.0, %v955
    %v957 = vpop.f32.mrf.mxu0
    %v958 = vadd.f32 0.0, %v957
    %959 = vdwg.mxu0
    %960 = vmatprep.subr.mxu0 0.0
    %961 = vmatpush1.msra.mxu0 %v888
    %962 = vmatprep.subr.mxu0 0.0
    %963 = vmatpush1.msra.mxu0 %v885
    %964 = vmatprep.subr.mxu0 0.0
    %965 = vmatpush1.msra.mxu0 %v882
    %966 = vmatprep.subr.mxu0 0.0
    %967 = vmatpush1.msra.mxu0 %v879
    %968 = vmatprep.subr.mxu0 0.0
    %969 = vmatpush1.msra.mxu0 %v876
    %970 = vmatprep.subr.mxu0 0.0
    %971 = vmatpush1.msra.mxu0 %v873
    %972 = vmatprep.subr.mxu0 0.0
    %973 = vmatpush1.msra.mxu0 %v870
    %974 = vmatprep.subr.mxu0 0.0
    %975 = vmatpush1.msra.mxu0 %v867
    %976 = vmatprep.subr.mxu0 0.0
    %977 = vmatpush1.msra.mxu0 %v864
    %978 = vmatprep.subr.mxu0 0.0
    %979 = vmatpush1.msra.mxu0 %v861
    %980 = vmatprep.subr.mxu0 0.0
    %981 = vmatpush1.msra.mxu0 %v858
    %982 = vmatprep.subr.mxu0 0.0
    %983 = vmatpush1.msra.mxu0 %v855
    %984 = vmatprep.subr.mxu0 0.0
    %985 = vmatpush1.msra.mxu0 %v852
    %986 = vmatprep.subr.mxu0 0.0
    %987 = vmatpush1.msra.mxu0 %v849
    %988 = vmatprep.subr.mxu0 0.0
    %989 = vmatpush1.msra.mxu0 %v846
    %990 = vmatprep.subr.mxu0 0.0
    %991 = vmatpush1.msra.mxu0 %v843
    %992 = vmatprep.subr.mxu0 0.0
    %993 = vmatpush2.msra.mxu0 0.0
    %994 = vmatprep.subr.mxu0 0.0
    %995 = vmatpush2.msra.mxu0 0.0
    %996 = vmatprep.subr.mxu0 0.0
    %997 = vmatpush2.msra.mxu0 0.0
    %998 = vmatprep.subr.mxu0 0.0
    %999 = vmatpush2.msra.mxu0 0.0
    %1000 = vmatprep.subr.mxu0 0.0
    %1001 = vmatpush2.msra.mxu0 0.0
    %1002 = vmatprep.subr.mxu0 0.0
    %1003 = vmatpush2.msra.mxu0 0.0
    %1004 = vmatprep.subr.mxu0 0.0
    %1005 = vmatpush2.msra.mxu0 0.0
    %1006 = vmatprep.subr.mxu0 0.0
    %1007 = vmatpush2.msra.mxu0 0.0
    %1008 = vmatprep.subr.mxu0 0.0
    %1009 = vmatpush2.msra.mxu0 0.0
    %1010 = vmatprep.subr.mxu0 0.0
    %1011 = vmatpush2.msra.mxu0 0.0
    %1012 = vmatprep.subr.mxu0 0.0
    %1013 = vmatpush2.msra.mxu0 0.0
    %1014 = vmatprep.subr.mxu0 0.0
    %1015 = vmatpush2.msra.mxu0 0.0
    %1016 = vmatprep.subr.mxu0 0.0
    %1017 = vmatpush2.msra.mxu0 0.0
    %1018 = vmatprep.subr.mxu0 0.0
    %1019 = vmatpush2.msra.mxu0 0.0
    %1020 = vmatprep.subr.mxu0 0.0
    %1021 = vmatpush2.msra.mxu0 0.0
    %1022 = vmatprep.subr.mxu0 0.0
    %1023 = vmatpush2.msra.mxu0 0.0
    %1024 = vmatprep.mubr.f32.mxu0 0.0
    %1025 = vmatmul.mubr.f32.gmra.mxu0 0.0
    %v1026 = vpop.f32.mrf.mxu0
    %v1027 = vadd.f32 0.0, %v1026
    %v1028 = vpop.f32.mrf.mxu0
    %1029 = vdwg.mxu0
    %v1030 = vadd.f32 %v838, %v956
    %v1031 = vxor.u32 %v1030, 2147483648
    %v1032 = vmul.f32 %v1031, 1.442695
    %v1033 = vpow.pop %v1032
    %v1034 = vadd.f32 %v1033, 1.0
    %v1035 = vrcp.pop %v1034
    %v1036 = vmul.f32 1.0, %v1035
    %v1037 = vadd.f32 %v839, %v958
    %v1038 = vxor.u32 %v1037, 2147483648
    %v1039 = vmul.f32 %v1038, 1.442695
    %v1040 = vpow.pop %v1039
    %v1041 = vadd.f32 %v1040, 1.0
    %v1042 = vrcp.pop %v1041
    %v1043 = vmul.f32 1.0, %v1042
    %v1044 = vadd.f32 %v1027, %v368
    %v1045 = vmul.f32 %v1036, %v1044
    %v1046 = vadd.f32 %v840, %v1045
    %v1047 = vtanh.pop %v1046
    %v1048 = vsub.f32 1.0, %v1043
    %v1049 = vmul.f32 %v1048, %v1047
    %v1050 = vmul.f32 %v1043, 0.0
    %v1051 = vadd.f32 %v1049, %v1050
    %s1052 = scalar_lea.vmem [#allocation3], 120
    %1053 = vst [vmem:[%s1052] sm:$0xff] %v1051
    %s1054 = scalar_lea.vmem [#allocation2], 336
    %v1055 = vld [vmem:[%s1054] sm:$0xff]
    %v1056 = vld [vmem:[%s1054 + $0x8] sm:$0xff]
    %v1057 = vld [vmem:[%s1054 + $0x10] sm:$0xff]
    %v1058 = vld [vmem:[#allocation10] sm:$0xff]
    %v1059 = vld [vmem:[#allocation10 + $0x8] sm:$0xff]
    %v1060 = vld [vmem:[#allocation10 + $0x10] sm:$0xff]
    %v1061 = vld [vmem:[#allocation10 + $0x18] sm:$0xff]
    %v1062 = vld [vmem:[#allocation10 + $0x20] sm:$0xff]
    %v1063 = vld [vmem:[#allocation10 + $0x28] sm:$0xff]
    %v1064 = vld [vmem:[#allocation10 + $0x30] sm:$0xff]
    %v1065 = vld [vmem:[#allocation10 + $0x38] sm:$0xff]
    %v1066 = vld [vmem:[#allocation10 + $0x40] sm:$0xff]
    %v1067 = vld [vmem:[#allocation10 + $0x48] sm:$0xff]
    %v1068 = vld [vmem:[#allocation10 + $0x50] sm:$0xff]
    %v1069 = vld [vmem:[#allocation10 + $0x58] sm:$0xff]
    %v1070 = vld [vmem:[#allocation10 + $0x60] sm:$0xff]
    %v1071 = vld [vmem:[#allocation10 + $0x68] sm:$0xff]
    %v1072 = vld [vmem:[#allocation10 + $0x70] sm:$0xff]
    %v1073 = vld [vmem:[#allocation10 + $0x78] sm:$0xff]
    %v1074 = vld [vmem:[#allocation10 + $0x80] sm:$0xff]
    %v1075 = vld [vmem:[#allocation10 + $0x88] sm:$0xff]
    %v1076 = vld [vmem:[#allocation10 + $0x90] sm:$0xff]
    %v1077 = vld [vmem:[#allocation10 + $0x98] sm:$0xff]
    %v1078 = vld [vmem:[#allocation10 + $0xa0] sm:$0xff]
    %v1079 = vld [vmem:[#allocation10 + $0xa8] sm:$0xff]
    %v1080 = vld [vmem:[#allocation10 + $0xb0] sm:$0xff]
    %v1081 = vld [vmem:[#allocation10 + $0xb8] sm:$0xff]
    %v1082 = vld [vmem:[#allocation10 + $0xc0] sm:$0xff]
    %v1083 = vld [vmem:[#allocation10 + $0xc8] sm:$0xff]
    %v1084 = vld [vmem:[#allocation10 + $0xd0] sm:$0xff]
    %v1085 = vld [vmem:[#allocation10 + $0xd8] sm:$0xff]
    %v1086 = vld [vmem:[#allocation10 + $0xe0] sm:$0xff]
    %v1087 = vld [vmem:[#allocation10 + $0xe8] sm:$0xff]
    %v1088 = vld [vmem:[#allocation10 + $0xf0] sm:$0xff]
    %v1089 = vld [vmem:[#allocation10 + $0xf8] sm:$0xff]
    %v1090 = vld [vmem:[#allocation10 + $0x100] sm:$0xff]
    %v1091 = vld [vmem:[#allocation10 + $0x108] sm:$0xff]
    %v1092 = vld [vmem:[#allocation10 + $0x110] sm:$0xff]
    %v1093 = vld [vmem:[#allocation10 + $0x118] sm:$0xff]
    %v1094 = vld [vmem:[#allocation10 + $0x120] sm:$0xff]
    %v1095 = vld [vmem:[#allocation10 + $0x128] sm:$0xff]
    %v1096 = vld [vmem:[#allocation10 + $0x130] sm:$0xff]
    %v1097 = vld [vmem:[#allocation10 + $0x138] sm:$0xff]
    %v1098 = vld [vmem:[#allocation10 + $0x140] sm:$0xff]
    %v1099 = vld [vmem:[#allocation10 + $0x148] sm:$0xff]
    %v1100 = vld [vmem:[#allocation10 + $0x150] sm:$0xff]
    %v1101 = vld [vmem:[#allocation10 + $0x158] sm:$0xff]
    %v1102 = vld [vmem:[#allocation10 + $0x160] sm:$0xff]
    %v1103 = vld [vmem:[#allocation10 + $0x168] sm:$0xff]
    %v1104 = vld [vmem:[#allocation10 + $0x170] sm:$0xff]
    %v1105 = vld [vmem:[#allocation10 + $0x178] sm:$0xff]
    %1106 = vmatprep.subr.mxu0 %v1104
    %1107 = vmatpush1.msra.mxu0 %v1103
    %1108 = vmatprep.subr.mxu0 %v1101
    %1109 = vmatpush1.msra.mxu0 %v1100
    %1110 = vmatprep.subr.mxu0 %v1098
    %1111 = vmatpush1.msra.mxu0 %v1097
    %1112 = vmatprep.subr.mxu0 %v1095
    %1113 = vmatpush1.msra.mxu0 %v1094
    %1114 = vmatprep.subr.mxu0 %v1092
    %1115 = vmatpush1.msra.mxu0 %v1091
    %1116 = vmatprep.subr.mxu0 %v1089
    %1117 = vmatpush1.msra.mxu0 %v1088
    %1118 = vmatprep.subr.mxu0 %v1086
    %1119 = vmatpush1.msra.mxu0 %v1085
    %1120 = vmatprep.subr.mxu0 %v1083
    %1121 = vmatpush1.msra.mxu0 %v1082
    %1122 = vmatprep.subr.mxu0 %v1080
    %1123 = vmatpush1.msra.mxu0 %v1079
    %1124 = vmatprep.subr.mxu0 %v1077
    %1125 = vmatpush1.msra.mxu0 %v1076
    %1126 = vmatprep.subr.mxu0 %v1074
    %1127 = vmatpush1.msra.mxu0 %v1073
    %1128 = vmatprep.subr.mxu0 %v1071
    %1129 = vmatpush1.msra.mxu0 %v1070
    %1130 = vmatprep.subr.mxu0 %v1068
    %1131 = vmatpush1.msra.mxu0 %v1067
    %1132 = vmatprep.subr.mxu0 %v1065
    %1133 = vmatpush1.msra.mxu0 %v1064
    %1134 = vmatprep.subr.mxu0 %v1062
    %1135 = vmatpush1.msra.mxu0 %v1061
    %1136 = vmatprep.subr.mxu0 %v1059
    %1137 = vmatpush1.msra.mxu0 %v1058
    %1138 = vmatprep.subr.mxu0 0.0
    %1139 = vmatpush2.msra.mxu0 0.0
    %1140 = vmatprep.subr.mxu0 0.0
    %1141 = vmatpush2.msra.mxu0 0.0
    %1142 = vmatprep.subr.mxu0 0.0
    %1143 = vmatpush2.msra.mxu0 0.0
    %1144 = vmatprep.subr.mxu0 0.0
    %1145 = vmatpush2.msra.mxu0 0.0
    %1146 = vmatprep.subr.mxu0 0.0
    %1147 = vmatpush2.msra.mxu0 0.0
    %1148 = vmatprep.subr.mxu0 0.0
    %1149 = vmatpush2.msra.mxu0 0.0
    %1150 = vmatprep.subr.mxu0 0.0
    %1151 = vmatpush2.msra.mxu0 0.0
    %1152 = vmatprep.subr.mxu0 0.0
    %1153 = vmatpush2.msra.mxu0 0.0
    %1154 = vmatprep.subr.mxu0 0.0
    %1155 = vmatpush2.msra.mxu0 0.0
    %1156 = vmatprep.subr.mxu0 0.0
    %1157 = vmatpush2.msra.mxu0 0.0
    %1158 = vmatprep.subr.mxu0 0.0
    %1159 = vmatpush2.msra.mxu0 0.0
    %1160 = vmatprep.subr.mxu0 0.0
    %1161 = vmatpush2.msra.mxu0 0.0
    %1162 = vmatprep.subr.mxu0 0.0
    %1163 = vmatpush2.msra.mxu0 0.0
    %1164 = vmatprep.subr.mxu0 0.0
    %1165 = vmatpush2.msra.mxu0 0.0
    %1166 = vmatprep.subr.mxu0 0.0
    %1167 = vmatpush2.msra.mxu0 0.0
    %1168 = vmatprep.subr.mxu0 0.0
    %1169 = vmatpush2.msra.mxu0 0.0
    %1170 = vmatprep.mubr.f32.mxu0 0.0
    %1171 = vmatmul.mubr.f32.gmra.mxu0 %v1051
    %v1172 = vpop.f32.mrf.mxu0
    %v1173 = vadd.f32 0.0, %v1172
    %v1174 = vpop.f32.mrf.mxu0
    %v1175 = vadd.f32 0.0, %v1174
    %1176 = vdwg.mxu0
    %1177 = vmatprep.subr.mxu0 0.0
    %1178 = vmatpush1.msra.mxu0 %v1105
    %1179 = vmatprep.subr.mxu0 0.0
    %1180 = vmatpush1.msra.mxu0 %v1102
    %1181 = vmatprep.subr.mxu0 0.0
    %1182 = vmatpush1.msra.mxu0 %v1099
    %1183 = vmatprep.subr.mxu0 0.0
    %1184 = vmatpush1.msra.mxu0 %v1096
    %1185 = vmatprep.subr.mxu0 0.0
    %1186 = vmatpush1.msra.mxu0 %v1093
    %1187 = vmatprep.subr.mxu0 0.0
    %1188 = vmatpush1.msra.mxu0 %v1090
    %1189 = vmatprep.subr.mxu0 0.0
    %1190 = vmatpush1.msra.mxu0 %v1087
    %1191 = vmatprep.subr.mxu0 0.0
    %1192 = vmatpush1.msra.mxu0 %v1084
    %1193 = vmatprep.subr.mxu0 0.0
    %1194 = vmatpush1.msra.mxu0 %v1081
    %1195 = vmatprep.subr.mxu0 0.0
    %1196 = vmatpush1.msra.mxu0 %v1078
    %1197 = vmatprep.subr.mxu0 0.0
    %1198 = vmatpush1.msra.mxu0 %v1075
    %1199 = vmatprep.subr.mxu0 0.0
    %1200 = vmatpush1.msra.mxu0 %v1072
    %1201 = vmatprep.subr.mxu0 0.0
    %1202 = vmatpush1.msra.mxu0 %v1069
    %1203 = vmatprep.subr.mxu0 0.0
    %1204 = vmatpush1.msra.mxu0 %v1066
    %1205 = vmatprep.subr.mxu0 0.0
    %1206 = vmatpush1.msra.mxu0 %v1063
    %1207 = vmatprep.subr.mxu0 0.0
    %1208 = vmatpush1.msra.mxu0 %v1060
    %1209 = vmatprep.subr.mxu0 0.0
    %1210 = vmatpush2.msra.mxu0 0.0
    %1211 = vmatprep.subr.mxu0 0.0
    %1212 = vmatpush2.msra.mxu0 0.0
    %1213 = vmatprep.subr.mxu0 0.0
    %1214 = vmatpush2.msra.mxu0 0.0
    %1215 = vmatprep.subr.mxu0 0.0
    %1216 = vmatpush2.msra.mxu0 0.0
    %1217 = vmatprep.subr.mxu0 0.0
    %1218 = vmatpush2.msra.mxu0 0.0
    %1219 = vmatprep.subr.mxu0 0.0
    %1220 = vmatpush2.msra.mxu0 0.0
    %1221 = vmatprep.subr.mxu0 0.0
    %1222 = vmatpush2.msra.mxu0 0.0
    %1223 = vmatprep.subr.mxu0 0.0
    %1224 = vmatpush2.msra.mxu0 0.0
    %1225 = vmatprep.subr.mxu0 0.0
    %1226 = vmatpush2.msra.mxu0 0.0
    %1227 = vmatprep.subr.mxu0 0.0
    %1228 = vmatpush2.msra.mxu0 0.0
    %1229 = vmatprep.subr.mxu0 0.0
    %1230 = vmatpush2.msra.mxu0 0.0
    %1231 = vmatprep.subr.mxu0 0.0
    %1232 = vmatpush2.msra.mxu0 0.0
    %1233 = vmatprep.subr.mxu0 0.0
    %1234 = vmatpush2.msra.mxu0 0.0
    %1235 = vmatprep.subr.mxu0 0.0
    %1236 = vmatpush2.msra.mxu0 0.0
    %1237 = vmatprep.subr.mxu0 0.0
    %1238 = vmatpush2.msra.mxu0 0.0
    %1239 = vmatprep.subr.mxu0 0.0
    %1240 = vmatpush2.msra.mxu0 0.0
    %1241 = vmatprep.mubr.f32.mxu0 0.0
    %1242 = vmatmul.mubr.f32.gmra.mxu0 %v1051
    %v1243 = vpop.f32.mrf.mxu0
    %v1244 = vadd.f32 0.0, %v1243
    %v1245 = vpop.f32.mrf.mxu0
    %1246 = vdwg.mxu0
    %v1247 = vadd.f32 %v1055, %v1173
    %v1248 = vxor.u32 %v1247, 2147483648
    %v1249 = vmul.f32 %v1248, 1.442695
    %v1250 = vpow.pop %v1249
    %v1251 = vadd.f32 %v1250, 1.0
    %v1252 = vrcp.pop %v1251
    %v1253 = vmul.f32 1.0, %v1252
    %v1254 = vadd.f32 %v1056, %v1175
    %v1255 = vxor.u32 %v1254, 2147483648
    %v1256 = vmul.f32 %v1255, 1.442695
    %v1257 = vpow.pop %v1256
    %v1258 = vadd.f32 %v1257, 1.0
    %v1259 = vrcp.pop %v1258
    %v1260 = vmul.f32 1.0, %v1259
    %v1261 = vadd.f32 %v1244, %v368
    %v1262 = vmul.f32 %v1253, %v1261
    %v1263 = vadd.f32 %v1057, %v1262
    %v1264 = vtanh.pop %v1263
    %v1265 = vsub.f32 1.0, %v1260
    %v1266 = vmul.f32 %v1265, %v1264
    %v1267 = vmul.f32 %v1260, %v1051
    %v1268 = vadd.f32 %v1266, %v1267
    %s1269 = scalar_lea.vmem [#allocation3], 112
    %1270 = vst [vmem:[%s1269] sm:$0xff] %v1268
    %s1271 = scalar_lea.vmem [#allocation2], 312
    %v1272 = vld [vmem:[%s1271] sm:$0xff]
    %v1273 = vld [vmem:[%s1271 + $0x8] sm:$0xff]
    %v1274 = vld [vmem:[%s1271 + $0x10] sm:$0xff]
    %v1275 = vld [vmem:[#allocation10] sm:$0xff]
    %v1276 = vld [vmem:[#allocation10 + $0x8] sm:$0xff]
    %v1277 = vld [vmem:[#allocation10 + $0x10] sm:$0xff]
    %v1278 = vld [vmem:[#allocation10 + $0x18] sm:$0xff]
    %v1279 = vld [vmem:[#allocation10 + $0x20] sm:$0xff]
    %v1280 = vld [vmem:[#allocation10 + $0x28] sm:$0xff]
    %v1281 = vld [vmem:[#allocation10 + $0x30] sm:$0xff]
    %v1282 = vld [vmem:[#allocation10 + $0x38] sm:$0xff]
    %v1283 = vld [vmem:[#allocation10 + $0x40] sm:$0xff]
    %v1284 = vld [vmem:[#allocation10 + $0x48] sm:$0xff]
    %v1285 = vld [vmem:[#allocation10 + $0x50] sm:$0xff]
    %v1286 = vld [vmem:[#allocation10 + $0x58] sm:$0xff]
    %v1287 = vld [vmem:[#allocation10 + $0x60] sm:$0xff]
    %v1288 = vld [vmem:[#allocation10 + $0x68] sm:$0xff]
    %v1289 = vld [vmem:[#allocation10 + $0x70] sm:$0xff]
    %v1290 = vld [vmem:[#allocation10 + $0x78] sm:$0xff]
    %v1291 = vld [vmem:[#allocation10 + $0x80] sm:$0xff]
    %v1292 = vld [vmem:[#allocation10 + $0x88] sm:$0xff]
    %v1293 = vld [vmem:[#allocation10 + $0x90] sm:$0xff]
    %v1294 = vld [vmem:[#allocation10 + $0x98] sm:$0xff]
    %v1295 = vld [vmem:[#allocation10 + $0xa0] sm:$0xff]
    %v1296 = vld [vmem:[#allocation10 + $0xa8] sm:$0xff]
    %v1297 = vld [vmem:[#allocation10 + $0xb0] sm:$0xff]
    %v1298 = vld [vmem:[#allocation10 + $0xb8] sm:$0xff]
    %v1299 = vld [vmem:[#allocation10 + $0xc0] sm:$0xff]
    %v1300 = vld [vmem:[#allocation10 + $0xc8] sm:$0xff]
    %v1301 = vld [vmem:[#allocation10 + $0xd0] sm:$0xff]
    %v1302 = vld [vmem:[#allocation10 + $0xd8] sm:$0xff]
    %v1303 = vld [vmem:[#allocation10 + $0xe0] sm:$0xff]
    %v1304 = vld [vmem:[#allocation10 + $0xe8] sm:$0xff]
    %v1305 = vld [vmem:[#allocation10 + $0xf0] sm:$0xff]
    %v1306 = vld [vmem:[#allocation10 + $0xf8] sm:$0xff]
    %v1307 = vld [vmem:[#allocation10 + $0x100] sm:$0xff]
    %v1308 = vld [vmem:[#allocation10 + $0x108] sm:$0xff]
    %v1309 = vld [vmem:[#allocation10 + $0x110] sm:$0xff]
    %v1310 = vld [vmem:[#allocation10 + $0x118] sm:$0xff]
    %v1311 = vld [vmem:[#allocation10 + $0x120] sm:$0xff]
    %v1312 = vld [vmem:[#allocation10 + $0x128] sm:$0xff]
    %v1313 = vld [vmem:[#allocation10 + $0x130] sm:$0xff]
    %v1314 = vld [vmem:[#allocation10 + $0x138] sm:$0xff]
    %v1315 = vld [vmem:[#allocation10 + $0x140] sm:$0xff]
    %v1316 = vld [vmem:[#allocation10 + $0x148] sm:$0xff]
    %v1317 = vld [vmem:[#allocation10 + $0x150] sm:$0xff]
    %v1318 = vld [vmem:[#allocation10 + $0x158] sm:$0xff]
    %v1319 = vld [vmem:[#allocation10 + $0x160] sm:$0xff]
    %v1320 = vld [vmem:[#allocation10 + $0x168] sm:$0xff]
    %v1321 = vld [vmem:[#allocation10 + $0x170] sm:$0xff]
    %v1322 = vld [vmem:[#allocation10 + $0x178] sm:$0xff]
    %1323 = vmatprep.subr.mxu0 %v1321
    %1324 = vmatpush1.msra.mxu0 %v1320
    %1325 = vmatprep.subr.mxu0 %v1318
    %1326 = vmatpush1.msra.mxu0 %v1317
    %1327 = vmatprep.subr.mxu0 %v1315
    %1328 = vmatpush1.msra.mxu0 %v1314
    %1329 = vmatprep.subr.mxu0 %v1312
    %1330 = vmatpush1.msra.mxu0 %v1311
    %1331 = vmatprep.subr.mxu0 %v1309
    %1332 = vmatpush1.msra.mxu0 %v1308
    %1333 = vmatprep.subr.mxu0 %v1306
    %1334 = vmatpush1.msra.mxu0 %v1305
    %1335 = vmatprep.subr.mxu0 %v1303
    %1336 = vmatpush1.msra.mxu0 %v1302
    %1337 = vmatprep.subr.mxu0 %v1300
    %1338 = vmatpush1.msra.mxu0 %v1299
    %1339 = vmatprep.subr.mxu0 %v1297
    %1340 = vmatpush1.msra.mxu0 %v1296
    %1341 = vmatprep.subr.mxu0 %v1294
    %1342 = vmatpush1.msra.mxu0 %v1293
    %1343 = vmatprep.subr.mxu0 %v1291
    %1344 = vmatpush1.msra.mxu0 %v1290
    %1345 = vmatprep.subr.mxu0 %v1288
    %1346 = vmatpush1.msra.mxu0 %v1287
    %1347 = vmatprep.subr.mxu0 %v1285
    %1348 = vmatpush1.msra.mxu0 %v1284
    %1349 = vmatprep.subr.mxu0 %v1282
    %1350 = vmatpush1.msra.mxu0 %v1281
    %1351 = vmatprep.subr.mxu0 %v1279
    %1352 = vmatpush1.msra.mxu0 %v1278
    %1353 = vmatprep.subr.mxu0 %v1276
    %1354 = vmatpush1.msra.mxu0 %v1275
    %1355 = vmatprep.subr.mxu0 0.0
    %1356 = vmatpush2.msra.mxu0 0.0
    %1357 = vmatprep.subr.mxu0 0.0
    %1358 = vmatpush2.msra.mxu0 0.0
    %1359 = vmatprep.subr.mxu0 0.0
    %1360 = vmatpush2.msra.mxu0 0.0
    %1361 = vmatprep.subr.mxu0 0.0
    %1362 = vmatpush2.msra.mxu0 0.0
    %1363 = vmatprep.subr.mxu0 0.0
    %1364 = vmatpush2.msra.mxu0 0.0
    %1365 = vmatprep.subr.mxu0 0.0
    %1366 = vmatpush2.msra.mxu0 0.0
    %1367 = vmatprep.subr.mxu0 0.0
    %1368 = vmatpush2.msra.mxu0 0.0
    %1369 = vmatprep.subr.mxu0 0.0
    %1370 = vmatpush2.msra.mxu0 0.0
    %1371 = vmatprep.subr.mxu0 0.0
    %1372 = vmatpush2.msra.mxu0 0.0
    %1373 = vmatprep.subr.mxu0 0.0
    %1374 = vmatpush2.msra.mxu0 0.0
    %1375 = vmatprep.subr.mxu0 0.0
    %1376 = vmatpush2.msra.mxu0 0.0
    %1377 = vmatprep.subr.mxu0 0.0
    %1378 = vmatpush2.msra.mxu0 0.0
    %1379 = vmatprep.subr.mxu0 0.0
    %1380 = vmatpush2.msra.mxu0 0.0
    %1381 = vmatprep.subr.mxu0 0.0
    %1382 = vmatpush2.msra.mxu0 0.0
    %1383 = vmatprep.subr.mxu0 0.0
    %1384 = vmatpush2.msra.mxu0 0.0
    %1385 = vmatprep.subr.mxu0 0.0
    %1386 = vmatpush2.msra.mxu0 0.0
    %1387 = vmatprep.mubr.f32.mxu0 0.0
    %1388 = vmatmul.mubr.f32.gmra.mxu0 %v1268
    %v1389 = vpop.f32.mrf.mxu0
    %v1390 = vadd.f32 0.0, %v1389
    %v1391 = vpop.f32.mrf.mxu0
    %v1392 = vadd.f32 0.0, %v1391
    %1393 = vdwg.mxu0
    %1394 = vmatprep.subr.mxu0 0.0
    %1395 = vmatpush1.msra.mxu0 %v1322
    %1396 = vmatprep.subr.mxu0 0.0
    %1397 = vmatpush1.msra.mxu0 %v1319
    %1398 = vmatprep.subr.mxu0 0.0
    %1399 = vmatpush1.msra.mxu0 %v1316
    %1400 = vmatprep.subr.mxu0 0.0
    %1401 = vmatpush1.msra.mxu0 %v1313
    %1402 = vmatprep.subr.mxu0 0.0
    %1403 = vmatpush1.msra.mxu0 %v1310
    %1404 = vmatprep.subr.mxu0 0.0
    %1405 = vmatpush1.msra.mxu0 %v1307
    %1406 = vmatprep.subr.mxu0 0.0
    %1407 = vmatpush1.msra.mxu0 %v1304
    %1408 = vmatprep.subr.mxu0 0.0
    %1409 = vmatpush1.msra.mxu0 %v1301
    %1410 = vmatprep.subr.mxu0 0.0
    %1411 = vmatpush1.msra.mxu0 %v1298
    %1412 = vmatprep.subr.mxu0 0.0
    %1413 = vmatpush1.msra.mxu0 %v1295
    %1414 = vmatprep.subr.mxu0 0.0
    %1415 = vmatpush1.msra.mxu0 %v1292
    %1416 = vmatprep.subr.mxu0 0.0
    %1417 = vmatpush1.msra.mxu0 %v1289
    %1418 = vmatprep.subr.mxu0 0.0
    %1419 = vmatpush1.msra.mxu0 %v1286
    %1420 = vmatprep.subr.mxu0 0.0
    %1421 = vmatpush1.msra.mxu0 %v1283
    %1422 = vmatprep.subr.mxu0 0.0
    %1423 = vmatpush1.msra.mxu0 %v1280
    %1424 = vmatprep.subr.mxu0 0.0
    %1425 = vmatpush1.msra.mxu0 %v1277
    %1426 = vmatprep.subr.mxu0 0.0
    %1427 = vmatpush2.msra.mxu0 0.0
    %1428 = vmatprep.subr.mxu0 0.0
    %1429 = vmatpush2.msra.mxu0 0.0
    %1430 = vmatprep.subr.mxu0 0.0
    %1431 = vmatpush2.msra.mxu0 0.0
    %1432 = vmatprep.subr.mxu0 0.0
    %1433 = vmatpush2.msra.mxu0 0.0
    %1434 = vmatprep.subr.mxu0 0.0
    %1435 = vmatpush2.msra.mxu0 0.0
    %1436 = vmatprep.subr.mxu0 0.0
    %1437 = vmatpush2.msra.mxu0 0.0
    %1438 = vmatprep.subr.mxu0 0.0
    %1439 = vmatpush2.msra.mxu0 0.0
    %1440 = vmatprep.subr.mxu0 0.0
    %1441 = vmatpush2.msra.mxu0 0.0
    %1442 = vmatprep.subr.mxu0 0.0
    %1443 = vmatpush2.msra.mxu0 0.0
    %1444 = vmatprep.subr.mxu0 0.0
    %1445 = vmatpush2.msra.mxu0 0.0
    %1446 = vmatprep.subr.mxu0 0.0
    %1447 = vmatpush2.msra.mxu0 0.0
    %1448 = vmatprep.subr.mxu0 0.0
    %1449 = vmatpush2.msra.mxu0 0.0
    %1450 = vmatprep.subr.mxu0 0.0
    %1451 = vmatpush2.msra.mxu0 0.0
    %1452 = vmatprep.subr.mxu0 0.0
    %1453 = vmatpush2.msra.mxu0 0.0
    %1454 = vmatprep.subr.mxu0 0.0
    %1455 = vmatpush2.msra.mxu0 0.0
    %1456 = vmatprep.subr.mxu0 0.0
    %1457 = vmatpush2.msra.mxu0 0.0
    %1458 = vmatprep.mubr.f32.mxu0 0.0
    %1459 = vmatmul.mubr.f32.gmra.mxu0 %v1268
    %v1460 = vpop.f32.mrf.mxu0
    %v1461 = vadd.f32 0.0, %v1460
    %v1462 = vpop.f32.mrf.mxu0
    %1463 = vdwg.mxu0
    %v1464 = vadd.f32 %v1272, %v1390
    %v1465 = vxor.u32 %v1464, 2147483648
    %v1466 = vmul.f32 %v1465, 1.442695
    %v1467 = vpow.pop %v1466
    %v1468 = vadd.f32 %v1467, 1.0
    %v1469 = vrcp.pop %v1468
    %v1470 = vmul.f32 1.0, %v1469
    %v1471 = vadd.f32 %v1273, %v1392
    %v1472 = vxor.u32 %v1471, 2147483648
    %v1473 = vmul.f32 %v1472, 1.442695
    %v1474 = vpow.pop %v1473
    %v1475 = vadd.f32 %v1474, 1.0
    %v1476 = vrcp.pop %v1475
    %v1477 = vmul.f32 1.0, %v1476
    %v1478 = vadd.f32 %v1461, %v368
    %v1479 = vmul.f32 %v1470, %v1478
    %v1480 = vadd.f32 %v1274, %v1479
    %v1481 = vtanh.pop %v1480
    %v1482 = vsub.f32 1.0, %v1477
    %v1483 = vmul.f32 %v1482, %v1481
    %v1484 = vmul.f32 %v1477, %v1268
    %v1485 = vadd.f32 %v1483, %v1484
    %s1486 = scalar_lea.vmem [#allocation3], 104
    %1487 = vst [vmem:[%s1486] sm:$0xff] %v1485
    %s1488 = scalar_lea.vmem [#allocation2], 288
    %v1489 = vld [vmem:[%s1488] sm:$0xff]
    %v1490 = vld [vmem:[%s1488 + $0x8] sm:$0xff]
    %v1491 = vld [vmem:[%s1488 + $0x10] sm:$0xff]
    %v1492 = vld [vmem:[#allocation10] sm:$0xff]
    %v1493 = vld [vmem:[#allocation10 + $0x8] sm:$0xff]
    %v1494 = vld [vmem:[#allocation10 + $0x10] sm:$0xff]
    %v1495 = vld [vmem:[#allocation10 + $0x18] sm:$0xff]
    %v1496 = vld [vmem:[#allocation10 + $0x20] sm:$0xff]
    %v1497 = vld [vmem:[#allocation10 + $0x28] sm:$0xff]
    %v1498 = vld [vmem:[#allocation10 + $0x30] sm:$0xff]
    %v1499 = vld [vmem:[#allocation10 + $0x38] sm:$0xff]
    %v1500 = vld [vmem:[#allocation10 + $0x40] sm:$0xff]
    %v1501 = vld [vmem:[#allocation10 + $0x48] sm:$0xff]
    %v1502 = vld [vmem:[#allocation10 + $0x50] sm:$0xff]
    %v1503 = vld [vmem:[#allocation10 + $0x58] sm:$0xff]
    %v1504 = vld [vmem:[#allocation10 + $0x60] sm:$0xff]
    %v1505 = vld [vmem:[#allocation10 + $0x68] sm:$0xff]
    %v1506 = vld [vmem:[#allocation10 + $0x70] sm:$0xff]
    %v1507 = vld [vmem:[#allocation10 + $0x78] sm:$0xff]
    %v1508 = vld [vmem:[#allocation10 + $0x80] sm:$0xff]
    %v1509 = vld [vmem:[#allocation10 + $0x88] sm:$0xff]
    %v1510 = vld [vmem:[#allocation10 + $0x90] sm:$0xff]
    %v1511 = vld [vmem:[#allocation10 + $0x98] sm:$0xff]
    %v1512 = vld [vmem:[#allocation10 + $0xa0] sm:$0xff]
    %v1513 = vld [vmem:[#allocation10 + $0xa8] sm:$0xff]
    %v1514 = vld [vmem:[#allocation10 + $0xb0] sm:$0xff]
    %v1515 = vld [vmem:[#allocation10 + $0xb8] sm:$0xff]
    %v1516 = vld [vmem:[#allocation10 + $0xc0] sm:$0xff]
    %v1517 = vld [vmem:[#allocation10 + $0xc8] sm:$0xff]
    %v1518 = vld [vmem:[#allocation10 + $0xd0] sm:$0xff]
    %v1519 = vld [vmem:[#allocation10 + $0xd8] sm:$0xff]
    %v1520 = vld [vmem:[#allocation10 + $0xe0] sm:$0xff]
    %v1521 = vld [vmem:[#allocation10 + $0xe8] sm:$0xff]
    %v1522 = vld [vmem:[#allocation10 + $0xf0] sm:$0xff]
    %v1523 = vld [vmem:[#allocation10 + $0xf8] sm:$0xff]
    %v1524 = vld [vmem:[#allocation10 + $0x100] sm:$0xff]
    %v1525 = vld [vmem:[#allocation10 + $0x108] sm:$0xff]
    %v1526 = vld [vmem:[#allocation10 + $0x110] sm:$0xff]
    %v1527 = vld [vmem:[#allocation10 + $0x118] sm:$0xff]
    %v1528 = vld [vmem:[#allocation10 + $0x120] sm:$0xff]
    %v1529 = vld [vmem:[#allocation10 + $0x128] sm:$0xff]
    %v1530 = vld [vmem:[#allocation10 + $0x130] sm:$0xff]
    %v1531 = vld [vmem:[#allocation10 + $0x138] sm:$0xff]
    %v1532 = vld [vmem:[#allocation10 + $0x140] sm:$0xff]
    %v1533 = vld [vmem:[#allocation10 + $0x148] sm:$0xff]
    %v1534 = vld [vmem:[#allocation10 + $0x150] sm:$0xff]
    %v1535 = vld [vmem:[#allocation10 + $0x158] sm:$0xff]
    %v1536 = vld [vmem:[#allocation10 + $0x160] sm:$0xff]
    %v1537 = vld [vmem:[#allocation10 + $0x168] sm:$0xff]
    %v1538 = vld [vmem:[#allocation10 + $0x170] sm:$0xff]
    %v1539 = vld [vmem:[#allocation10 + $0x178] sm:$0xff]
    %1540 = vmatprep.subr.mxu0 %v1538
    %1541 = vmatpush1.msra.mxu0 %v1537
    %1542 = vmatprep.subr.mxu0 %v1535
    %1543 = vmatpush1.msra.mxu0 %v1534
    %1544 = vmatprep.subr.mxu0 %v1532
    %1545 = vmatpush1.msra.mxu0 %v1531
    %1546 = vmatprep.subr.mxu0 %v1529
    %1547 = vmatpush1.msra.mxu0 %v1528
    %1548 = vmatprep.subr.mxu0 %v1526
    %1549 = vmatpush1.msra.mxu0 %v1525
    %1550 = vmatprep.subr.mxu0 %v1523
    %1551 = vmatpush1.msra.mxu0 %v1522
    %1552 = vmatprep.subr.mxu0 %v1520
    %1553 = vmatpush1.msra.mxu0 %v1519
    %1554 = vmatprep.subr.mxu0 %v1517
    %1555 = vmatpush1.msra.mxu0 %v1516
    %1556 = vmatprep.subr.mxu0 %v1514
    %1557 = vmatpush1.msra.mxu0 %v1513
    %1558 = vmatprep.subr.mxu0 %v1511
    %1559 = vmatpush1.msra.mxu0 %v1510
    %1560 = vmatprep.subr.mxu0 %v1508
    %1561 = vmatpush1.msra.mxu0 %v1507
    %1562 = vmatprep.subr.mxu0 %v1505
    %1563 = vmatpush1.msra.mxu0 %v1504
    %1564 = vmatprep.subr.mxu0 %v1502
    %1565 = vmatpush1.msra.mxu0 %v1501
    %1566 = vmatprep.subr.mxu0 %v1499
    %1567 = vmatpush1.msra.mxu0 %v1498
    %1568 = vmatprep.subr.mxu0 %v1496
    %1569 = vmatpush1.msra.mxu0 %v1495
    %1570 = vmatprep.subr.mxu0 %v1493
    %1571 = vmatpush1.msra.mxu0 %v1492
    %1572 = vmatprep.subr.mxu0 0.0
    %1573 = vmatpush2.msra.mxu0 0.0
    %1574 = vmatprep.subr.mxu0 0.0
    %1575 = vmatpush2.msra.mxu0 0.0
    %1576 = vmatprep.subr.mxu0 0.0
    %1577 = vmatpush2.msra.mxu0 0.0
    %1578 = vmatprep.subr.mxu0 0.0
    %1579 = vmatpush2.msra.mxu0 0.0
    %1580 = vmatprep.subr.mxu0 0.0
    %1581 = vmatpush2.msra.mxu0 0.0
    %1582 = vmatprep.subr.mxu0 0.0
    %1583 = vmatpush2.msra.mxu0 0.0
    %1584 = vmatprep.subr.mxu0 0.0
    %1585 = vmatpush2.msra.mxu0 0.0
    %1586 = vmatprep.subr.mxu0 0.0
    %1587 = vmatpush2.msra.mxu0 0.0
    %1588 = vmatprep.subr.mxu0 0.0
    %1589 = vmatpush2.msra.mxu0 0.0
    %1590 = vmatprep.subr.mxu0 0.0
    %1591 = vmatpush2.msra.mxu0 0.0
    %1592 = vmatprep.subr.mxu0 0.0
    %1593 = vmatpush2.msra.mxu0 0.0
    %1594 = vmatprep.subr.mxu0 0.0
    %1595 = vmatpush2.msra.mxu0 0.0
    %1596 = vmatprep.subr.mxu0 0.0
    %1597 = vmatpush2.msra.mxu0 0.0
    %1598 = vmatprep.subr.mxu0 0.0
    %1599 = vmatpush2.msra.mxu0 0.0
    %1600 = vmatprep.subr.mxu0 0.0
    %1601 = vmatpush2.msra.mxu0 0.0
    %1602 = vmatprep.subr.mxu0 0.0
    %1603 = vmatpush2.msra.mxu0 0.0
    %1604 = vmatprep.mubr.f32.mxu0 0.0
    %1605 = vmatmul.mubr.f32.gmra.mxu0 %v1485
    %v1606 = vpop.f32.mrf.mxu0
    %v1607 = vadd.f32 0.0, %v1606
    %v1608 = vpop.f32.mrf.mxu0
    %v1609 = vadd.f32 0.0, %v1608
    %1610 = vdwg.mxu0
    %1611 = vmatprep.subr.mxu0 0.0
    %1612 = vmatpush1.msra.mxu0 %v1539
    %1613 = vmatprep.subr.mxu0 0.0
    %1614 = vmatpush1.msra.mxu0 %v1536
    %1615 = vmatprep.subr.mxu0 0.0
    %1616 = vmatpush1.msra.mxu0 %v1533
    %1617 = vmatprep.subr.mxu0 0.0
    %1618 = vmatpush1.msra.mxu0 %v1530
    %1619 = vmatprep.subr.mxu0 0.0
    %1620 = vmatpush1.msra.mxu0 %v1527
    %1621 = vmatprep.subr.mxu0 0.0
    %1622 = vmatpush1.msra.mxu0 %v1524
    %1623 = vmatprep.subr.mxu0 0.0
    %1624 = vmatpush1.msra.mxu0 %v1521
    %1625 = vmatprep.subr.mxu0 0.0
    %1626 = vmatpush1.msra.mxu0 %v1518
    %1627 = vmatprep.subr.mxu0 0.0
    %1628 = vmatpush1.msra.mxu0 %v1515
    %1629 = vmatprep.subr.mxu0 0.0
    %1630 = vmatpush1.msra.mxu0 %v1512
    %1631 = vmatprep.subr.mxu0 0.0
    %1632 = vmatpush1.msra.mxu0 %v1509
    %1633 = vmatprep.subr.mxu0 0.0
    %1634 = vmatpush1.msra.mxu0 %v1506
    %1635 = vmatprep.subr.mxu0 0.0
    %1636 = vmatpush1.msra.mxu0 %v1503
    %1637 = vmatprep.subr.mxu0 0.0
    %1638 = vmatpush1.msra.mxu0 %v1500
    %1639 = vmatprep.subr.mxu0 0.0
    %1640 = vmatpush1.msra.mxu0 %v1497
    %1641 = vmatprep.subr.mxu0 0.0
    %1642 = vmatpush1.msra.mxu0 %v1494
    %1643 = vmatprep.subr.mxu0 0.0
    %1644 = vmatpush2.msra.mxu0 0.0
    %1645 = vmatprep.subr.mxu0 0.0
    %1646 = vmatpush2.msra.mxu0 0.0
    %1647 = vmatprep.subr.mxu0 0.0
    %1648 = vmatpush2.msra.mxu0 0.0
    %1649 = vmatprep.subr.mxu0 0.0
    %1650 = vmatpush2.msra.mxu0 0.0
    %1651 = vmatprep.subr.mxu0 0.0
    %1652 = vmatpush2.msra.mxu0 0.0
    %1653 = vmatprep.subr.mxu0 0.0
    %1654 = vmatpush2.msra.mxu0 0.0
    %1655 = vmatprep.subr.mxu0 0.0
    %1656 = vmatpush2.msra.mxu0 0.0
    %1657 = vmatprep.subr.mxu0 0.0
    %1658 = vmatpush2.msra.mxu0 0.0
    %1659 = vmatprep.subr.mxu0 0.0
    %1660 = vmatpush2.msra.mxu0 0.0
    %1661 = vmatprep.subr.mxu0 0.0
    %1662 = vmatpush2.msra.mxu0 0.0
    %1663 = vmatprep.subr.mxu0 0.0
    %1664 = vmatpush2.msra.mxu0 0.0
    %1665 = vmatprep.subr.mxu0 0.0
    %1666 = vmatpush2.msra.mxu0 0.0
    %1667 = vmatprep.subr.mxu0 0.0
    %1668 = vmatpush2.msra.mxu0 0.0
    %1669 = vmatprep.subr.mxu0 0.0
    %1670 = vmatpush2.msra.mxu0 0.0
    %1671 = vmatprep.subr.mxu0 0.0
    %1672 = vmatpush2.msra.mxu0 0.0
    %1673 = vmatprep.subr.mxu0 0.0
    %1674 = vmatpush2.msra.mxu0 0.0
    %1675 = vmatprep.mubr.f32.mxu0 0.0
    %1676 = vmatmul.mubr.f32.gmra.mxu0 %v1485
    %v1677 = vpop.f32.mrf.mxu0
    %v1678 = vadd.f32 0.0, %v1677
    %v1679 = vpop.f32.mrf.mxu0
    %1680 = vdwg.mxu0
    %v1681 = vadd.f32 %v1489, %v1607
    %v1682 = vxor.u32 %v1681, 2147483648
    %v1683 = vmul.f32 %v1682, 1.442695
    %v1684 = vpow.pop %v1683
    %v1685 = vadd.f32 %v1684, 1.0
    %v1686 = vrcp.pop %v1685
    %v1687 = vmul.f32 1.0, %v1686
    %v1688 = vadd.f32 %v1490, %v1609
    %v1689 = vxor.u32 %v1688, 2147483648
    %v1690 = vmul.f32 %v1689, 1.442695
    %v1691 = vpow.pop %v1690
    %v1692 = vadd.f32 %v1691, 1.0
    %v1693 = vrcp.pop %v1692
    %v1694 = vmul.f32 1.0, %v1693
    %v1695 = vadd.f32 %v1678, %v368
    %v1696 = vmul.f32 %v1687, %v1695
    %v1697 = vadd.f32 %v1491, %v1696
    %v1698 = vtanh.pop %v1697
    %v1699 = vsub.f32 1.0, %v1694
    %v1700 = vmul.f32 %v1699, %v1698
    %v1701 = vmul.f32 %v1694, %v1485
    %v1702 = vadd.f32 %v1700, %v1701
    %s1703 = scalar_lea.vmem [#allocation3], 96
    %1704 = vst [vmem:[%s1703] sm:$0xff] %v1702
    %s1705 = scalar_lea.vmem [#allocation2], 264
    %v1706 = vld [vmem:[%s1705] sm:$0xff]
    %v1707 = vld [vmem:[%s1705 + $0x8] sm:$0xff]
    %v1708 = vld [vmem:[%s1705 + $0x10] sm:$0xff]
    %v1709 = vld [vmem:[#allocation10] sm:$0xff]
    %v1710 = vld [vmem:[#allocation10 + $0x8] sm:$0xff]
    %v1711 = vld [vmem:[#allocation10 + $0x10] sm:$0xff]
    %v1712 = vld [vmem:[#allocation10 + $0x18] sm:$0xff]
    %v1713 = vld [vmem:[#allocation10 + $0x20] sm:$0xff]
    %v1714 = vld [vmem:[#allocation10 + $0x28] sm:$0xff]
    %v1715 = vld [vmem:[#allocation10 + $0x30] sm:$0xff]
    %v1716 = vld [vmem:[#allocation10 + $0x38] sm:$0xff]
    %v1717 = vld [vmem:[#allocation10 + $0x40] sm:$0xff]
    %v1718 = vld [vmem:[#allocation10 + $0x48] sm:$0xff]
    %v1719 = vld [vmem:[#allocation10 + $0x50] sm:$0xff]
    %v1720 = vld [vmem:[#allocation10 + $0x58] sm:$0xff]
    %v1721 = vld [vmem:[#allocation10 + $0x60] sm:$0xff]
    %v1722 = vld [vmem:[#allocation10 + $0x68] sm:$0xff]
    %v1723 = vld [vmem:[#allocation10 + $0x70] sm:$0xff]
    %v1724 = vld [vmem:[#allocation10 + $0x78] sm:$0xff]
    %v1725 = vld [vmem:[#allocation10 + $0x80] sm:$0xff]
    %v1726 = vld [vmem:[#allocation10 + $0x88] sm:$0xff]
    %v1727 = vld [vmem:[#allocation10 + $0x90] sm:$0xff]
    %v1728 = vld [vmem:[#allocation10 + $0x98] sm:$0xff]
    %v1729 = vld [vmem:[#allocation10 + $0xa0] sm:$0xff]
    %v1730 = vld [vmem:[#allocation10 + $0xa8] sm:$0xff]
    %v1731 = vld [vmem:[#allocation10 + $0xb0] sm:$0xff]
    %v1732 = vld [vmem:[#allocation10 + $0xb8] sm:$0xff]
    %v1733 = vld [vmem:[#allocation10 + $0xc0] sm:$0xff]
    %v1734 = vld [vmem:[#allocation10 + $0xc8] sm:$0xff]
    %v1735 = vld [vmem:[#allocation10 + $0xd0] sm:$0xff]
    %v1736 = vld [vmem:[#allocation10 + $0xd8] sm:$0xff]
    %v1737 = vld [vmem:[#allocation10 + $0xe0] sm:$0xff]
    %v1738 = vld [vmem:[#allocation10 + $0xe8] sm:$0xff]
    %v1739 = vld [vmem:[#allocation10 + $0xf0] sm:$0xff]
    %v1740 = vld [vmem:[#allocation10 + $0xf8] sm:$0xff]
    %v1741 = vld [vmem:[#allocation10 + $0x100] sm:$0xff]
    %v1742 = vld [vmem:[#allocation10 + $0x108] sm:$0xff]
    %v1743 = vld [vmem:[#allocation10 + $0x110] sm:$0xff]
    %v1744 = vld [vmem:[#allocation10 + $0x118] sm:$0xff]
    %v1745 = vld [vmem:[#allocation10 + $0x120] sm:$0xff]
    %v1746 = vld [vmem:[#allocation10 + $0x128] sm:$0xff]
    %v1747 = vld [vmem:[#allocation10 + $0x130] sm:$0xff]
    %v1748 = vld [vmem:[#allocation10 + $0x138] sm:$0xff]
    %v1749 = vld [vmem:[#allocation10 + $0x140] sm:$0xff]
    %v1750 = vld [vmem:[#allocation10 + $0x148] sm:$0xff]
    %v1751 = vld [vmem:[#allocation10 + $0x150] sm:$0xff]
    %v1752 = vld [vmem:[#allocation10 + $0x158] sm:$0xff]
    %v1753 = vld [vmem:[#allocation10 + $0x160] sm:$0xff]
    %v1754 = vld [vmem:[#allocation10 + $0x168] sm:$0xff]
    %v1755 = vld [vmem:[#allocation10 + $0x170] sm:$0xff]
    %v1756 = vld [vmem:[#allocation10 + $0x178] sm:$0xff]
    %1757 = vmatprep.subr.mxu0 %v1755
    %1758 = vmatpush1.msra.mxu0 %v1754
    %1759 = vmatprep.subr.mxu0 %v1752
    %1760 = vmatpush1.msra.mxu0 %v1751
    %1761 = vmatprep.subr.mxu0 %v1749
    %1762 = vmatpush1.msra.mxu0 %v1748
    %1763 = vmatprep.subr.mxu0 %v1746
    %1764 = vmatpush1.msra.mxu0 %v1745
    %1765 = vmatprep.subr.mxu0 %v1743
    %1766 = vmatpush1.msra.mxu0 %v1742
    %1767 = vmatprep.subr.mxu0 %v1740
    %1768 = vmatpush1.msra.mxu0 %v1739
    %1769 = vmatprep.subr.mxu0 %v1737
    %1770 = vmatpush1.msra.mxu0 %v1736
    %1771 = vmatprep.subr.mxu0 %v1734
    %1772 = vmatpush1.msra.mxu0 %v1733
    %1773 = vmatprep.subr.mxu0 %v1731
    %1774 = vmatpush1.msra.mxu0 %v1730
    %1775 = vmatprep.subr.mxu0 %v1728
    %1776 = vmatpush1.msra.mxu0 %v1727
    %1777 = vmatprep.subr.mxu0 %v1725
    %1778 = vmatpush1.msra.mxu0 %v1724
    %1779 = vmatprep.subr.mxu0 %v1722
    %1780 = vmatpush1.msra.mxu0 %v1721
    %1781 = vmatprep.subr.mxu0 %v1719
    %1782 = vmatpush1.msra.mxu0 %v1718
    %1783 = vmatprep.subr.mxu0 %v1716
    %1784 = vmatpush1.msra.mxu0 %v1715
    %1785 = vmatprep.subr.mxu0 %v1713
    %1786 = vmatpush1.msra.mxu0 %v1712
    %1787 = vmatprep.subr.mxu0 %v1710
    %1788 = vmatpush1.msra.mxu0 %v1709
    %1789 = vmatprep.subr.mxu0 0.0
    %1790 = vmatpush2.msra.mxu0 0.0
    %1791 = vmatprep.subr.mxu0 0.0
    %1792 = vmatpush2.msra.mxu0 0.0
    %1793 = vmatprep.subr.mxu0 0.0
    %1794 = vmatpush2.msra.mxu0 0.0
    %1795 = vmatprep.subr.mxu0 0.0
    %1796 = vmatpush2.msra.mxu0 0.0
    %1797 = vmatprep.subr.mxu0 0.0
    %1798 = vmatpush2.msra.mxu0 0.0
    %1799 = vmatprep.subr.mxu0 0.0
    %1800 = vmatpush2.msra.mxu0 0.0
    %1801 = vmatprep.subr.mxu0 0.0
    %1802 = vmatpush2.msra.mxu0 0.0
    %1803 = vmatprep.subr.mxu0 0.0
    %1804 = vmatpush2.msra.mxu0 0.0
    %1805 = vmatprep.subr.mxu0 0.0
    %1806 = vmatpush2.msra.mxu0 0.0
    %1807 = vmatprep.subr.mxu0 0.0
    %1808 = vmatpush2.msra.mxu0 0.0
    %1809 = vmatprep.subr.mxu0 0.0
    %1810 = vmatpush2.msra.mxu0 0.0
    %1811 = vmatprep.subr.mxu0 0.0
    %1812 = vmatpush2.msra.mxu0 0.0
    %1813 = vmatprep.subr.mxu0 0.0
    %1814 = vmatpush2.msra.mxu0 0.0
    %1815 = vmatprep.subr.mxu0 0.0
    %1816 = vmatpush2.msra.mxu0 0.0
    %1817 = vmatprep.subr.mxu0 0.0
    %1818 = vmatpush2.msra.mxu0 0.0
    %1819 = vmatprep.subr.mxu0 0.0
    %1820 = vmatpush2.msra.mxu0 0.0
    %1821 = vmatprep.mubr.f32.mxu0 0.0
    %1822 = vmatmul.mubr.f32.gmra.mxu0 %v1702
    %v1823 = vpop.f32.mrf.mxu0
    %v1824 = vadd.f32 0.0, %v1823
    %v1825 = vpop.f32.mrf.mxu0
    %v1826 = vadd.f32 0.0, %v1825
    %1827 = vdwg.mxu0
    %1828 = vmatprep.subr.mxu0 0.0
    %1829 = vmatpush1.msra.mxu0 %v1756
    %1830 = vmatprep.subr.mxu0 0.0
    %1831 = vmatpush1.msra.mxu0 %v1753
    %1832 = vmatprep.subr.mxu0 0.0
    %1833 = vmatpush1.msra.mxu0 %v1750
    %1834 = vmatprep.subr.mxu0 0.0
    %1835 = vmatpush1.msra.mxu0 %v1747
    %1836 = vmatprep.subr.mxu0 0.0
    %1837 = vmatpush1.msra.mxu0 %v1744
    %1838 = vmatprep.subr.mxu0 0.0
    %1839 = vmatpush1.msra.mxu0 %v1741
    %1840 = vmatprep.subr.mxu0 0.0
    %1841 = vmatpush1.msra.mxu0 %v1738
    %1842 = vmatprep.subr.mxu0 0.0
    %1843 = vmatpush1.msra.mxu0 %v1735
    %1844 = vmatprep.subr.mxu0 0.0
    %1845 = vmatpush1.msra.mxu0 %v1732
    %1846 = vmatprep.subr.mxu0 0.0
    %1847 = vmatpush1.msra.mxu0 %v1729
    %1848 = vmatprep.subr.mxu0 0.0
    %1849 = vmatpush1.msra.mxu0 %v1726
    %1850 = vmatprep.subr.mxu0 0.0
    %1851 = vmatpush1.msra.mxu0 %v1723
    %1852 = vmatprep.subr.mxu0 0.0
    %1853 = vmatpush1.msra.mxu0 %v1720
    %1854 = vmatprep.subr.mxu0 0.0
    %1855 = vmatpush1.msra.mxu0 %v1717
    %1856 = vmatprep.subr.mxu0 0.0
    %1857 = vmatpush1.msra.mxu0 %v1714
    %1858 = vmatprep.subr.mxu0 0.0
    %1859 = vmatpush1.msra.mxu0 %v1711
    %1860 = vmatprep.subr.mxu0 0.0
    %1861 = vmatpush2.msra.mxu0 0.0
    %1862 = vmatprep.subr.mxu0 0.0
    %1863 = vmatpush2.msra.mxu0 0.0
    %1864 = vmatprep.subr.mxu0 0.0
    %1865 = vmatpush2.msra.mxu0 0.0
    %1866 = vmatprep.subr.mxu0 0.0
    %1867 = vmatpush2.msra.mxu0 0.0
    %1868 = vmatprep.subr.mxu0 0.0
    %1869 = vmatpush2.msra.mxu0 0.0
    %1870 = vmatprep.subr.mxu0 0.0
    %1871 = vmatpush2.msra.mxu0 0.0
    %1872 = vmatprep.subr.mxu0 0.0
    %1873 = vmatpush2.msra.mxu0 0.0
    %1874 = vmatprep.subr.mxu0 0.0
    %1875 = vmatpush2.msra.mxu0 0.0
    %1876 = vmatprep.subr.mxu0 0.0
    %1877 = vmatpush2.msra.mxu0 0.0
    %1878 = vmatprep.subr.mxu0 0.0
    %1879 = vmatpush2.msra.mxu0 0.0
    %1880 = vmatprep.subr.mxu0 0.0
    %1881 = vmatpush2.msra.mxu0 0.0
    %1882 = vmatprep.subr.mxu0 0.0
    %1883 = vmatpush2.msra.mxu0 0.0
    %1884 = vmatprep.subr.mxu0 0.0
    %1885 = vmatpush2.msra.mxu0 0.0
    %1886 = vmatprep.subr.mxu0 0.0
    %1887 = vmatpush2.msra.mxu0 0.0
    %1888 = vmatprep.subr.mxu0 0.0
    %1889 = vmatpush2.msra.mxu0 0.0
    %1890 = vmatprep.subr.mxu0 0.0
    %1891 = vmatpush2.msra.mxu0 0.0
    %1892 = vmatprep.mubr.f32.mxu0 0.0
    %1893 = vmatmul.mubr.f32.gmra.mxu0 %v1702
    %v1894 = vpop.f32.mrf.mxu0
    %v1895 = vadd.f32 0.0, %v1894
    %v1896 = vpop.f32.mrf.mxu0
    %1897 = vdwg.mxu0
    %v1898 = vadd.f32 %v1706, %v1824
    %v1899 = vxor.u32 %v1898, 2147483648
    %v1900 = vmul.f32 %v1899, 1.442695
    %v1901 = vpow.pop %v1900
    %v1902 = vadd.f32 %v1901, 1.0
    %v1903 = vrcp.pop %v1902
    %v1904 = vmul.f32 1.0, %v1903
    %v1905 = vadd.f32 %v1707, %v1826
    %v1906 = vxor.u32 %v1905, 2147483648
    %v1907 = vmul.f32 %v1906, 1.442695
    %v1908 = vpow.pop %v1907
    %v1909 = vadd.f32 %v1908, 1.0
    %v1910 = vrcp.pop %v1909
    %v1911 = vmul.f32 1.0, %v1910
    %v1912 = vadd.f32 %v1895, %v368
    %v1913 = vmul.f32 %v1904, %v1912
    %v1914 = vadd.f32 %v1708, %v1913
    %v1915 = vtanh.pop %v1914
    %v1916 = vsub.f32 1.0, %v1911
    %v1917 = vmul.f32 %v1916, %v1915
    %v1918 = vmul.f32 %v1911, %v1702
    %v1919 = vadd.f32 %v1917, %v1918
    %s1920 = scalar_lea.vmem [#allocation3], 88
    %1921 = vst [vmem:[%s1920] sm:$0xff] %v1919
    %s1922 = scalar_lea.vmem [#allocation2], 240
    %v1923 = vld [vmem:[%s1922] sm:$0xff]
    %v1924 = vld [vmem:[%s1922 + $0x8] sm:$0xff]
    %v1925 = vld [vmem:[%s1922 + $0x10] sm:$0xff]
    %v1926 = vld [vmem:[#allocation10] sm:$0xff]
    %v1927 = vld [vmem:[#allocation10 + $0x8] sm:$0xff]
    %v1928 = vld [vmem:[#allocation10 + $0x10] sm:$0xff]
    %v1929 = vld [vmem:[#allocation10 + $0x18] sm:$0xff]
    %v1930 = vld [vmem:[#allocation10 + $0x20] sm:$0xff]
    %v1931 = vld [vmem:[#allocation10 + $0x28] sm:$0xff]
    %v1932 = vld [vmem:[#allocation10 + $0x30] sm:$0xff]
    %v1933 = vld [vmem:[#allocation10 + $0x38] sm:$0xff]
    %v1934 = vld [vmem:[#allocation10 + $0x40] sm:$0xff]
    %v1935 = vld [vmem:[#allocation10 + $0x48] sm:$0xff]
    %v1936 = vld [vmem:[#allocation10 + $0x50] sm:$0xff]
    %v1937 = vld [vmem:[#allocation10 + $0x58] sm:$0xff]
    %v1938 = vld [vmem:[#allocation10 + $0x60] sm:$0xff]
    %v1939 = vld [vmem:[#allocation10 + $0x68] sm:$0xff]
    %v1940 = vld [vmem:[#allocation10 + $0x70] sm:$0xff]
    %v1941 = vld [vmem:[#allocation10 + $0x78] sm:$0xff]
    %v1942 = vld [vmem:[#allocation10 + $0x80] sm:$0xff]
    %v1943 = vld [vmem:[#allocation10 + $0x88] sm:$0xff]
    %v1944 = vld [vmem:[#allocation10 + $0x90] sm:$0xff]
    %v1945 = vld [vmem:[#allocation10 + $0x98] sm:$0xff]
    %v1946 = vld [vmem:[#allocation10 + $0xa0] sm:$0xff]
    %v1947 = vld [vmem:[#allocation10 + $0xa8] sm:$0xff]
    %v1948 = vld [vmem:[#allocation10 + $0xb0] sm:$0xff]
    %v1949 = vld [vmem:[#allocation10 + $0xb8] sm:$0xff]
    %v1950 = vld [vmem:[#allocation10 + $0xc0] sm:$0xff]
    %v1951 = vld [vmem:[#allocation10 + $0xc8] sm:$0xff]
    %v1952 = vld [vmem:[#allocation10 + $0xd0] sm:$0xff]
    %v1953 = vld [vmem:[#allocation10 + $0xd8] sm:$0xff]
    %v1954 = vld [vmem:[#allocation10 + $0xe0] sm:$0xff]
    %v1955 = vld [vmem:[#allocation10 + $0xe8] sm:$0xff]
    %v1956 = vld [vmem:[#allocation10 + $0xf0] sm:$0xff]
    %v1957 = vld [vmem:[#allocation10 + $0xf8] sm:$0xff]
    %v1958 = vld [vmem:[#allocation10 + $0x100] sm:$0xff]
    %v1959 = vld [vmem:[#allocation10 + $0x108] sm:$0xff]
    %v1960 = vld [vmem:[#allocation10 + $0x110] sm:$0xff]
    %v1961 = vld [vmem:[#allocation10 + $0x118] sm:$0xff]
    %v1962 = vld [vmem:[#allocation10 + $0x120] sm:$0xff]
    %v1963 = vld [vmem:[#allocation10 + $0x128] sm:$0xff]
    %v1964 = vld [vmem:[#allocation10 + $0x130] sm:$0xff]
    %v1965 = vld [vmem:[#allocation10 + $0x138] sm:$0xff]
    %v1966 = vld [vmem:[#allocation10 + $0x140] sm:$0xff]
    %v1967 = vld [vmem:[#allocation10 + $0x148] sm:$0xff]
    %v1968 = vld [vmem:[#allocation10 + $0x150] sm:$0xff]
    %v1969 = vld [vmem:[#allocation10 + $0x158] sm:$0xff]
    %v1970 = vld [vmem:[#allocation10 + $0x160] sm:$0xff]
    %v1971 = vld [vmem:[#allocation10 + $0x168] sm:$0xff]
    %v1972 = vld [vmem:[#allocation10 + $0x170] sm:$0xff]
    %v1973 = vld [vmem:[#allocation10 + $0x178] sm:$0xff]
    %1974 = vmatprep.subr.mxu0 %v1972
    %1975 = vmatpush1.msra.mxu0 %v1971
    %1976 = vmatprep.subr.mxu0 %v1969
    %1977 = vmatpush1.msra.mxu0 %v1968
    %1978 = vmatprep.subr.mxu0 %v1966
    %1979 = vmatpush1.msra.mxu0 %v1965
    %1980 = vmatprep.subr.mxu0 %v1963
    %1981 = vmatpush1.msra.mxu0 %v1962
    %1982 = vmatprep.subr.mxu0 %v1960
    %1983 = vmatpush1.msra.mxu0 %v1959
    %1984 = vmatprep.subr.mxu0 %v1957
    %1985 = vmatpush1.msra.mxu0 %v1956
    %1986 = vmatprep.subr.mxu0 %v1954
    %1987 = vmatpush1.msra.mxu0 %v1953
    %1988 = vmatprep.subr.mxu0 %v1951
    %1989 = vmatpush1.msra.mxu0 %v1950
    %1990 = vmatprep.subr.mxu0 %v1948
    %1991 = vmatpush1.msra.mxu0 %v1947
    %1992 = vmatprep.subr.mxu0 %v1945
    %1993 = vmatpush1.msra.mxu0 %v1944
    %1994 = vmatprep.subr.mxu0 %v1942
    %1995 = vmatpush1.msra.mxu0 %v1941
    %1996 = vmatprep.subr.mxu0 %v1939
    %1997 = vmatpush1.msra.mxu0 %v1938
    %1998 = vmatprep.subr.mxu0 %v1936
    %1999 = vmatpush1.msra.mxu0 %v1935
    %2000 = vmatprep.subr.mxu0 %v1933
    %2001 = vmatpush1.msra.mxu0 %v1932
    %2002 = vmatprep.subr.mxu0 %v1930
    %2003 = vmatpush1.msra.mxu0 %v1929
    %2004 = vmatprep.subr.mxu0 %v1927
    %2005 = vmatpush1.msra.mxu0 %v1926
    %2006 = vmatprep.subr.mxu0 0.0
    %2007 = vmatpush2.msra.mxu0 0.0
    %2008 = vmatprep.subr.mxu0 0.0
    %2009 = vmatpush2.msra.mxu0 0.0
    %2010 = vmatprep.subr.mxu0 0.0
    %2011 = vmatpush2.msra.mxu0 0.0
    %2012 = vmatprep.subr.mxu0 0.0
    %2013 = vmatpush2.msra.mxu0 0.0
    %2014 = vmatprep.subr.mxu0 0.0
    %2015 = vmatpush2.msra.mxu0 0.0
    %2016 = vmatprep.subr.mxu0 0.0
    %2017 = vmatpush2.msra.mxu0 0.0
    %2018 = vmatprep.subr.mxu0 0.0
    %2019 = vmatpush2.msra.mxu0 0.0
    %2020 = vmatprep.subr.mxu0 0.0
    %2021 = vmatpush2.msra.mxu0 0.0
    %2022 = vmatprep.subr.mxu0 0.0
    %2023 = vmatpush2.msra.mxu0 0.0
    %2024 = vmatprep.subr.mxu0 0.0
    %2025 = vmatpush2.msra.mxu0 0.0
    %2026 = vmatprep.subr.mxu0 0.0
    %2027 = vmatpush2.msra.mxu0 0.0
    %2028 = vmatprep.subr.mxu0 0.0
    %2029 = vmatpush2.msra.mxu0 0.0
    %2030 = vmatprep.subr.mxu0 0.0
    %2031 = vmatpush2.msra.mxu0 0.0
    %2032 = vmatprep.subr.mxu0 0.0
    %2033 = vmatpush2.msra.mxu0 0.0
    %2034 = vmatprep.subr.mxu0 0.0
    %2035 = vmatpush2.msra.mxu0 0.0
    %2036 = vmatprep.subr.mxu0 0.0
    %2037 = vmatpush2.msra.mxu0 0.0
    %2038 = vmatprep.mubr.f32.mxu0 0.0
    %2039 = vmatmul.mubr.f32.gmra.mxu0 %v1919
    %v2040 = vpop.f32.mrf.mxu0
    %v2041 = vadd.f32 0.0, %v2040
    %v2042 = vpop.f32.mrf.mxu0
    %v2043 = vadd.f32 0.0, %v2042
    %2044 = vdwg.mxu0
    %2045 = vmatprep.subr.mxu0 0.0
    %2046 = vmatpush1.msra.mxu0 %v1973
    %2047 = vmatprep.subr.mxu0 0.0
    %2048 = vmatpush1.msra.mxu0 %v1970
    %2049 = vmatprep.subr.mxu0 0.0
    %2050 = vmatpush1.msra.mxu0 %v1967
    %2051 = vmatprep.subr.mxu0 0.0
    %2052 = vmatpush1.msra.mxu0 %v1964
    %2053 = vmatprep.subr.mxu0 0.0
    %2054 = vmatpush1.msra.mxu0 %v1961
    %2055 = vmatprep.subr.mxu0 0.0
    %2056 = vmatpush1.msra.mxu0 %v1958
    %2057 = vmatprep.subr.mxu0 0.0
    %2058 = vmatpush1.msra.mxu0 %v1955
    %2059 = vmatprep.subr.mxu0 0.0
    %2060 = vmatpush1.msra.mxu0 %v1952
    %2061 = vmatprep.subr.mxu0 0.0
    %2062 = vmatpush1.msra.mxu0 %v1949
    %2063 = vmatprep.subr.mxu0 0.0
    %2064 = vmatpush1.msra.mxu0 %v1946
    %2065 = vmatprep.subr.mxu0 0.0
    %2066 = vmatpush1.msra.mxu0 %v1943
    %2067 = vmatprep.subr.mxu0 0.0
    %2068 = vmatpush1.msra.mxu0 %v1940
    %2069 = vmatprep.subr.mxu0 0.0
    %2070 = vmatpush1.msra.mxu0 %v1937
    %2071 = vmatprep.subr.mxu0 0.0
    %2072 = vmatpush1.msra.mxu0 %v1934
    %2073 = vmatprep.subr.mxu0 0.0
    %2074 = vmatpush1.msra.mxu0 %v1931
    %2075 = vmatprep.subr.mxu0 0.0
    %2076 = vmatpush1.msra.mxu0 %v1928
    %2077 = vmatprep.subr.mxu0 0.0
    %2078 = vmatpush2.msra.mxu0 0.0
    %2079 = vmatprep.subr.mxu0 0.0
    %2080 = vmatpush2.msra.mxu0 0.0
    %2081 = vmatprep.subr.mxu0 0.0
    %2082 = vmatpush2.msra.mxu0 0.0
    %2083 = vmatprep.subr.mxu0 0.0
    %2084 = vmatpush2.msra.mxu0 0.0
    %2085 = vmatprep.subr.mxu0 0.0
    %2086 = vmatpush2.msra.mxu0 0.0
    %2087 = vmatprep.subr.mxu0 0.0
    %2088 = vmatpush2.msra.mxu0 0.0
    %2089 = vmatprep.subr.mxu0 0.0
    %2090 = vmatpush2.msra.mxu0 0.0
    %2091 = vmatprep.subr.mxu0 0.0
    %2092 = vmatpush2.msra.mxu0 0.0
    %2093 = vmatprep.subr.mxu0 0.0
    %2094 = vmatpush2.msra.mxu0 0.0
    %2095 = vmatprep.subr.mxu0 0.0
    %2096 = vmatpush2.msra.mxu0 0.0
    %2097 = vmatprep.subr.mxu0 0.0
    %2098 = vmatpush2.msra.mxu0 0.0
    %2099 = vmatprep.subr.mxu0 0.0
    %2100 = vmatpush2.msra.mxu0 0.0
    %2101 = vmatprep.subr.mxu0 0.0
    %2102 = vmatpush2.msra.mxu0 0.0
    %2103 = vmatprep.subr.mxu0 0.0
    %2104 = vmatpush2.msra.mxu0 0.0
    %2105 = vmatprep.subr.mxu0 0.0
    %2106 = vmatpush2.msra.mxu0 0.0
    %2107 = vmatprep.subr.mxu0 0.0
    %2108 = vmatpush2.msra.mxu0 0.0
    %2109 = vmatprep.mubr.f32.mxu0 0.0
    %2110 = vmatmul.mubr.f32.gmra.mxu0 %v1919
    %v2111 = vpop.f32.mrf.mxu0
    %v2112 = vadd.f32 0.0, %v2111
    %v2113 = vpop.f32.mrf.mxu0
    %2114 = vdwg.mxu0
    %v2115 = vadd.f32 %v1923, %v2041
    %v2116 = vxor.u32 %v2115, 2147483648
    %v2117 = vmul.f32 %v2116, 1.442695
    %v2118 = vpow.pop %v2117
    %v2119 = vadd.f32 %v2118, 1.0
    %v2120 = vrcp.pop %v2119
    %v2121 = vmul.f32 1.0, %v2120
    %v2122 = vadd.f32 %v1924, %v2043
    %v2123 = vxor.u32 %v2122, 2147483648
    %v2124 = vmul.f32 %v2123, 1.442695
    %v2125 = vpow.pop %v2124
    %v2126 = vadd.f32 %v2125, 1.0
    %v2127 = vrcp.pop %v2126
    %v2128 = vmul.f32 1.0, %v2127
    %v2129 = vadd.f32 %v2112, %v368
    %v2130 = vmul.f32 %v2121, %v2129
    %v2131 = vadd.f32 %v1925, %v2130
    %v2132 = vtanh.pop %v2131
    %v2133 = vsub.f32 1.0, %v2128
    %v2134 = vmul.f32 %v2133, %v2132
    %v2135 = vmul.f32 %v2128, %v1919
    %v2136 = vadd.f32 %v2134, %v2135
    %s2137 = scalar_lea.vmem [#allocation3], 80
    %2138 = vst [vmem:[%s2137] sm:$0xff] %v2136
    %s2139 = scalar_lea.vmem [#allocation2], 216
    %v2140 = vld [vmem:[%s2139] sm:$0xff]
    %v2141 = vld [vmem:[%s2139 + $0x8] sm:$0xff]
    %v2142 = vld [vmem:[%s2139 + $0x10] sm:$0xff]
    %v2143 = vld [vmem:[#allocation10] sm:$0xff]
    %v2144 = vld [vmem:[#allocation10 + $0x8] sm:$0xff]
    %v2145 = vld [vmem:[#allocation10 + $0x10] sm:$0xff]
    %v2146 = vld [vmem:[#allocation10 + $0x18] sm:$0xff]
    %v2147 = vld [vmem:[#allocation10 + $0x20] sm:$0xff]
    %v2148 = vld [vmem:[#allocation10 + $0x28] sm:$0xff]
    %v2149 = vld [vmem:[#allocation10 + $0x30] sm:$0xff]
    %v2150 = vld [vmem:[#allocation10 + $0x38] sm:$0xff]
    %v2151 = vld [vmem:[#allocation10 + $0x40] sm:$0xff]
    %v2152 = vld [vmem:[#allocation10 + $0x48] sm:$0xff]
    %v2153 = vld [vmem:[#allocation10 + $0x50] sm:$0xff]
    %v2154 = vld [vmem:[#allocation10 + $0x58] sm:$0xff]
    %v2155 = vld [vmem:[#allocation10 + $0x60] sm:$0xff]
    %v2156 = vld [vmem:[#allocation10 + $0x68] sm:$0xff]
    %v2157 = vld [vmem:[#allocation10 + $0x70] sm:$0xff]
    %v2158 = vld [vmem:[#allocation10 + $0x78] sm:$0xff]
    %v2159 = vld [vmem:[#allocation10 + $0x80] sm:$0xff]
    %v2160 = vld [vmem:[#allocation10 + $0x88] sm:$0xff]
    %v2161 = vld [vmem:[#allocation10 + $0x90] sm:$0xff]
    %v2162 = vld [vmem:[#allocation10 + $0x98] sm:$0xff]
    %v2163 = vld [vmem:[#allocation10 + $0xa0] sm:$0xff]
    %v2164 = vld [vmem:[#allocation10 + $0xa8] sm:$0xff]
    %v2165 = vld [vmem:[#allocation10 + $0xb0] sm:$0xff]
    %v2166 = vld [vmem:[#allocation10 + $0xb8] sm:$0xff]
    %v2167 = vld [vmem:[#allocation10 + $0xc0] sm:$0xff]
    %v2168 = vld [vmem:[#allocation10 + $0xc8] sm:$0xff]
    %v2169 = vld [vmem:[#allocation10 + $0xd0] sm:$0xff]
    %v2170 = vld [vmem:[#allocation10 + $0xd8] sm:$0xff]
    %v2171 = vld [vmem:[#allocation10 + $0xe0] sm:$0xff]
    %v2172 = vld [vmem:[#allocation10 + $0xe8] sm:$0xff]
    %v2173 = vld [vmem:[#allocation10 + $0xf0] sm:$0xff]
    %v2174 = vld [vmem:[#allocation10 + $0xf8] sm:$0xff]
    %v2175 = vld [vmem:[#allocation10 + $0x100] sm:$0xff]
    %v2176 = vld [vmem:[#allocation10 + $0x108] sm:$0xff]
    %v2177 = vld [vmem:[#allocation10 + $0x110] sm:$0xff]
    %v2178 = vld [vmem:[#allocation10 + $0x118] sm:$0xff]
    %v2179 = vld [vmem:[#allocation10 + $0x120] sm:$0xff]
    %v2180 = vld [vmem:[#allocation10 + $0x128] sm:$0xff]
    %v2181 = vld [vmem:[#allocation10 + $0x130] sm:$0xff]
    %v2182 = vld [vmem:[#allocation10 + $0x138] sm:$0xff]
    %v2183 = vld [vmem:[#allocation10 + $0x140] sm:$0xff]
    %v2184 = vld [vmem:[#allocation10 + $0x148] sm:$0xff]
    %v2185 = vld [vmem:[#allocation10 + $0x150] sm:$0xff]
    %v2186 = vld [vmem:[#allocation10 + $0x158] sm:$0xff]
    %v2187 = vld [vmem:[#allocation10 + $0x160] sm:$0xff]
    %v2188 = vld [vmem:[#allocation10 + $0x168] sm:$0xff]
    %v2189 = vld [vmem:[#allocation10 + $0x170] sm:$0xff]
    %v2190 = vld [vmem:[#allocation10 + $0x178] sm:$0xff]
    %2191 = vmatprep.subr.mxu0 %v2189
    %2192 = vmatpush1.msra.mxu0 %v2188
    %2193 = vmatprep.subr.mxu0 %v2186
    %2194 = vmatpush1.msra.mxu0 %v2185
    %2195 = vmatprep.subr.mxu0 %v2183
    %2196 = vmatpush1.msra.mxu0 %v2182
    %2197 = vmatprep.subr.mxu0 %v2180
    %2198 = vmatpush1.msra.mxu0 %v2179
    %2199 = vmatprep.subr.mxu0 %v2177
    %2200 = vmatpush1.msra.mxu0 %v2176
    %2201 = vmatprep.subr.mxu0 %v2174
    %2202 = vmatpush1.msra.mxu0 %v2173
    %2203 = vmatprep.subr.mxu0 %v2171
    %2204 = vmatpush1.msra.mxu0 %v2170
    %2205 = vmatprep.subr.mxu0 %v2168
    %2206 = vmatpush1.msra.mxu0 %v2167
    %2207 = vmatprep.subr.mxu0 %v2165
    %2208 = vmatpush1.msra.mxu0 %v2164
    %2209 = vmatprep.subr.mxu0 %v2162
    %2210 = vmatpush1.msra.mxu0 %v2161
    %2211 = vmatprep.subr.mxu0 %v2159
    %2212 = vmatpush1.msra.mxu0 %v2158
    %2213 = vmatprep.subr.mxu0 %v2156
    %2214 = vmatpush1.msra.mxu0 %v2155
    %2215 = vmatprep.subr.mxu0 %v2153
    %2216 = vmatpush1.msra.mxu0 %v2152
    %2217 = vmatprep.subr.mxu0 %v2150
    %2218 = vmatpush1.msra.mxu0 %v2149
    %2219 = vmatprep.subr.mxu0 %v2147
    %2220 = vmatpush1.msra.mxu0 %v2146
    %2221 = vmatprep.subr.mxu0 %v2144
    %2222 = vmatpush1.msra.mxu0 %v2143
    %2223 = vmatprep.subr.mxu0 0.0
    %2224 = vmatpush2.msra.mxu0 0.0
    %2225 = vmatprep.subr.mxu0 0.0
    %2226 = vmatpush2.msra.mxu0 0.0
    %2227 = vmatprep.subr.mxu0 0.0
    %2228 = vmatpush2.msra.mxu0 0.0
    %2229 = vmatprep.subr.mxu0 0.0
    %2230 = vmatpush2.msra.mxu0 0.0
    %2231 = vmatprep.subr.mxu0 0.0
    %2232 = vmatpush2.msra.mxu0 0.0
    %2233 = vmatprep.subr.mxu0 0.0
    %2234 = vmatpush2.msra.mxu0 0.0
    %2235 = vmatprep.subr.mxu0 0.0
    %2236 = vmatpush2.msra.mxu0 0.0
    %2237 = vmatprep.subr.mxu0 0.0
    %2238 = vmatpush2.msra.mxu0 0.0
    %2239 = vmatprep.subr.mxu0 0.0
    %2240 = vmatpush2.msra.mxu0 0.0
    %2241 = vmatprep.subr.mxu0 0.0
    %2242 = vmatpush2.msra.mxu0 0.0
    %2243 = vmatprep.subr.mxu0 0.0
    %2244 = vmatpush2.msra.mxu0 0.0
    %2245 = vmatprep.subr.mxu0 0.0
    %2246 = vmatpush2.msra.mxu0 0.0
    %2247 = vmatprep.subr.mxu0 0.0
    %2248 = vmatpush2.msra.mxu0 0.0
    %2249 = vmatprep.subr.mxu0 0.0
    %2250 = vmatpush2.msra.mxu0 0.0
    %2251 = vmatprep.subr.mxu0 0.0
    %2252 = vmatpush2.msra.mxu0 0.0
    %2253 = vmatprep.subr.mxu0 0.0
    %2254 = vmatpush2.msra.mxu0 0.0
    %2255 = vmatprep.mubr.f32.mxu0 0.0
    %2256 = vmatmul.mubr.f32.gmra.mxu0 %v2136
    %v2257 = vpop.f32.mrf.mxu0
    %v2258 = vadd.f32 0.0, %v2257
    %v2259 = vpop.f32.mrf.mxu0
    %v2260 = vadd.f32 0.0, %v2259
    %2261 = vdwg.mxu0
    %2262 = vmatprep.subr.mxu0 0.0
    %2263 = vmatpush1.msra.mxu0 %v2190
    %2264 = vmatprep.subr.mxu0 0.0
    %2265 = vmatpush1.msra.mxu0 %v2187
    %2266 = vmatprep.subr.mxu0 0.0
    %2267 = vmatpush1.msra.mxu0 %v2184
    %2268 = vmatprep.subr.mxu0 0.0
    %2269 = vmatpush1.msra.mxu0 %v2181
    %2270 = vmatprep.subr.mxu0 0.0
    %2271 = vmatpush1.msra.mxu0 %v2178
    %2272 = vmatprep.subr.mxu0 0.0
    %2273 = vmatpush1.msra.mxu0 %v2175
    %2274 = vmatprep.subr.mxu0 0.0
    %2275 = vmatpush1.msra.mxu0 %v2172
    %2276 = vmatprep.subr.mxu0 0.0
    %2277 = vmatpush1.msra.mxu0 %v2169
    %2278 = vmatprep.subr.mxu0 0.0
    %2279 = vmatpush1.msra.mxu0 %v2166
    %2280 = vmatprep.subr.mxu0 0.0
    %2281 = vmatpush1.msra.mxu0 %v2163
    %2282 = vmatprep.subr.mxu0 0.0
    %2283 = vmatpush1.msra.mxu0 %v2160
    %2284 = vmatprep.subr.mxu0 0.0
    %2285 = vmatpush1.msra.mxu0 %v2157
    %2286 = vmatprep.subr.mxu0 0.0
    %2287 = vmatpush1.msra.mxu0 %v2154
    %2288 = vmatprep.subr.mxu0 0.0
    %2289 = vmatpush1.msra.mxu0 %v2151
    %2290 = vmatprep.subr.mxu0 0.0
    %2291 = vmatpush1.msra.mxu0 %v2148
    %2292 = vmatprep.subr.mxu0 0.0
    %2293 = vmatpush1.msra.mxu0 %v2145
    %2294 = vmatprep.subr.mxu0 0.0
    %2295 = vmatpush2.msra.mxu0 0.0
    %2296 = vmatprep.subr.mxu0 0.0
    %2297 = vmatpush2.msra.mxu0 0.0
    %2298 = vmatprep.subr.mxu0 0.0
    %2299 = vmatpush2.msra.mxu0 0.0
    %2300 = vmatprep.subr.mxu0 0.0
    %2301 = vmatpush2.msra.mxu0 0.0
    %2302 = vmatprep.subr.mxu0 0.0
    %2303 = vmatpush2.msra.mxu0 0.0
    %2304 = vmatprep.subr.mxu0 0.0
    %2305 = vmatpush2.msra.mxu0 0.0
    %2306 = vmatprep.subr.mxu0 0.0
    %2307 = vmatpush2.msra.mxu0 0.0
    %2308 = vmatprep.subr.mxu0 0.0
    %2309 = vmatpush2.msra.mxu0 0.0
    %2310 = vmatprep.subr.mxu0 0.0
    %2311 = vmatpush2.msra.mxu0 0.0
    %2312 = vmatprep.subr.mxu0 0.0
    %2313 = vmatpush2.msra.mxu0 0.0
    %2314 = vmatprep.subr.mxu0 0.0
    %2315 = vmatpush2.msra.mxu0 0.0
    %2316 = vmatprep.subr.mxu0 0.0
    %2317 = vmatpush2.msra.mxu0 0.0
    %2318 = vmatprep.subr.mxu0 0.0
    %2319 = vmatpush2.msra.mxu0 0.0
    %2320 = vmatprep.subr.mxu0 0.0
    %2321 = vmatpush2.msra.mxu0 0.0
    %2322 = vmatprep.subr.mxu0 0.0
    %2323 = vmatpush2.msra.mxu0 0.0
    %2324 = vmatprep.subr.mxu0 0.0
    %2325 = vmatpush2.msra.mxu0 0.0
    %2326 = vmatprep.mubr.f32.mxu0 0.0
    %2327 = vmatmul.mubr.f32.gmra.mxu0 %v2136
    %v2328 = vpop.f32.mrf.mxu0
    %v2329 = vadd.f32 0.0, %v2328
    %v2330 = vpop.f32.mrf.mxu0
    %2331 = vdwg.mxu0
    %v2332 = vadd.f32 %v2140, %v2258
    %v2333 = vxor.u32 %v2332, 2147483648
    %v2334 = vmul.f32 %v2333, 1.442695
    %v2335 = vpow.pop %v2334
    %v2336 = vadd.f32 %v2335, 1.0
    %v2337 = vrcp.pop %v2336
    %v2338 = vmul.f32 1.0, %v2337
    %v2339 = vadd.f32 %v2141, %v2260
    %v2340 = vxor.u32 %v2339, 2147483648
    %v2341 = vmul.f32 %v2340, 1.442695
    %v2342 = vpow.pop %v2341
    %v2343 = vadd.f32 %v2342, 1.0
    %v2344 = vrcp.pop %v2343
    %v2345 = vmul.f32 1.0, %v2344
    %v2346 = vadd.f32 %v2329, %v368
    %v2347 = vmul.f32 %v2338, %v2346
    %v2348 = vadd.f32 %v2142, %v2347
    %v2349 = vtanh.pop %v2348
    %v2350 = vsub.f32 1.0, %v2345
    %v2351 = vmul.f32 %v2350, %v2349
    %v2352 = vmul.f32 %v2345, %v2136
    %v2353 = vadd.f32 %v2351, %v2352
    %s2354 = scalar_lea.vmem [#allocation3], 72
    %2355 = vst [vmem:[%s2354] sm:$0xff] %v2353
    %s2356 = scalar_lea.vmem [#allocation2], 192
    %v2357 = vld [vmem:[%s2356] sm:$0xff]
    %v2358 = vld [vmem:[%s2356 + $0x8] sm:$0xff]
    %v2359 = vld [vmem:[%s2356 + $0x10] sm:$0xff]
    %v2360 = vld [vmem:[#allocation10] sm:$0xff]
    %v2361 = vld [vmem:[#allocation10 + $0x8] sm:$0xff]
    %v2362 = vld [vmem:[#allocation10 + $0x10] sm:$0xff]
    %v2363 = vld [vmem:[#allocation10 + $0x18] sm:$0xff]
    %v2364 = vld [vmem:[#allocation10 + $0x20] sm:$0xff]
    %v2365 = vld [vmem:[#allocation10 + $0x28] sm:$0xff]
    %v2366 = vld [vmem:[#allocation10 + $0x30] sm:$0xff]
    %v2367 = vld [vmem:[#allocation10 + $0x38] sm:$0xff]
    %v2368 = vld [vmem:[#allocation10 + $0x40] sm:$0xff]
    %v2369 = vld [vmem:[#allocation10 + $0x48] sm:$0xff]
    %v2370 = vld [vmem:[#allocation10 + $0x50] sm:$0xff]
    %v2371 = vld [vmem:[#allocation10 + $0x58] sm:$0xff]
    %v2372 = vld [vmem:[#allocation10 + $0x60] sm:$0xff]
    %v2373 = vld [vmem:[#allocation10 + $0x68] sm:$0xff]
    %v2374 = vld [vmem:[#allocation10 + $0x70] sm:$0xff]
    %v2375 = vld [vmem:[#allocation10 + $0x78] sm:$0xff]
    %v2376 = vld [vmem:[#allocation10 + $0x80] sm:$0xff]
    %v2377 = vld [vmem:[#allocation10 + $0x88] sm:$0xff]
    %v2378 = vld [vmem:[#allocation10 + $0x90] sm:$0xff]
    %v2379 = vld [vmem:[#allocation10 + $0x98] sm:$0xff]
    %v2380 = vld [vmem:[#allocation10 + $0xa0] sm:$0xff]
    %v2381 = vld [vmem:[#allocation10 + $0xa8] sm:$0xff]
    %v2382 = vld [vmem:[#allocation10 + $0xb0] sm:$0xff]
    %v2383 = vld [vmem:[#allocation10 + $0xb8] sm:$0xff]
    %v2384 = vld [vmem:[#allocation10 + $0xc0] sm:$0xff]
    %v2385 = vld [vmem:[#allocation10 + $0xc8] sm:$0xff]
    %v2386 = vld [vmem:[#allocation10 + $0xd0] sm:$0xff]
    %v2387 = vld [vmem:[#allocation10 + $0xd8] sm:$0xff]
    %v2388 = vld [vmem:[#allocation10 + $0xe0] sm:$0xff]
    %v2389 = vld [vmem:[#allocation10 + $0xe8] sm:$0xff]
    %v2390 = vld [vmem:[#allocation10 + $0xf0] sm:$0xff]
    %v2391 = vld [vmem:[#allocation10 + $0xf8] sm:$0xff]
    %v2392 = vld [vmem:[#allocation10 + $0x100] sm:$0xff]
    %v2393 = vld [vmem:[#allocation10 + $0x108] sm:$0xff]
    %v2394 = vld [vmem:[#allocation10 + $0x110] sm:$0xff]
    %v2395 = vld [vmem:[#allocation10 + $0x118] sm:$0xff]
    %v2396 = vld [vmem:[#allocation10 + $0x120] sm:$0xff]
    %v2397 = vld [vmem:[#allocation10 + $0x128] sm:$0xff]
    %v2398 = vld [vmem:[#allocation10 + $0x130] sm:$0xff]
    %v2399 = vld [vmem:[#allocation10 + $0x138] sm:$0xff]
    %v2400 = vld [vmem:[#allocation10 + $0x140] sm:$0xff]
    %v2401 = vld [vmem:[#allocation10 + $0x148] sm:$0xff]
    %v2402 = vld [vmem:[#allocation10 + $0x150] sm:$0xff]
    %v2403 = vld [vmem:[#allocation10 + $0x158] sm:$0xff]
    %v2404 = vld [vmem:[#allocation10 + $0x160] sm:$0xff]
    %v2405 = vld [vmem:[#allocation10 + $0x168] sm:$0xff]
    %v2406 = vld [vmem:[#allocation10 + $0x170] sm:$0xff]
    %v2407 = vld [vmem:[#allocation10 + $0x178] sm:$0xff]
    %2408 = vmatprep.subr.mxu0 %v2406
    %2409 = vmatpush1.msra.mxu0 %v2405
    %2410 = vmatprep.subr.mxu0 %v2403
    %2411 = vmatpush1.msra.mxu0 %v2402
    %2412 = vmatprep.subr.mxu0 %v2400
    %2413 = vmatpush1.msra.mxu0 %v2399
    %2414 = vmatprep.subr.mxu0 %v2397
    %2415 = vmatpush1.msra.mxu0 %v2396
    %2416 = vmatprep.subr.mxu0 %v2394
    %2417 = vmatpush1.msra.mxu0 %v2393
    %2418 = vmatprep.subr.mxu0 %v2391
    %2419 = vmatpush1.msra.mxu0 %v2390
    %2420 = vmatprep.subr.mxu0 %v2388
    %2421 = vmatpush1.msra.mxu0 %v2387
    %2422 = vmatprep.subr.mxu0 %v2385
    %2423 = vmatpush1.msra.mxu0 %v2384
    %2424 = vmatprep.subr.mxu0 %v2382
    %2425 = vmatpush1.msra.mxu0 %v2381
    %2426 = vmatprep.subr.mxu0 %v2379
    %2427 = vmatpush1.msra.mxu0 %v2378
    %2428 = vmatprep.subr.mxu0 %v2376
    %2429 = vmatpush1.msra.mxu0 %v2375
    %2430 = vmatprep.subr.mxu0 %v2373
    %2431 = vmatpush1.msra.mxu0 %v2372
    %2432 = vmatprep.subr.mxu0 %v2370
    %2433 = vmatpush1.msra.mxu0 %v2369
    %2434 = vmatprep.subr.mxu0 %v2367
    %2435 = vmatpush1.msra.mxu0 %v2366
    %2436 = vmatprep.subr.mxu0 %v2364
    %2437 = vmatpush1.msra.mxu0 %v2363
    %2438 = vmatprep.subr.mxu0 %v2361
    %2439 = vmatpush1.msra.mxu0 %v2360
    %2440 = vmatprep.subr.mxu0 0.0
    %2441 = vmatpush2.msra.mxu0 0.0
    %2442 = vmatprep.subr.mxu0 0.0
    %2443 = vmatpush2.msra.mxu0 0.0
    %2444 = vmatprep.subr.mxu0 0.0
    %2445 = vmatpush2.msra.mxu0 0.0
    %2446 = vmatprep.subr.mxu0 0.0
    %2447 = vmatpush2.msra.mxu0 0.0
    %2448 = vmatprep.subr.mxu0 0.0
    %2449 = vmatpush2.msra.mxu0 0.0
    %2450 = vmatprep.subr.mxu0 0.0
    %2451 = vmatpush2.msra.mxu0 0.0
    %2452 = vmatprep.subr.mxu0 0.0
    %2453 = vmatpush2.msra.mxu0 0.0
    %2454 = vmatprep.subr.mxu0 0.0
    %2455 = vmatpush2.msra.mxu0 0.0
    %2456 = vmatprep.subr.mxu0 0.0
    %2457 = vmatpush2.msra.mxu0 0.0
    %2458 = vmatprep.subr.mxu0 0.0
    %2459 = vmatpush2.msra.mxu0 0.0
    %2460 = vmatprep.subr.mxu0 0.0
    %2461 = vmatpush2.msra.mxu0 0.0
    %2462 = vmatprep.subr.mxu0 0.0
    %2463 = vmatpush2.msra.mxu0 0.0
    %2464 = vmatprep.subr.mxu0 0.0
    %2465 = vmatpush2.msra.mxu0 0.0
    %2466 = vmatprep.subr.mxu0 0.0
    %2467 = vmatpush2.msra.mxu0 0.0
    %2468 = vmatprep.subr.mxu0 0.0
    %2469 = vmatpush2.msra.mxu0 0.0
    %2470 = vmatprep.subr.mxu0 0.0
    %2471 = vmatpush2.msra.mxu0 0.0
    %2472 = vmatprep.mubr.f32.mxu0 0.0
    %2473 = vmatmul.mubr.f32.gmra.mxu0 %v2353
    %v2474 = vpop.f32.mrf.mxu0
    %v2475 = vadd.f32 0.0, %v2474
    %v2476 = vpop.f32.mrf.mxu0
    %v2477 = vadd.f32 0.0, %v2476
    %2478 = vdwg.mxu0
    %2479 = vmatprep.subr.mxu0 0.0
    %2480 = vmatpush1.msra.mxu0 %v2407
    %2481 = vmatprep.subr.mxu0 0.0
    %2482 = vmatpush1.msra.mxu0 %v2404
    %2483 = vmatprep.subr.mxu0 0.0
    %2484 = vmatpush1.msra.mxu0 %v2401
    %2485 = vmatprep.subr.mxu0 0.0
    %2486 = vmatpush1.msra.mxu0 %v2398
    %2487 = vmatprep.subr.mxu0 0.0
    %2488 = vmatpush1.msra.mxu0 %v2395
    %2489 = vmatprep.subr.mxu0 0.0
    %2490 = vmatpush1.msra.mxu0 %v2392
    %2491 = vmatprep.subr.mxu0 0.0
    %2492 = vmatpush1.msra.mxu0 %v2389
    %2493 = vmatprep.subr.mxu0 0.0
    %2494 = vmatpush1.msra.mxu0 %v2386
    %2495 = vmatprep.subr.mxu0 0.0
    %2496 = vmatpush1.msra.mxu0 %v2383
    %2497 = vmatprep.subr.mxu0 0.0
    %2498 = vmatpush1.msra.mxu0 %v2380
    %2499 = vmatprep.subr.mxu0 0.0
    %2500 = vmatpush1.msra.mxu0 %v2377
    %2501 = vmatprep.subr.mxu0 0.0
    %2502 = vmatpush1.msra.mxu0 %v2374
    %2503 = vmatprep.subr.mxu0 0.0
    %2504 = vmatpush1.msra.mxu0 %v2371
    %2505 = vmatprep.subr.mxu0 0.0
    %2506 = vmatpush1.msra.mxu0 %v2368
    %2507 = vmatprep.subr.mxu0 0.0
    %2508 = vmatpush1.msra.mxu0 %v2365
    %2509 = vmatprep.subr.mxu0 0.0
    %2510 = vmatpush1.msra.mxu0 %v2362
    %2511 = vmatprep.subr.mxu0 0.0
    %2512 = vmatpush2.msra.mxu0 0.0
    %2513 = vmatprep.subr.mxu0 0.0
    %2514 = vmatpush2.msra.mxu0 0.0
    %2515 = vmatprep.subr.mxu0 0.0
    %2516 = vmatpush2.msra.mxu0 0.0
    %2517 = vmatprep.subr.mxu0 0.0
    %2518 = vmatpush2.msra.mxu0 0.0
    %2519 = vmatprep.subr.mxu0 0.0
    %2520 = vmatpush2.msra.mxu0 0.0
    %2521 = vmatprep.subr.mxu0 0.0
    %2522 = vmatpush2.msra.mxu0 0.0
    %2523 = vmatprep.subr.mxu0 0.0
    %2524 = vmatpush2.msra.mxu0 0.0
    %2525 = vmatprep.subr.mxu0 0.0
    %2526 = vmatpush2.msra.mxu0 0.0
    %2527 = vmatprep.subr.mxu0 0.0
    %2528 = vmatpush2.msra.mxu0 0.0
    %2529 = vmatprep.subr.mxu0 0.0
    %2530 = vmatpush2.msra.mxu0 0.0
    %2531 = vmatprep.subr.mxu0 0.0
    %2532 = vmatpush2.msra.mxu0 0.0
    %2533 = vmatprep.subr.mxu0 0.0
    %2534 = vmatpush2.msra.mxu0 0.0
    %2535 = vmatprep.subr.mxu0 0.0
    %2536 = vmatpush2.msra.mxu0 0.0
    %2537 = vmatprep.subr.mxu0 0.0
    %2538 = vmatpush2.msra.mxu0 0.0
    %2539 = vmatprep.subr.mxu0 0.0
    %2540 = vmatpush2.msra.mxu0 0.0
    %2541 = vmatprep.subr.mxu0 0.0
    %2542 = vmatpush2.msra.mxu0 0.0
    %2543 = vmatprep.mubr.f32.mxu0 0.0
    %2544 = vmatmul.mubr.f32.gmra.mxu0 %v2353
    %v2545 = vpop.f32.mrf.mxu0
    %v2546 = vadd.f32 0.0, %v2545
    %v2547 = vpop.f32.mrf.mxu0
    %2548 = vdwg.mxu0
    %v2549 = vadd.f32 %v2357, %v2475
    %v2550 = vxor.u32 %v2549, 2147483648
    %v2551 = vmul.f32 %v2550, 1.442695
    %v2552 = vpow.pop %v2551
    %v2553 = vadd.f32 %v2552, 1.0
    %v2554 = vrcp.pop %v2553
    %v2555 = vmul.f32 1.0, %v2554
    %v2556 = vadd.f32 %v2358, %v2477
    %v2557 = vxor.u32 %v2556, 2147483648
    %v2558 = vmul.f32 %v2557, 1.442695
    %v2559 = vpow.pop %v2558
    %v2560 = vadd.f32 %v2559, 1.0
    %v2561 = vrcp.pop %v2560
    %v2562 = vmul.f32 1.0, %v2561
    %v2563 = vadd.f32 %v2546, %v368
    %v2564 = vmul.f32 %v2555, %v2563
    %v2565 = vadd.f32 %v2359, %v2564
    %v2566 = vtanh.pop %v2565
    %v2567 = vsub.f32 1.0, %v2562
    %v2568 = vmul.f32 %v2567, %v2566
    %v2569 = vmul.f32 %v2562, %v2353
    %v2570 = vadd.f32 %v2568, %v2569
    %s2571 = scalar_lea.vmem [#allocation3], 64
    %2572 = vst [vmem:[%s2571] sm:$0xff] %v2570
    %s2573 = scalar_lea.vmem [#allocation2], 168
    %v2574 = vld [vmem:[%s2573] sm:$0xff]
    %v2575 = vld [vmem:[%s2573 + $0x8] sm:$0xff]
    %v2576 = vld [vmem:[%s2573 + $0x10] sm:$0xff]
    %v2577 = vld [vmem:[#allocation10] sm:$0xff]
    %v2578 = vld [vmem:[#allocation10 + $0x8] sm:$0xff]
    %v2579 = vld [vmem:[#allocation10 + $0x10] sm:$0xff]
    %v2580 = vld [vmem:[#allocation10 + $0x18] sm:$0xff]
    %v2581 = vld [vmem:[#allocation10 + $0x20] sm:$0xff]
    %v2582 = vld [vmem:[#allocation10 + $0x28] sm:$0xff]
    %v2583 = vld [vmem:[#allocation10 + $0x30] sm:$0xff]
    %v2584 = vld [vmem:[#allocation10 + $0x38] sm:$0xff]
    %v2585 = vld [vmem:[#allocation10 + $0x40] sm:$0xff]
    %v2586 = vld [vmem:[#allocation10 + $0x48] sm:$0xff]
    %v2587 = vld [vmem:[#allocation10 + $0x50] sm:$0xff]
    %v2588 = vld [vmem:[#allocation10 + $0x58] sm:$0xff]
    %v2589 = vld [vmem:[#allocation10 + $0x60] sm:$0xff]
    %v2590 = vld [vmem:[#allocation10 + $0x68] sm:$0xff]
    %v2591 = vld [vmem:[#allocation10 + $0x70] sm:$0xff]
    %v2592 = vld [vmem:[#allocation10 + $0x78] sm:$0xff]
    %v2593 = vld [vmem:[#allocation10 + $0x80] sm:$0xff]
    %v2594 = vld [vmem:[#allocation10 + $0x88] sm:$0xff]
    %v2595 = vld [vmem:[#allocation10 + $0x90] sm:$0xff]
    %v2596 = vld [vmem:[#allocation10 + $0x98] sm:$0xff]
    %v2597 = vld [vmem:[#allocation10 + $0xa0] sm:$0xff]
    %v2598 = vld [vmem:[#allocation10 + $0xa8] sm:$0xff]
    %v2599 = vld [vmem:[#allocation10 + $0xb0] sm:$0xff]
    %v2600 = vld [vmem:[#allocation10 + $0xb8] sm:$0xff]
    %v2601 = vld [vmem:[#allocation10 + $0xc0] sm:$0xff]
    %v2602 = vld [vmem:[#allocation10 + $0xc8] sm:$0xff]
    %v2603 = vld [vmem:[#allocation10 + $0xd0] sm:$0xff]
    %v2604 = vld [vmem:[#allocation10 + $0xd8] sm:$0xff]
    %v2605 = vld [vmem:[#allocation10 + $0xe0] sm:$0xff]
    %v2606 = vld [vmem:[#allocation10 + $0xe8] sm:$0xff]
    %v2607 = vld [vmem:[#allocation10 + $0xf0] sm:$0xff]
    %v2608 = vld [vmem:[#allocation10 + $0xf8] sm:$0xff]
    %v2609 = vld [vmem:[#allocation10 + $0x100] sm:$0xff]
    %v2610 = vld [vmem:[#allocation10 + $0x108] sm:$0xff]
    %v2611 = vld [vmem:[#allocation10 + $0x110] sm:$0xff]
    %v2612 = vld [vmem:[#allocation10 + $0x118] sm:$0xff]
    %v2613 = vld [vmem:[#allocation10 + $0x120] sm:$0xff]
    %v2614 = vld [vmem:[#allocation10 + $0x128] sm:$0xff]
    %v2615 = vld [vmem:[#allocation10 + $0x130] sm:$0xff]
    %v2616 = vld [vmem:[#allocation10 + $0x138] sm:$0xff]
    %v2617 = vld [vmem:[#allocation10 + $0x140] sm:$0xff]
    %v2618 = vld [vmem:[#allocation10 + $0x148] sm:$0xff]
    %v2619 = vld [vmem:[#allocation10 + $0x150] sm:$0xff]
    %v2620 = vld [vmem:[#allocation10 + $0x158] sm:$0xff]
    %v2621 = vld [vmem:[#allocation10 + $0x160] sm:$0xff]
    %v2622 = vld [vmem:[#allocation10 + $0x168] sm:$0xff]
    %v2623 = vld [vmem:[#allocation10 + $0x170] sm:$0xff]
    %v2624 = vld [vmem:[#allocation10 + $0x178] sm:$0xff]
    %2625 = vmatprep.subr.mxu0 %v2623
    %2626 = vmatpush1.msra.mxu0 %v2622
    %2627 = vmatprep.subr.mxu0 %v2620
    %2628 = vmatpush1.msra.mxu0 %v2619
    %2629 = vmatprep.subr.mxu0 %v2617
    %2630 = vmatpush1.msra.mxu0 %v2616
    %2631 = vmatprep.subr.mxu0 %v2614
    %2632 = vmatpush1.msra.mxu0 %v2613
    %2633 = vmatprep.subr.mxu0 %v2611
    %2634 = vmatpush1.msra.mxu0 %v2610
    %2635 = vmatprep.subr.mxu0 %v2608
    %2636 = vmatpush1.msra.mxu0 %v2607
    %2637 = vmatprep.subr.mxu0 %v2605
    %2638 = vmatpush1.msra.mxu0 %v2604
    %2639 = vmatprep.subr.mxu0 %v2602
    %2640 = vmatpush1.msra.mxu0 %v2601
    %2641 = vmatprep.subr.mxu0 %v2599
    %2642 = vmatpush1.msra.mxu0 %v2598
    %2643 = vmatprep.subr.mxu0 %v2596
    %2644 = vmatpush1.msra.mxu0 %v2595
    %2645 = vmatprep.subr.mxu0 %v2593
    %2646 = vmatpush1.msra.mxu0 %v2592
    %2647 = vmatprep.subr.mxu0 %v2590
    %2648 = vmatpush1.msra.mxu0 %v2589
    %2649 = vmatprep.subr.mxu0 %v2587
    %2650 = vmatpush1.msra.mxu0 %v2586
    %2651 = vmatprep.subr.mxu0 %v2584
    %2652 = vmatpush1.msra.mxu0 %v2583
    %2653 = vmatprep.subr.mxu0 %v2581
    %2654 = vmatpush1.msra.mxu0 %v2580
    %2655 = vmatprep.subr.mxu0 %v2578
    %2656 = vmatpush1.msra.mxu0 %v2577
    %2657 = vmatprep.subr.mxu0 0.0
    %2658 = vmatpush2.msra.mxu0 0.0
    %2659 = vmatprep.subr.mxu0 0.0
    %2660 = vmatpush2.msra.mxu0 0.0
    %2661 = vmatprep.subr.mxu0 0.0
    %2662 = vmatpush2.msra.mxu0 0.0
    %2663 = vmatprep.subr.mxu0 0.0
    %2664 = vmatpush2.msra.mxu0 0.0
    %2665 = vmatprep.subr.mxu0 0.0
    %2666 = vmatpush2.msra.mxu0 0.0
    %2667 = vmatprep.subr.mxu0 0.0
    %2668 = vmatpush2.msra.mxu0 0.0
    %2669 = vmatprep.subr.mxu0 0.0
    %2670 = vmatpush2.msra.mxu0 0.0
    %2671 = vmatprep.subr.mxu0 0.0
    %2672 = vmatpush2.msra.mxu0 0.0
    %2673 = vmatprep.subr.mxu0 0.0
    %2674 = vmatpush2.msra.mxu0 0.0
    %2675 = vmatprep.subr.mxu0 0.0
    %2676 = vmatpush2.msra.mxu0 0.0
    %2677 = vmatprep.subr.mxu0 0.0
    %2678 = vmatpush2.msra.mxu0 0.0
    %2679 = vmatprep.subr.mxu0 0.0
    %2680 = vmatpush2.msra.mxu0 0.0
    %2681 = vmatprep.subr.mxu0 0.0
    %2682 = vmatpush2.msra.mxu0 0.0
    %2683 = vmatprep.subr.mxu0 0.0
    %2684 = vmatpush2.msra.mxu0 0.0
    %2685 = vmatprep.subr.mxu0 0.0
    %2686 = vmatpush2.msra.mxu0 0.0
    %2687 = vmatprep.subr.mxu0 0.0
    %2688 = vmatpush2.msra.mxu0 0.0
    %2689 = vmatprep.mubr.f32.mxu0 0.0
    %2690 = vmatmul.mubr.f32.gmra.mxu0 %v2570
    %v2691 = vpop.f32.mrf.mxu0
    %v2692 = vadd.f32 0.0, %v2691
    %v2693 = vpop.f32.mrf.mxu0
    %v2694 = vadd.f32 0.0, %v2693
    %2695 = vdwg.mxu0
    %2696 = vmatprep.subr.mxu0 0.0
    %2697 = vmatpush1.msra.mxu0 %v2624
    %2698 = vmatprep.subr.mxu0 0.0
    %2699 = vmatpush1.msra.mxu0 %v2621
    %2700 = vmatprep.subr.mxu0 0.0
    %2701 = vmatpush1.msra.mxu0 %v2618
    %2702 = vmatprep.subr.mxu0 0.0
    %2703 = vmatpush1.msra.mxu0 %v2615
    %2704 = vmatprep.subr.mxu0 0.0
    %2705 = vmatpush1.msra.mxu0 %v2612
    %2706 = vmatprep.subr.mxu0 0.0
    %2707 = vmatpush1.msra.mxu0 %v2609
    %2708 = vmatprep.subr.mxu0 0.0
    %2709 = vmatpush1.msra.mxu0 %v2606
    %2710 = vmatprep.subr.mxu0 0.0
    %2711 = vmatpush1.msra.mxu0 %v2603
    %2712 = vmatprep.subr.mxu0 0.0
    %2713 = vmatpush1.msra.mxu0 %v2600
    %2714 = vmatprep.subr.mxu0 0.0
    %2715 = vmatpush1.msra.mxu0 %v2597
    %2716 = vmatprep.subr.mxu0 0.0
    %2717 = vmatpush1.msra.mxu0 %v2594
    %2718 = vmatprep.subr.mxu0 0.0
    %2719 = vmatpush1.msra.mxu0 %v2591
    %2720 = vmatprep.subr.mxu0 0.0
    %2721 = vmatpush1.msra.mxu0 %v2588
    %2722 = vmatprep.subr.mxu0 0.0
    %2723 = vmatpush1.msra.mxu0 %v2585
    %2724 = vmatprep.subr.mxu0 0.0
    %2725 = vmatpush1.msra.mxu0 %v2582
    %2726 = vmatprep.subr.mxu0 0.0
    %2727 = vmatpush1.msra.mxu0 %v2579
    %2728 = vmatprep.subr.mxu0 0.0
    %2729 = vmatpush2.msra.mxu0 0.0
    %2730 = vmatprep.subr.mxu0 0.0
    %2731 = vmatpush2.msra.mxu0 0.0
    %2732 = vmatprep.subr.mxu0 0.0
    %2733 = vmatpush2.msra.mxu0 0.0
    %2734 = vmatprep.subr.mxu0 0.0
    %2735 = vmatpush2.msra.mxu0 0.0
    %2736 = vmatprep.subr.mxu0 0.0
    %2737 = vmatpush2.msra.mxu0 0.0
    %2738 = vmatprep.subr.mxu0 0.0
    %2739 = vmatpush2.msra.mxu0 0.0
    %2740 = vmatprep.subr.mxu0 0.0
    %2741 = vmatpush2.msra.mxu0 0.0
    %2742 = vmatprep.subr.mxu0 0.0
    %2743 = vmatpush2.msra.mxu0 0.0
    %2744 = vmatprep.subr.mxu0 0.0
    %2745 = vmatpush2.msra.mxu0 0.0
    %2746 = vmatprep.subr.mxu0 0.0
    %2747 = vmatpush2.msra.mxu0 0.0
    %2748 = vmatprep.subr.mxu0 0.0
    %2749 = vmatpush2.msra.mxu0 0.0
    %2750 = vmatprep.subr.mxu0 0.0
    %2751 = vmatpush2.msra.mxu0 0.0
    %2752 = vmatprep.subr.mxu0 0.0
    %2753 = vmatpush2.msra.mxu0 0.0
    %2754 = vmatprep.subr.mxu0 0.0
    %2755 = vmatpush2.msra.mxu0 0.0
    %2756 = vmatprep.subr.mxu0 0.0
    %2757 = vmatpush2.msra.mxu0 0.0
    %2758 = vmatprep.subr.mxu0 0.0
    %2759 = vmatpush2.msra.mxu0 0.0
    %2760 = vmatprep.mubr.f32.mxu0 0.0
    %2761 = vmatmul.mubr.f32.gmra.mxu0 %v2570
    %v2762 = vpop.f32.mrf.mxu0
    %v2763 = vadd.f32 0.0, %v2762
    %v2764 = vpop.f32.mrf.mxu0
    %2765 = vdwg.mxu0
    %v2766 = vadd.f32 %v2574, %v2692
    %v2767 = vxor.u32 %v2766, 2147483648
    %v2768 = vmul.f32 %v2767, 1.442695
    %v2769 = vpow.pop %v2768
    %v2770 = vadd.f32 %v2769, 1.0
    %v2771 = vrcp.pop %v2770
    %v2772 = vmul.f32 1.0, %v2771
    %v2773 = vadd.f32 %v2575, %v2694
    %v2774 = vxor.u32 %v2773, 2147483648
    %v2775 = vmul.f32 %v2774, 1.442695
    %v2776 = vpow.pop %v2775
    %v2777 = vadd.f32 %v2776, 1.0
    %v2778 = vrcp.pop %v2777
    %v2779 = vmul.f32 1.0, %v2778
    %v2780 = vadd.f32 %v2763, %v368
    %v2781 = vmul.f32 %v2772, %v2780
    %v2782 = vadd.f32 %v2576, %v2781
    %v2783 = vtanh.pop %v2782
    %v2784 = vsub.f32 1.0, %v2779
    %v2785 = vmul.f32 %v2784, %v2783
    %v2786 = vmul.f32 %v2779, %v2570
    %v2787 = vadd.f32 %v2785, %v2786
    %s2788 = scalar_lea.vmem [#allocation3], 56
    %2789 = vst [vmem:[%s2788] sm:$0xff] %v2787
    %s2790 = scalar_lea.vmem [#allocation2], 144
    %v2791 = vld [vmem:[%s2790] sm:$0xff]
    %v2792 = vld [vmem:[%s2790 + $0x8] sm:$0xff]
    %v2793 = vld [vmem:[%s2790 + $0x10] sm:$0xff]
    %v2794 = vld [vmem:[#allocation10] sm:$0xff]
    %v2795 = vld [vmem:[#allocation10 + $0x8] sm:$0xff]
    %v2796 = vld [vmem:[#allocation10 + $0x10] sm:$0xff]
    %v2797 = vld [vmem:[#allocation10 + $0x18] sm:$0xff]
    %v2798 = vld [vmem:[#allocation10 + $0x20] sm:$0xff]
    %v2799 = vld [vmem:[#allocation10 + $0x28] sm:$0xff]
    %v2800 = vld [vmem:[#allocation10 + $0x30] sm:$0xff]
    %v2801 = vld [vmem:[#allocation10 + $0x38] sm:$0xff]
    %v2802 = vld [vmem:[#allocation10 + $0x40] sm:$0xff]
    %v2803 = vld [vmem:[#allocation10 + $0x48] sm:$0xff]
    %v2804 = vld [vmem:[#allocation10 + $0x50] sm:$0xff]
    %v2805 = vld [vmem:[#allocation10 + $0x58] sm:$0xff]
    %v2806 = vld [vmem:[#allocation10 + $0x60] sm:$0xff]
    %v2807 = vld [vmem:[#allocation10 + $0x68] sm:$0xff]
    %v2808 = vld [vmem:[#allocation10 + $0x70] sm:$0xff]
    %v2809 = vld [vmem:[#allocation10 + $0x78] sm:$0xff]
    %v2810 = vld [vmem:[#allocation10 + $0x80] sm:$0xff]
    %v2811 = vld [vmem:[#allocation10 + $0x88] sm:$0xff]
    %v2812 = vld [vmem:[#allocation10 + $0x90] sm:$0xff]
    %v2813 = vld [vmem:[#allocation10 + $0x98] sm:$0xff]
    %v2814 = vld [vmem:[#allocation10 + $0xa0] sm:$0xff]
    %v2815 = vld [vmem:[#allocation10 + $0xa8] sm:$0xff]
    %v2816 = vld [vmem:[#allocation10 + $0xb0] sm:$0xff]
    %v2817 = vld [vmem:[#allocation10 + $0xb8] sm:$0xff]
    %v2818 = vld [vmem:[#allocation10 + $0xc0] sm:$0xff]
    %v2819 = vld [vmem:[#allocation10 + $0xc8] sm:$0xff]
    %v2820 = vld [vmem:[#allocation10 + $0xd0] sm:$0xff]
    %v2821 = vld [vmem:[#allocation10 + $0xd8] sm:$0xff]
    %v2822 = vld [vmem:[#allocation10 + $0xe0] sm:$0xff]
    %v2823 = vld [vmem:[#allocation10 + $0xe8] sm:$0xff]
    %v2824 = vld [vmem:[#allocation10 + $0xf0] sm:$0xff]
    %v2825 = vld [vmem:[#allocation10 + $0xf8] sm:$0xff]
    %v2826 = vld [vmem:[#allocation10 + $0x100] sm:$0xff]
    %v2827 = vld [vmem:[#allocation10 + $0x108] sm:$0xff]
    %v2828 = vld [vmem:[#allocation10 + $0x110] sm:$0xff]
    %v2829 = vld [vmem:[#allocation10 + $0x118] sm:$0xff]
    %v2830 = vld [vmem:[#allocation10 + $0x120] sm:$0xff]
    %v2831 = vld [vmem:[#allocation10 + $0x128] sm:$0xff]
    %v2832 = vld [vmem:[#allocation10 + $0x130] sm:$0xff]
    %v2833 = vld [vmem:[#allocation10 + $0x138] sm:$0xff]
    %v2834 = vld [vmem:[#allocation10 + $0x140] sm:$0xff]
    %v2835 = vld [vmem:[#allocation10 + $0x148] sm:$0xff]
    %v2836 = vld [vmem:[#allocation10 + $0x150] sm:$0xff]
    %v2837 = vld [vmem:[#allocation10 + $0x158] sm:$0xff]
    %v2838 = vld [vmem:[#allocation10 + $0x160] sm:$0xff]
    %v2839 = vld [vmem:[#allocation10 + $0x168] sm:$0xff]
    %v2840 = vld [vmem:[#allocation10 + $0x170] sm:$0xff]
    %v2841 = vld [vmem:[#allocation10 + $0x178] sm:$0xff]
    %2842 = vmatprep.subr.mxu0 %v2840
    %2843 = vmatpush1.msra.mxu0 %v2839
    %2844 = vmatprep.subr.mxu0 %v2837
    %2845 = vmatpush1.msra.mxu0 %v2836
    %2846 = vmatprep.subr.mxu0 %v2834
    %2847 = vmatpush1.msra.mxu0 %v2833
    %2848 = vmatprep.subr.mxu0 %v2831
    %2849 = vmatpush1.msra.mxu0 %v2830
    %2850 = vmatprep.subr.mxu0 %v2828
    %2851 = vmatpush1.msra.mxu0 %v2827
    %2852 = vmatprep.subr.mxu0 %v2825
    %2853 = vmatpush1.msra.mxu0 %v2824
    %2854 = vmatprep.subr.mxu0 %v2822
    %2855 = vmatpush1.msra.mxu0 %v2821
    %2856 = vmatprep.subr.mxu0 %v2819
    %2857 = vmatpush1.msra.mxu0 %v2818
    %2858 = vmatprep.subr.mxu0 %v2816
    %2859 = vmatpush1.msra.mxu0 %v2815
    %2860 = vmatprep.subr.mxu0 %v2813
    %2861 = vmatpush1.msra.mxu0 %v2812
    %2862 = vmatprep.subr.mxu0 %v2810
    %2863 = vmatpush1.msra.mxu0 %v2809
    %2864 = vmatprep.subr.mxu0 %v2807
    %2865 = vmatpush1.msra.mxu0 %v2806
    %2866 = vmatprep.subr.mxu0 %v2804
    %2867 = vmatpush1.msra.mxu0 %v2803
    %2868 = vmatprep.subr.mxu0 %v2801
    %2869 = vmatpush1.msra.mxu0 %v2800
    %2870 = vmatprep.subr.mxu0 %v2798
    %2871 = vmatpush1.msra.mxu0 %v2797
    %2872 = vmatprep.subr.mxu0 %v2795
    %2873 = vmatpush1.msra.mxu0 %v2794
    %2874 = vmatprep.subr.mxu0 0.0
    %2875 = vmatpush2.msra.mxu0 0.0
    %2876 = vmatprep.subr.mxu0 0.0
    %2877 = vmatpush2.msra.mxu0 0.0
    %2878 = vmatprep.subr.mxu0 0.0
    %2879 = vmatpush2.msra.mxu0 0.0
    %2880 = vmatprep.subr.mxu0 0.0
    %2881 = vmatpush2.msra.mxu0 0.0
    %2882 = vmatprep.subr.mxu0 0.0
    %2883 = vmatpush2.msra.mxu0 0.0
    %2884 = vmatprep.subr.mxu0 0.0
    %2885 = vmatpush2.msra.mxu0 0.0
    %2886 = vmatprep.subr.mxu0 0.0
    %2887 = vmatpush2.msra.mxu0 0.0
    %2888 = vmatprep.subr.mxu0 0.0
    %2889 = vmatpush2.msra.mxu0 0.0
    %2890 = vmatprep.subr.mxu0 0.0
    %2891 = vmatpush2.msra.mxu0 0.0
    %2892 = vmatprep.subr.mxu0 0.0
    %2893 = vmatpush2.msra.mxu0 0.0
    %2894 = vmatprep.subr.mxu0 0.0
    %2895 = vmatpush2.msra.mxu0 0.0
    %2896 = vmatprep.subr.mxu0 0.0
    %2897 = vmatpush2.msra.mxu0 0.0
    %2898 = vmatprep.subr.mxu0 0.0
    %2899 = vmatpush2.msra.mxu0 0.0
    %2900 = vmatprep.subr.mxu0 0.0
    %2901 = vmatpush2.msra.mxu0 0.0
    %2902 = vmatprep.subr.mxu0 0.0
    %2903 = vmatpush2.msra.mxu0 0.0
    %2904 = vmatprep.subr.mxu0 0.0
    %2905 = vmatpush2.msra.mxu0 0.0
    %2906 = vmatprep.mubr.f32.mxu0 0.0
    %2907 = vmatmul.mubr.f32.gmra.mxu0 %v2787
    %v2908 = vpop.f32.mrf.mxu0
    %v2909 = vadd.f32 0.0, %v2908
    %v2910 = vpop.f32.mrf.mxu0
    %v2911 = vadd.f32 0.0, %v2910
    %2912 = vdwg.mxu0
    %2913 = vmatprep.subr.mxu0 0.0
    %2914 = vmatpush1.msra.mxu0 %v2841
    %2915 = vmatprep.subr.mxu0 0.0
    %2916 = vmatpush1.msra.mxu0 %v2838
    %2917 = vmatprep.subr.mxu0 0.0
    %2918 = vmatpush1.msra.mxu0 %v2835
    %2919 = vmatprep.subr.mxu0 0.0
    %2920 = vmatpush1.msra.mxu0 %v2832
    %2921 = vmatprep.subr.mxu0 0.0
    %2922 = vmatpush1.msra.mxu0 %v2829
    %2923 = vmatprep.subr.mxu0 0.0
    %2924 = vmatpush1.msra.mxu0 %v2826
    %2925 = vmatprep.subr.mxu0 0.0
    %2926 = vmatpush1.msra.mxu0 %v2823
    %2927 = vmatprep.subr.mxu0 0.0
    %2928 = vmatpush1.msra.mxu0 %v2820
    %2929 = vmatprep.subr.mxu0 0.0
    %2930 = vmatpush1.msra.mxu0 %v2817
    %2931 = vmatprep.subr.mxu0 0.0
    %2932 = vmatpush1.msra.mxu0 %v2814
    %2933 = vmatprep.subr.mxu0 0.0
    %2934 = vmatpush1.msra.mxu0 %v2811
    %2935 = vmatprep.subr.mxu0 0.0
    %2936 = vmatpush1.msra.mxu0 %v2808
    %2937 = vmatprep.subr.mxu0 0.0
    %2938 = vmatpush1.msra.mxu0 %v2805
    %2939 = vmatprep.subr.mxu0 0.0
    %2940 = vmatpush1.msra.mxu0 %v2802
    %2941 = vmatprep.subr.mxu0 0.0
    %2942 = vmatpush1.msra.mxu0 %v2799
    %2943 = vmatprep.subr.mxu0 0.0
    %2944 = vmatpush1.msra.mxu0 %v2796
    %2945 = vmatprep.subr.mxu0 0.0
    %2946 = vmatpush2.msra.mxu0 0.0
    %2947 = vmatprep.subr.mxu0 0.0
    %2948 = vmatpush2.msra.mxu0 0.0
    %2949 = vmatprep.subr.mxu0 0.0
    %2950 = vmatpush2.msra.mxu0 0.0
    %2951 = vmatprep.subr.mxu0 0.0
    %2952 = vmatpush2.msra.mxu0 0.0
    %2953 = vmatprep.subr.mxu0 0.0
    %2954 = vmatpush2.msra.mxu0 0.0
    %2955 = vmatprep.subr.mxu0 0.0
    %2956 = vmatpush2.msra.mxu0 0.0
    %2957 = vmatprep.subr.mxu0 0.0
    %2958 = vmatpush2.msra.mxu0 0.0
    %2959 = vmatprep.subr.mxu0 0.0
    %2960 = vmatpush2.msra.mxu0 0.0
    %2961 = vmatprep.subr.mxu0 0.0
    %2962 = vmatpush2.msra.mxu0 0.0
    %2963 = vmatprep.subr.mxu0 0.0
    %2964 = vmatpush2.msra.mxu0 0.0
    %2965 = vmatprep.subr.mxu0 0.0
    %2966 = vmatpush2.msra.mxu0 0.0
    %2967 = vmatprep.subr.mxu0 0.0
    %2968 = vmatpush2.msra.mxu0 0.0
    %2969 = vmatprep.subr.mxu0 0.0
    %2970 = vmatpush2.msra.mxu0 0.0
    %2971 = vmatprep.subr.mxu0 0.0
    %2972 = vmatpush2.msra.mxu0 0.0
    %2973 = vmatprep.subr.mxu0 0.0
    %2974 = vmatpush2.msra.mxu0 0.0
    %2975 = vmatprep.subr.mxu0 0.0
    %2976 = vmatpush2.msra.mxu0 0.0
    %2977 = vmatprep.mubr.f32.mxu0 0.0
    %2978 = vmatmul.mubr.f32.gmra.mxu0 %v2787
    %v2979 = vpop.f32.mrf.mxu0
    %v2980 = vadd.f32 0.0, %v2979
    %v2981 = vpop.f32.mrf.mxu0
    %2982 = vdwg.mxu0
    %v2983 = vadd.f32 %v2791, %v2909
    %v2984 = vxor.u32 %v2983, 2147483648
    %v2985 = vmul.f32 %v2984, 1.442695
    %v2986 = vpow.pop %v2985
    %v2987 = vadd.f32 %v2986, 1.0
    %v2988 = vrcp.pop %v2987
    %v2989 = vmul.f32 1.0, %v2988
    %v2990 = vadd.f32 %v2792, %v2911
    %v2991 = vxor.u32 %v2990, 2147483648
    %v2992 = vmul.f32 %v2991, 1.442695
    %v2993 = vpow.pop %v2992
    %v2994 = vadd.f32 %v2993, 1.0
    %v2995 = vrcp.pop %v2994
    %v2996 = vmul.f32 1.0, %v2995
    %v2997 = vadd.f32 %v2980, %v368
    %v2998 = vmul.f32 %v2989, %v2997
    %v2999 = vadd.f32 %v2793, %v2998
    %v3000 = vtanh.pop %v2999
    %v3001 = vsub.f32 1.0, %v2996
    %v3002 = vmul.f32 %v3001, %v3000
    %v3003 = vmul.f32 %v2996, %v2787
    %v3004 = vadd.f32 %v3002, %v3003
    %s3005 = scalar_lea.vmem [#allocation3], 48
    %3006 = vst [vmem:[%s3005] sm:$0xff] %v3004
    %s3007 = scalar_lea.vmem [#allocation2], 120
    %v3008 = vld [vmem:[%s3007] sm:$0xff]
    %v3009 = vld [vmem:[%s3007 + $0x8] sm:$0xff]
    %v3010 = vld [vmem:[%s3007 + $0x10] sm:$0xff]
    %v3011 = vld [vmem:[#allocation10] sm:$0xff]
    %v3012 = vld [vmem:[#allocation10 + $0x8] sm:$0xff]
    %v3013 = vld [vmem:[#allocation10 + $0x10] sm:$0xff]
    %v3014 = vld [vmem:[#allocation10 + $0x18] sm:$0xff]
    %v3015 = vld [vmem:[#allocation10 + $0x20] sm:$0xff]
    %v3016 = vld [vmem:[#allocation10 + $0x28] sm:$0xff]
    %v3017 = vld [vmem:[#allocation10 + $0x30] sm:$0xff]
    %v3018 = vld [vmem:[#allocation10 + $0x38] sm:$0xff]
    %v3019 = vld [vmem:[#allocation10 + $0x40] sm:$0xff]
    %v3020 = vld [vmem:[#allocation10 + $0x48] sm:$0xff]
    %v3021 = vld [vmem:[#allocation10 + $0x50] sm:$0xff]
    %v3022 = vld [vmem:[#allocation10 + $0x58] sm:$0xff]
    %v3023 = vld [vmem:[#allocation10 + $0x60] sm:$0xff]
    %v3024 = vld [vmem:[#allocation10 + $0x68] sm:$0xff]
    %v3025 = vld [vmem:[#allocation10 + $0x70] sm:$0xff]
    %v3026 = vld [vmem:[#allocation10 + $0x78] sm:$0xff]
    %v3027 = vld [vmem:[#allocation10 + $0x80] sm:$0xff]
    %v3028 = vld [vmem:[#allocation10 + $0x88] sm:$0xff]
    %v3029 = vld [vmem:[#allocation10 + $0x90] sm:$0xff]
    %v3030 = vld [vmem:[#allocation10 + $0x98] sm:$0xff]
    %v3031 = vld [vmem:[#allocation10 + $0xa0] sm:$0xff]
    %v3032 = vld [vmem:[#allocation10 + $0xa8] sm:$0xff]
    %v3033 = vld [vmem:[#allocation10 + $0xb0] sm:$0xff]
    %v3034 = vld [vmem:[#allocation10 + $0xb8] sm:$0xff]
    %v3035 = vld [vmem:[#allocation10 + $0xc0] sm:$0xff]
    %v3036 = vld [vmem:[#allocation10 + $0xc8] sm:$0xff]
    %v3037 = vld [vmem:[#allocation10 + $0xd0] sm:$0xff]
    %v3038 = vld [vmem:[#allocation10 + $0xd8] sm:$0xff]
    %v3039 = vld [vmem:[#allocation10 + $0xe0] sm:$0xff]
    %v3040 = vld [vmem:[#allocation10 + $0xe8] sm:$0xff]
    %v3041 = vld [vmem:[#allocation10 + $0xf0] sm:$0xff]
    %v3042 = vld [vmem:[#allocation10 + $0xf8] sm:$0xff]
    %v3043 = vld [vmem:[#allocation10 + $0x100] sm:$0xff]
    %v3044 = vld [vmem:[#allocation10 + $0x108] sm:$0xff]
    %v3045 = vld [vmem:[#allocation10 + $0x110] sm:$0xff]
    %v3046 = vld [vmem:[#allocation10 + $0x118] sm:$0xff]
    %v3047 = vld [vmem:[#allocation10 + $0x120] sm:$0xff]
    %v3048 = vld [vmem:[#allocation10 + $0x128] sm:$0xff]
    %v3049 = vld [vmem:[#allocation10 + $0x130] sm:$0xff]
    %v3050 = vld [vmem:[#allocation10 + $0x138] sm:$0xff]
    %v3051 = vld [vmem:[#allocation10 + $0x140] sm:$0xff]
    %v3052 = vld [vmem:[#allocation10 + $0x148] sm:$0xff]
    %v3053 = vld [vmem:[#allocation10 + $0x150] sm:$0xff]
    %v3054 = vld [vmem:[#allocation10 + $0x158] sm:$0xff]
    %v3055 = vld [vmem:[#allocation10 + $0x160] sm:$0xff]
    %v3056 = vld [vmem:[#allocation10 + $0x168] sm:$0xff]
    %v3057 = vld [vmem:[#allocation10 + $0x170] sm:$0xff]
    %v3058 = vld [vmem:[#allocation10 + $0x178] sm:$0xff]
    %3059 = vmatprep.subr.mxu0 %v3057
    %3060 = vmatpush1.msra.mxu0 %v3056
    %3061 = vmatprep.subr.mxu0 %v3054
    %3062 = vmatpush1.msra.mxu0 %v3053
    %3063 = vmatprep.subr.mxu0 %v3051
    %3064 = vmatpush1.msra.mxu0 %v3050
    %3065 = vmatprep.subr.mxu0 %v3048
    %3066 = vmatpush1.msra.mxu0 %v3047
    %3067 = vmatprep.subr.mxu0 %v3045
    %3068 = vmatpush1.msra.mxu0 %v3044
    %3069 = vmatprep.subr.mxu0 %v3042
    %3070 = vmatpush1.msra.mxu0 %v3041
    %3071 = vmatprep.subr.mxu0 %v3039
    %3072 = vmatpush1.msra.mxu0 %v3038
    %3073 = vmatprep.subr.mxu0 %v3036
    %3074 = vmatpush1.msra.mxu0 %v3035
    %3075 = vmatprep.subr.mxu0 %v3033
    %3076 = vmatpush1.msra.mxu0 %v3032
    %3077 = vmatprep.subr.mxu0 %v3030
    %3078 = vmatpush1.msra.mxu0 %v3029
    %3079 = vmatprep.subr.mxu0 %v3027
    %3080 = vmatpush1.msra.mxu0 %v3026
    %3081 = vmatprep.subr.mxu0 %v3024
    %3082 = vmatpush1.msra.mxu0 %v3023
    %3083 = vmatprep.subr.mxu0 %v3021
    %3084 = vmatpush1.msra.mxu0 %v3020
    %3085 = vmatprep.subr.mxu0 %v3018
    %3086 = vmatpush1.msra.mxu0 %v3017
    %3087 = vmatprep.subr.mxu0 %v3015
    %3088 = vmatpush1.msra.mxu0 %v3014
    %3089 = vmatprep.subr.mxu0 %v3012
    %3090 = vmatpush1.msra.mxu0 %v3011
    %3091 = vmatprep.subr.mxu0 0.0
    %3092 = vmatpush2.msra.mxu0 0.0
    %3093 = vmatprep.subr.mxu0 0.0
    %3094 = vmatpush2.msra.mxu0 0.0
    %3095 = vmatprep.subr.mxu0 0.0
    %3096 = vmatpush2.msra.mxu0 0.0
    %3097 = vmatprep.subr.mxu0 0.0
    %3098 = vmatpush2.msra.mxu0 0.0
    %3099 = vmatprep.subr.mxu0 0.0
    %3100 = vmatpush2.msra.mxu0 0.0
    %3101 = vmatprep.subr.mxu0 0.0
    %3102 = vmatpush2.msra.mxu0 0.0
    %3103 = vmatprep.subr.mxu0 0.0
    %3104 = vmatpush2.msra.mxu0 0.0
    %3105 = vmatprep.subr.mxu0 0.0
    %3106 = vmatpush2.msra.mxu0 0.0
    %3107 = vmatprep.subr.mxu0 0.0
    %3108 = vmatpush2.msra.mxu0 0.0
    %3109 = vmatprep.subr.mxu0 0.0
    %3110 = vmatpush2.msra.mxu0 0.0
    %3111 = vmatprep.subr.mxu0 0.0
    %3112 = vmatpush2.msra.mxu0 0.0
    %3113 = vmatprep.subr.mxu0 0.0
    %3114 = vmatpush2.msra.mxu0 0.0
    %3115 = vmatprep.subr.mxu0 0.0
    %3116 = vmatpush2.msra.mxu0 0.0
    %3117 = vmatprep.subr.mxu0 0.0
    %3118 = vmatpush2.msra.mxu0 0.0
    %3119 = vmatprep.subr.mxu0 0.0
    %3120 = vmatpush2.msra.mxu0 0.0
    %3121 = vmatprep.subr.mxu0 0.0
    %3122 = vmatpush2.msra.mxu0 0.0
    %3123 = vmatprep.mubr.f32.mxu0 0.0
    %3124 = vmatmul.mubr.f32.gmra.mxu0 %v3004
    %v3125 = vpop.f32.mrf.mxu0
    %v3126 = vadd.f32 0.0, %v3125
    %v3127 = vpop.f32.mrf.mxu0
    %v3128 = vadd.f32 0.0, %v3127
    %3129 = vdwg.mxu0
    %3130 = vmatprep.subr.mxu0 0.0
    %3131 = vmatpush1.msra.mxu0 %v3058
    %3132 = vmatprep.subr.mxu0 0.0
    %3133 = vmatpush1.msra.mxu0 %v3055
    %3134 = vmatprep.subr.mxu0 0.0
    %3135 = vmatpush1.msra.mxu0 %v3052
    %3136 = vmatprep.subr.mxu0 0.0
    %3137 = vmatpush1.msra.mxu0 %v3049
    %3138 = vmatprep.subr.mxu0 0.0
    %3139 = vmatpush1.msra.mxu0 %v3046
    %3140 = vmatprep.subr.mxu0 0.0
    %3141 = vmatpush1.msra.mxu0 %v3043
    %3142 = vmatprep.subr.mxu0 0.0
    %3143 = vmatpush1.msra.mxu0 %v3040
    %3144 = vmatprep.subr.mxu0 0.0
    %3145 = vmatpush1.msra.mxu0 %v3037
    %3146 = vmatprep.subr.mxu0 0.0
    %3147 = vmatpush1.msra.mxu0 %v3034
    %3148 = vmatprep.subr.mxu0 0.0
    %3149 = vmatpush1.msra.mxu0 %v3031
    %3150 = vmatprep.subr.mxu0 0.0
    %3151 = vmatpush1.msra.mxu0 %v3028
    %3152 = vmatprep.subr.mxu0 0.0
    %3153 = vmatpush1.msra.mxu0 %v3025
    %3154 = vmatprep.subr.mxu0 0.0
    %3155 = vmatpush1.msra.mxu0 %v3022
    %3156 = vmatprep.subr.mxu0 0.0
    %3157 = vmatpush1.msra.mxu0 %v3019
    %3158 = vmatprep.subr.mxu0 0.0
    %3159 = vmatpush1.msra.mxu0 %v3016
    %3160 = vmatprep.subr.mxu0 0.0
    %3161 = vmatpush1.msra.mxu0 %v3013
    %3162 = vmatprep.subr.mxu0 0.0
    %3163 = vmatpush2.msra.mxu0 0.0
    %3164 = vmatprep.subr.mxu0 0.0
    %3165 = vmatpush2.msra.mxu0 0.0
    %3166 = vmatprep.subr.mxu0 0.0
    %3167 = vmatpush2.msra.mxu0 0.0
    %3168 = vmatprep.subr.mxu0 0.0
    %3169 = vmatpush2.msra.mxu0 0.0
    %3170 = vmatprep.subr.mxu0 0.0
    %3171 = vmatpush2.msra.mxu0 0.0
    %3172 = vmatprep.subr.mxu0 0.0
    %3173 = vmatpush2.msra.mxu0 0.0
    %3174 = vmatprep.subr.mxu0 0.0
    %3175 = vmatpush2.msra.mxu0 0.0
    %3176 = vmatprep.subr.mxu0 0.0
    %3177 = vmatpush2.msra.mxu0 0.0
    %3178 = vmatprep.subr.mxu0 0.0
    %3179 = vmatpush2.msra.mxu0 0.0
    %3180 = vmatprep.subr.mxu0 0.0
    %3181 = vmatpush2.msra.mxu0 0.0
    %3182 = vmatprep.subr.mxu0 0.0
    %3183 = vmatpush2.msra.mxu0 0.0
    %3184 = vmatprep.subr.mxu0 0.0
    %3185 = vmatpush2.msra.mxu0 0.0
    %3186 = vmatprep.subr.mxu0 0.0
    %3187 = vmatpush2.msra.mxu0 0.0
    %3188 = vmatprep.subr.mxu0 0.0
    %3189 = vmatpush2.msra.mxu0 0.0
    %3190 = vmatprep.subr.mxu0 0.0
    %3191 = vmatpush2.msra.mxu0 0.0
    %3192 = vmatprep.subr.mxu0 0.0
    %3193 = vmatpush2.msra.mxu0 0.0
    %3194 = vmatprep.mubr.f32.mxu0 0.0
    %3195 = vmatmul.mubr.f32.gmra.mxu0 %v3004
    %v3196 = vpop.f32.mrf.mxu0
    %v3197 = vadd.f32 0.0, %v3196
    %v3198 = vpop.f32.mrf.mxu0
    %3199 = vdwg.mxu0
    %v3200 = vadd.f32 %v3008, %v3126
    %v3201 = vxor.u32 %v3200, 2147483648
    %v3202 = vmul.f32 %v3201, 1.442695
    %v3203 = vpow.pop %v3202
    %v3204 = vadd.f32 %v3203, 1.0
    %v3205 = vrcp.pop %v3204
    %v3206 = vmul.f32 1.0, %v3205
    %v3207 = vadd.f32 %v3009, %v3128
    %v3208 = vxor.u32 %v3207, 2147483648
    %v3209 = vmul.f32 %v3208, 1.442695
    %v3210 = vpow.pop %v3209
    %v3211 = vadd.f32 %v3210, 1.0
    %v3212 = vrcp.pop %v3211
    %v3213 = vmul.f32 1.0, %v3212
    %v3214 = vadd.f32 %v3197, %v368
    %v3215 = vmul.f32 %v3206, %v3214
    %v3216 = vadd.f32 %v3010, %v3215
    %v3217 = vtanh.pop %v3216
    %v3218 = vsub.f32 1.0, %v3213
    %v3219 = vmul.f32 %v3218, %v3217
    %v3220 = vmul.f32 %v3213, %v3004
    %v3221 = vadd.f32 %v3219, %v3220
    %s3222 = scalar_lea.vmem [#allocation3], 40
    %3223 = vst [vmem:[%s3222] sm:$0xff] %v3221
    %s3224 = scalar_lea.vmem [#allocation2], 96
    %v3225 = vld [vmem:[%s3224] sm:$0xff]
    %v3226 = vld [vmem:[%s3224 + $0x8] sm:$0xff]
    %v3227 = vld [vmem:[%s3224 + $0x10] sm:$0xff]
    %v3228 = vld [vmem:[#allocation10] sm:$0xff]
    %v3229 = vld [vmem:[#allocation10 + $0x8] sm:$0xff]
    %v3230 = vld [vmem:[#allocation10 + $0x10] sm:$0xff]
    %v3231 = vld [vmem:[#allocation10 + $0x18] sm:$0xff]
    %v3232 = vld [vmem:[#allocation10 + $0x20] sm:$0xff]
    %v3233 = vld [vmem:[#allocation10 + $0x28] sm:$0xff]
    %v3234 = vld [vmem:[#allocation10 + $0x30] sm:$0xff]
    %v3235 = vld [vmem:[#allocation10 + $0x38] sm:$0xff]
    %v3236 = vld [vmem:[#allocation10 + $0x40] sm:$0xff]
    %v3237 = vld [vmem:[#allocation10 + $0x48] sm:$0xff]
    %v3238 = vld [vmem:[#allocation10 + $0x50] sm:$0xff]
    %v3239 = vld [vmem:[#allocation10 + $0x58] sm:$0xff]
    %v3240 = vld [vmem:[#allocation10 + $0x60] sm:$0xff]
    %v3241 = vld [vmem:[#allocation10 + $0x68] sm:$0xff]
    %v3242 = vld [vmem:[#allocation10 + $0x70] sm:$0xff]
    %v3243 = vld [vmem:[#allocation10 + $0x78] sm:$0xff]
    %v3244 = vld [vmem:[#allocation10 + $0x80] sm:$0xff]
    %v3245 = vld [vmem:[#allocation10 + $0x88] sm:$0xff]
    %v3246 = vld [vmem:[#allocation10 + $0x90] sm:$0xff]
    %v3247 = vld [vmem:[#allocation10 + $0x98] sm:$0xff]
    %v3248 = vld [vmem:[#allocation10 + $0xa0] sm:$0xff]
    %v3249 = vld [vmem:[#allocation10 + $0xa8] sm:$0xff]
    %v3250 = vld [vmem:[#allocation10 + $0xb0] sm:$0xff]
    %v3251 = vld [vmem:[#allocation10 + $0xb8] sm:$0xff]
    %v3252 = vld [vmem:[#allocation10 + $0xc0] sm:$0xff]
    %v3253 = vld [vmem:[#allocation10 + $0xc8] sm:$0xff]
    %v3254 = vld [vmem:[#allocation10 + $0xd0] sm:$0xff]
    %v3255 = vld [vmem:[#allocation10 + $0xd8] sm:$0xff]
    %v3256 = vld [vmem:[#allocation10 + $0xe0] sm:$0xff]
    %v3257 = vld [vmem:[#allocation10 + $0xe8] sm:$0xff]
    %v3258 = vld [vmem:[#allocation10 + $0xf0] sm:$0xff]
    %v3259 = vld [vmem:[#allocation10 + $0xf8] sm:$0xff]
    %v3260 = vld [vmem:[#allocation10 + $0x100] sm:$0xff]
    %v3261 = vld [vmem:[#allocation10 + $0x108] sm:$0xff]
    %v3262 = vld [vmem:[#allocation10 + $0x110] sm:$0xff]
    %v3263 = vld [vmem:[#allocation10 + $0x118] sm:$0xff]
    %v3264 = vld [vmem:[#allocation10 + $0x120] sm:$0xff]
    %v3265 = vld [vmem:[#allocation10 + $0x128] sm:$0xff]
    %v3266 = vld [vmem:[#allocation10 + $0x130] sm:$0xff]
    %v3267 = vld [vmem:[#allocation10 + $0x138] sm:$0xff]
    %v3268 = vld [vmem:[#allocation10 + $0x140] sm:$0xff]
    %v3269 = vld [vmem:[#allocation10 + $0x148] sm:$0xff]
    %v3270 = vld [vmem:[#allocation10 + $0x150] sm:$0xff]
    %v3271 = vld [vmem:[#allocation10 + $0x158] sm:$0xff]
    %v3272 = vld [vmem:[#allocation10 + $0x160] sm:$0xff]
    %v3273 = vld [vmem:[#allocation10 + $0x168] sm:$0xff]
    %v3274 = vld [vmem:[#allocation10 + $0x170] sm:$0xff]
    %v3275 = vld [vmem:[#allocation10 + $0x178] sm:$0xff]
    %3276 = vmatprep.subr.mxu0 %v3274
    %3277 = vmatpush1.msra.mxu0 %v3273
    %3278 = vmatprep.subr.mxu0 %v3271
    %3279 = vmatpush1.msra.mxu0 %v3270
    %3280 = vmatprep.subr.mxu0 %v3268
    %3281 = vmatpush1.msra.mxu0 %v3267
    %3282 = vmatprep.subr.mxu0 %v3265
    %3283 = vmatpush1.msra.mxu0 %v3264
    %3284 = vmatprep.subr.mxu0 %v3262
    %3285 = vmatpush1.msra.mxu0 %v3261
    %3286 = vmatprep.subr.mxu0 %v3259
    %3287 = vmatpush1.msra.mxu0 %v3258
    %3288 = vmatprep.subr.mxu0 %v3256
    %3289 = vmatpush1.msra.mxu0 %v3255
    %3290 = vmatprep.subr.mxu0 %v3253
    %3291 = vmatpush1.msra.mxu0 %v3252
    %3292 = vmatprep.subr.mxu0 %v3250
    %3293 = vmatpush1.msra.mxu0 %v3249
    %3294 = vmatprep.subr.mxu0 %v3247
    %3295 = vmatpush1.msra.mxu0 %v3246
    %3296 = vmatprep.subr.mxu0 %v3244
    %3297 = vmatpush1.msra.mxu0 %v3243
    %3298 = vmatprep.subr.mxu0 %v3241
    %3299 = vmatpush1.msra.mxu0 %v3240
    %3300 = vmatprep.subr.mxu0 %v3238
    %3301 = vmatpush1.msra.mxu0 %v3237
    %3302 = vmatprep.subr.mxu0 %v3235
    %3303 = vmatpush1.msra.mxu0 %v3234
    %3304 = vmatprep.subr.mxu0 %v3232
    %3305 = vmatpush1.msra.mxu0 %v3231
    %3306 = vmatprep.subr.mxu0 %v3229
    %3307 = vmatpush1.msra.mxu0 %v3228
    %3308 = vmatprep.subr.mxu0 0.0
    %3309 = vmatpush2.msra.mxu0 0.0
    %3310 = vmatprep.subr.mxu0 0.0
    %3311 = vmatpush2.msra.mxu0 0.0
    %3312 = vmatprep.subr.mxu0 0.0
    %3313 = vmatpush2.msra.mxu0 0.0
    %3314 = vmatprep.subr.mxu0 0.0
    %3315 = vmatpush2.msra.mxu0 0.0
    %3316 = vmatprep.subr.mxu0 0.0
    %3317 = vmatpush2.msra.mxu0 0.0
    %3318 = vmatprep.subr.mxu0 0.0
    %3319 = vmatpush2.msra.mxu0 0.0
    %3320 = vmatprep.subr.mxu0 0.0
    %3321 = vmatpush2.msra.mxu0 0.0
    %3322 = vmatprep.subr.mxu0 0.0
    %3323 = vmatpush2.msra.mxu0 0.0
    %3324 = vmatprep.subr.mxu0 0.0
    %3325 = vmatpush2.msra.mxu0 0.0
    %3326 = vmatprep.subr.mxu0 0.0
    %3327 = vmatpush2.msra.mxu0 0.0
    %3328 = vmatprep.subr.mxu0 0.0
    %3329 = vmatpush2.msra.mxu0 0.0
    %3330 = vmatprep.subr.mxu0 0.0
    %3331 = vmatpush2.msra.mxu0 0.0
    %3332 = vmatprep.subr.mxu0 0.0
    %3333 = vmatpush2.msra.mxu0 0.0
    %3334 = vmatprep.subr.mxu0 0.0
    %3335 = vmatpush2.msra.mxu0 0.0
    %3336 = vmatprep.subr.mxu0 0.0
    %3337 = vmatpush2.msra.mxu0 0.0
    %3338 = vmatprep.subr.mxu0 0.0
    %3339 = vmatpush2.msra.mxu0 0.0
    %3340 = vmatprep.mubr.f32.mxu0 0.0
    %3341 = vmatmul.mubr.f32.gmra.mxu0 %v3221
    %v3342 = vpop.f32.mrf.mxu0
    %v3343 = vadd.f32 0.0, %v3342
    %v3344 = vpop.f32.mrf.mxu0
    %v3345 = vadd.f32 0.0, %v3344
    %3346 = vdwg.mxu0
    %3347 = vmatprep.subr.mxu0 0.0
    %3348 = vmatpush1.msra.mxu0 %v3275
    %3349 = vmatprep.subr.mxu0 0.0
    %3350 = vmatpush1.msra.mxu0 %v3272
    %3351 = vmatprep.subr.mxu0 0.0
    %3352 = vmatpush1.msra.mxu0 %v3269
    %3353 = vmatprep.subr.mxu0 0.0
    %3354 = vmatpush1.msra.mxu0 %v3266
    %3355 = vmatprep.subr.mxu0 0.0
    %3356 = vmatpush1.msra.mxu0 %v3263
    %3357 = vmatprep.subr.mxu0 0.0
    %3358 = vmatpush1.msra.mxu0 %v3260
    %3359 = vmatprep.subr.mxu0 0.0
    %3360 = vmatpush1.msra.mxu0 %v3257
    %3361 = vmatprep.subr.mxu0 0.0
    %3362 = vmatpush1.msra.mxu0 %v3254
    %3363 = vmatprep.subr.mxu0 0.0
    %3364 = vmatpush1.msra.mxu0 %v3251
    %3365 = vmatprep.subr.mxu0 0.0
    %3366 = vmatpush1.msra.mxu0 %v3248
    %3367 = vmatprep.subr.mxu0 0.0
    %3368 = vmatpush1.msra.mxu0 %v3245
    %3369 = vmatprep.subr.mxu0 0.0
    %3370 = vmatpush1.msra.mxu0 %v3242
    %3371 = vmatprep.subr.mxu0 0.0
    %3372 = vmatpush1.msra.mxu0 %v3239
    %3373 = vmatprep.subr.mxu0 0.0
    %3374 = vmatpush1.msra.mxu0 %v3236
    %3375 = vmatprep.subr.mxu0 0.0
    %3376 = vmatpush1.msra.mxu0 %v3233
    %3377 = vmatprep.subr.mxu0 0.0
    %3378 = vmatpush1.msra.mxu0 %v3230
    %3379 = vmatprep.subr.mxu0 0.0
    %3380 = vmatpush2.msra.mxu0 0.0
    %3381 = vmatprep.subr.mxu0 0.0
    %3382 = vmatpush2.msra.mxu0 0.0
    %3383 = vmatprep.subr.mxu0 0.0
    %3384 = vmatpush2.msra.mxu0 0.0
    %3385 = vmatprep.subr.mxu0 0.0
    %3386 = vmatpush2.msra.mxu0 0.0
    %3387 = vmatprep.subr.mxu0 0.0
    %3388 = vmatpush2.msra.mxu0 0.0
    %3389 = vmatprep.subr.mxu0 0.0
    %3390 = vmatpush2.msra.mxu0 0.0
    %3391 = vmatprep.subr.mxu0 0.0
    %3392 = vmatpush2.msra.mxu0 0.0
    %3393 = vmatprep.subr.mxu0 0.0
    %3394 = vmatpush2.msra.mxu0 0.0
    %3395 = vmatprep.subr.mxu0 0.0
    %3396 = vmatpush2.msra.mxu0 0.0
    %3397 = vmatprep.subr.mxu0 0.0
    %3398 = vmatpush2.msra.mxu0 0.0
    %3399 = vmatprep.subr.mxu0 0.0
    %3400 = vmatpush2.msra.mxu0 0.0
    %3401 = vmatprep.subr.mxu0 0.0
    %3402 = vmatpush2.msra.mxu0 0.0
    %3403 = vmatprep.subr.mxu0 0.0
    %3404 = vmatpush2.msra.mxu0 0.0
    %3405 = vmatprep.subr.mxu0 0.0
    %3406 = vmatpush2.msra.mxu0 0.0
    %3407 = vmatprep.subr.mxu0 0.0
    %3408 = vmatpush2.msra.mxu0 0.0
    %3409 = vmatprep.subr.mxu0 0.0
    %3410 = vmatpush2.msra.mxu0 0.0
    %3411 = vmatprep.mubr.f32.mxu0 0.0
    %3412 = vmatmul.mubr.f32.gmra.mxu0 %v3221
    %v3413 = vpop.f32.mrf.mxu0
    %v3414 = vadd.f32 0.0, %v3413
    %v3415 = vpop.f32.mrf.mxu0
    %3416 = vdwg.mxu0
    %v3417 = vadd.f32 %v3225, %v3343
    %v3418 = vxor.u32 %v3417, 2147483648
    %v3419 = vmul.f32 %v3418, 1.442695
    %v3420 = vpow.pop %v3419
    %v3421 = vadd.f32 %v3420, 1.0
    %v3422 = vrcp.pop %v3421
    %v3423 = vmul.f32 1.0, %v3422
    %v3424 = vadd.f32 %v3226, %v3345
    %v3425 = vxor.u32 %v3424, 2147483648
    %v3426 = vmul.f32 %v3425, 1.442695
    %v3427 = vpow.pop %v3426
    %v3428 = vadd.f32 %v3427, 1.0
    %v3429 = vrcp.pop %v3428
    %v3430 = vmul.f32 1.0, %v3429
    %v3431 = vadd.f32 %v3414, %v368
    %v3432 = vmul.f32 %v3423, %v3431
    %v3433 = vadd.f32 %v3227, %v3432
    %v3434 = vtanh.pop %v3433
    %v3435 = vsub.f32 1.0, %v3430
    %v3436 = vmul.f32 %v3435, %v3434
    %v3437 = vmul.f32 %v3430, %v3221
    %v3438 = vadd.f32 %v3436, %v3437
    %s3439 = scalar_lea.vmem [#allocation3], 32
    %3440 = vst [vmem:[%s3439] sm:$0xff] %v3438
    %s3441 = scalar_lea.vmem [#allocation2], 72
    %v3442 = vld [vmem:[%s3441] sm:$0xff]
    %v3443 = vld [vmem:[%s3441 + $0x8] sm:$0xff]
    %v3444 = vld [vmem:[%s3441 + $0x10] sm:$0xff]
    %v3445 = vld [vmem:[#allocation10] sm:$0xff]
    %v3446 = vld [vmem:[#allocation10 + $0x8] sm:$0xff]
    %v3447 = vld [vmem:[#allocation10 + $0x10] sm:$0xff]
    %v3448 = vld [vmem:[#allocation10 + $0x18] sm:$0xff]
    %v3449 = vld [vmem:[#allocation10 + $0x20] sm:$0xff]
    %v3450 = vld [vmem:[#allocation10 + $0x28] sm:$0xff]
    %v3451 = vld [vmem:[#allocation10 + $0x30] sm:$0xff]
    %v3452 = vld [vmem:[#allocation10 + $0x38] sm:$0xff]
    %v3453 = vld [vmem:[#allocation10 + $0x40] sm:$0xff]
    %v3454 = vld [vmem:[#allocation10 + $0x48] sm:$0xff]
    %v3455 = vld [vmem:[#allocation10 + $0x50] sm:$0xff]
    %v3456 = vld [vmem:[#allocation10 + $0x58] sm:$0xff]
    %v3457 = vld [vmem:[#allocation10 + $0x60] sm:$0xff]
    %v3458 = vld [vmem:[#allocation10 + $0x68] sm:$0xff]
    %v3459 = vld [vmem:[#allocation10 + $0x70] sm:$0xff]
    %v3460 = vld [vmem:[#allocation10 + $0x78] sm:$0xff]
    %v3461 = vld [vmem:[#allocation10 + $0x80] sm:$0xff]
    %v3462 = vld [vmem:[#allocation10 + $0x88] sm:$0xff]
    %v3463 = vld [vmem:[#allocation10 + $0x90] sm:$0xff]
    %v3464 = vld [vmem:[#allocation10 + $0x98] sm:$0xff]
    %v3465 = vld [vmem:[#allocation10 + $0xa0] sm:$0xff]
    %v3466 = vld [vmem:[#allocation10 + $0xa8] sm:$0xff]
    %v3467 = vld [vmem:[#allocation10 + $0xb0] sm:$0xff]
    %v3468 = vld [vmem:[#allocation10 + $0xb8] sm:$0xff]
    %v3469 = vld [vmem:[#allocation10 + $0xc0] sm:$0xff]
    %v3470 = vld [vmem:[#allocation10 + $0xc8] sm:$0xff]
    %v3471 = vld [vmem:[#allocation10 + $0xd0] sm:$0xff]
    %v3472 = vld [vmem:[#allocation10 + $0xd8] sm:$0xff]
    %v3473 = vld [vmem:[#allocation10 + $0xe0] sm:$0xff]
    %v3474 = vld [vmem:[#allocation10 + $0xe8] sm:$0xff]
    %v3475 = vld [vmem:[#allocation10 + $0xf0] sm:$0xff]
    %v3476 = vld [vmem:[#allocation10 + $0xf8] sm:$0xff]
    %v3477 = vld [vmem:[#allocation10 + $0x100] sm:$0xff]
    %v3478 = vld [vmem:[#allocation10 + $0x108] sm:$0xff]
    %v3479 = vld [vmem:[#allocation10 + $0x110] sm:$0xff]
    %v3480 = vld [vmem:[#allocation10 + $0x118] sm:$0xff]
    %v3481 = vld [vmem:[#allocation10 + $0x120] sm:$0xff]
    %v3482 = vld [vmem:[#allocation10 + $0x128] sm:$0xff]
    %v3483 = vld [vmem:[#allocation10 + $0x130] sm:$0xff]
    %v3484 = vld [vmem:[#allocation10 + $0x138] sm:$0xff]
    %v3485 = vld [vmem:[#allocation10 + $0x140] sm:$0xff]
    %v3486 = vld [vmem:[#allocation10 + $0x148] sm:$0xff]
    %v3487 = vld [vmem:[#allocation10 + $0x150] sm:$0xff]
    %v3488 = vld [vmem:[#allocation10 + $0x158] sm:$0xff]
    %v3489 = vld [vmem:[#allocation10 + $0x160] sm:$0xff]
    %v3490 = vld [vmem:[#allocation10 + $0x168] sm:$0xff]
    %v3491 = vld [vmem:[#allocation10 + $0x170] sm:$0xff]
    %v3492 = vld [vmem:[#allocation10 + $0x178] sm:$0xff]
    %3493 = vmatprep.subr.mxu0 %v3491
    %3494 = vmatpush1.msra.mxu0 %v3490
    %3495 = vmatprep.subr.mxu0 %v3488
    %3496 = vmatpush1.msra.mxu0 %v3487
    %3497 = vmatprep.subr.mxu0 %v3485
    %3498 = vmatpush1.msra.mxu0 %v3484
    %3499 = vmatprep.subr.mxu0 %v3482
    %3500 = vmatpush1.msra.mxu0 %v3481
    %3501 = vmatprep.subr.mxu0 %v3479
    %3502 = vmatpush1.msra.mxu0 %v3478
    %3503 = vmatprep.subr.mxu0 %v3476
    %3504 = vmatpush1.msra.mxu0 %v3475
    %3505 = vmatprep.subr.mxu0 %v3473
    %3506 = vmatpush1.msra.mxu0 %v3472
    %3507 = vmatprep.subr.mxu0 %v3470
    %3508 = vmatpush1.msra.mxu0 %v3469
    %3509 = vmatprep.subr.mxu0 %v3467
    %3510 = vmatpush1.msra.mxu0 %v3466
    %3511 = vmatprep.subr.mxu0 %v3464
    %3512 = vmatpush1.msra.mxu0 %v3463
    %3513 = vmatprep.subr.mxu0 %v3461
    %3514 = vmatpush1.msra.mxu0 %v3460
    %3515 = vmatprep.subr.mxu0 %v3458
    %3516 = vmatpush1.msra.mxu0 %v3457
    %3517 = vmatprep.subr.mxu0 %v3455
    %3518 = vmatpush1.msra.mxu0 %v3454
    %3519 = vmatprep.subr.mxu0 %v3452
    %3520 = vmatpush1.msra.mxu0 %v3451
    %3521 = vmatprep.subr.mxu0 %v3449
    %3522 = vmatpush1.msra.mxu0 %v3448
    %3523 = vmatprep.subr.mxu0 %v3446
    %3524 = vmatpush1.msra.mxu0 %v3445
    %3525 = vmatprep.subr.mxu0 0.0
    %3526 = vmatpush2.msra.mxu0 0.0
    %3527 = vmatprep.subr.mxu0 0.0
    %3528 = vmatpush2.msra.mxu0 0.0
    %3529 = vmatprep.subr.mxu0 0.0
    %3530 = vmatpush2.msra.mxu0 0.0
    %3531 = vmatprep.subr.mxu0 0.0
    %3532 = vmatpush2.msra.mxu0 0.0
    %3533 = vmatprep.subr.mxu0 0.0
    %3534 = vmatpush2.msra.mxu0 0.0
    %3535 = vmatprep.subr.mxu0 0.0
    %3536 = vmatpush2.msra.mxu0 0.0
    %3537 = vmatprep.subr.mxu0 0.0
    %3538 = vmatpush2.msra.mxu0 0.0
    %3539 = vmatprep.subr.mxu0 0.0
    %3540 = vmatpush2.msra.mxu0 0.0
    %3541 = vmatprep.subr.mxu0 0.0
    %3542 = vmatpush2.msra.mxu0 0.0
    %3543 = vmatprep.subr.mxu0 0.0
    %3544 = vmatpush2.msra.mxu0 0.0
    %3545 = vmatprep.subr.mxu0 0.0
    %3546 = vmatpush2.msra.mxu0 0.0
    %3547 = vmatprep.subr.mxu0 0.0
    %3548 = vmatpush2.msra.mxu0 0.0
    %3549 = vmatprep.subr.mxu0 0.0
    %3550 = vmatpush2.msra.mxu0 0.0
    %3551 = vmatprep.subr.mxu0 0.0
    %3552 = vmatpush2.msra.mxu0 0.0
    %3553 = vmatprep.subr.mxu0 0.0
    %3554 = vmatpush2.msra.mxu0 0.0
    %3555 = vmatprep.subr.mxu0 0.0
    %3556 = vmatpush2.msra.mxu0 0.0
    %3557 = vmatprep.mubr.f32.mxu0 0.0
    %3558 = vmatmul.mubr.f32.gmra.mxu0 %v3438
    %v3559 = vpop.f32.mrf.mxu0
    %v3560 = vadd.f32 0.0, %v3559
    %v3561 = vpop.f32.mrf.mxu0
    %v3562 = vadd.f32 0.0, %v3561
    %3563 = vdwg.mxu0
    %3564 = vmatprep.subr.mxu0 0.0
    %3565 = vmatpush1.msra.mxu0 %v3492
    %3566 = vmatprep.subr.mxu0 0.0
    %3567 = vmatpush1.msra.mxu0 %v3489
    %3568 = vmatprep.subr.mxu0 0.0
    %3569 = vmatpush1.msra.mxu0 %v3486
    %3570 = vmatprep.subr.mxu0 0.0
    %3571 = vmatpush1.msra.mxu0 %v3483
    %3572 = vmatprep.subr.mxu0 0.0
    %3573 = vmatpush1.msra.mxu0 %v3480
    %3574 = vmatprep.subr.mxu0 0.0
    %3575 = vmatpush1.msra.mxu0 %v3477
    %3576 = vmatprep.subr.mxu0 0.0
    %3577 = vmatpush1.msra.mxu0 %v3474
    %3578 = vmatprep.subr.mxu0 0.0
    %3579 = vmatpush1.msra.mxu0 %v3471
    %3580 = vmatprep.subr.mxu0 0.0
    %3581 = vmatpush1.msra.mxu0 %v3468
    %3582 = vmatprep.subr.mxu0 0.0
    %3583 = vmatpush1.msra.mxu0 %v3465
    %3584 = vmatprep.subr.mxu0 0.0
    %3585 = vmatpush1.msra.mxu0 %v3462
    %3586 = vmatprep.subr.mxu0 0.0
    %3587 = vmatpush1.msra.mxu0 %v3459
    %3588 = vmatprep.subr.mxu0 0.0
    %3589 = vmatpush1.msra.mxu0 %v3456
    %3590 = vmatprep.subr.mxu0 0.0
    %3591 = vmatpush1.msra.mxu0 %v3453
    %3592 = vmatprep.subr.mxu0 0.0
    %3593 = vmatpush1.msra.mxu0 %v3450
    %3594 = vmatprep.subr.mxu0 0.0
    %3595 = vmatpush1.msra.mxu0 %v3447
    %3596 = vmatprep.subr.mxu0 0.0
    %3597 = vmatpush2.msra.mxu0 0.0
    %3598 = vmatprep.subr.mxu0 0.0
    %3599 = vmatpush2.msra.mxu0 0.0
    %3600 = vmatprep.subr.mxu0 0.0
    %3601 = vmatpush2.msra.mxu0 0.0
    %3602 = vmatprep.subr.mxu0 0.0
    %3603 = vmatpush2.msra.mxu0 0.0
    %3604 = vmatprep.subr.mxu0 0.0
    %3605 = vmatpush2.msra.mxu0 0.0
    %3606 = vmatprep.subr.mxu0 0.0
    %3607 = vmatpush2.msra.mxu0 0.0
    %3608 = vmatprep.subr.mxu0 0.0
    %3609 = vmatpush2.msra.mxu0 0.0
    %3610 = vmatprep.subr.mxu0 0.0
    %3611 = vmatpush2.msra.mxu0 0.0
    %3612 = vmatprep.subr.mxu0 0.0
    %3613 = vmatpush2.msra.mxu0 0.0
    %3614 = vmatprep.subr.mxu0 0.0
    %3615 = vmatpush2.msra.mxu0 0.0
    %3616 = vmatprep.subr.mxu0 0.0
    %3617 = vmatpush2.msra.mxu0 0.0
    %3618 = vmatprep.subr.mxu0 0.0
    %3619 = vmatpush2.msra.mxu0 0.0
    %3620 = vmatprep.subr.mxu0 0.0
    %3621 = vmatpush2.msra.mxu0 0.0
    %3622 = vmatprep.subr.mxu0 0.0
    %3623 = vmatpush2.msra.mxu0 0.0
    %3624 = vmatprep.subr.mxu0 0.0
    %3625 = vmatpush2.msra.mxu0 0.0
    %3626 = vmatprep.subr.mxu0 0.0
    %3627 = vmatpush2.msra.mxu0 0.0
    %3628 = vmatprep.mubr.f32.mxu0 0.0
    %3629 = vmatmul.mubr.f32.gmra.mxu0 %v3438
    %v3630 = vpop.f32.mrf.mxu0
    %v3631 = vadd.f32 0.0, %v3630
    %v3632 = vpop.f32.mrf.mxu0
    %3633 = vdwg.mxu0
    %v3634 = vadd.f32 %v3442, %v3560
    %v3635 = vxor.u32 %v3634, 2147483648
    %v3636 = vmul.f32 %v3635, 1.442695
    %v3637 = vpow.pop %v3636
    %v3638 = vadd.f32 %v3637, 1.0
    %v3639 = vrcp.pop %v3638
    %v3640 = vmul.f32 1.0, %v3639
    %v3641 = vadd.f32 %v3443, %v3562
    %v3642 = vxor.u32 %v3641, 2147483648
    %v3643 = vmul.f32 %v3642, 1.442695
    %v3644 = vpow.pop %v3643
    %v3645 = vadd.f32 %v3644, 1.0
    %v3646 = vrcp.pop %v3645
    %v3647 = vmul.f32 1.0, %v3646
    %v3648 = vadd.f32 %v3631, %v368
    %v3649 = vmul.f32 %v3640, %v3648
    %v3650 = vadd.f32 %v3444, %v3649
    %v3651 = vtanh.pop %v3650
    %v3652 = vsub.f32 1.0, %v3647
    %v3653 = vmul.f32 %v3652, %v3651
    %v3654 = vmul.f32 %v3647, %v3438
    %v3655 = vadd.f32 %v3653, %v3654
    %s3656 = scalar_lea.vmem [#allocation3], 24
    %3657 = vst [vmem:[%s3656] sm:$0xff] %v3655
    %s3658 = scalar_lea.vmem [#allocation2], 48
    %v3659 = vld [vmem:[%s3658] sm:$0xff]
    %v3660 = vld [vmem:[%s3658 + $0x8] sm:$0xff]
    %v3661 = vld [vmem:[%s3658 + $0x10] sm:$0xff]
    %v3662 = vld [vmem:[#allocation10] sm:$0xff]
    %v3663 = vld [vmem:[#allocation10 + $0x8] sm:$0xff]
    %v3664 = vld [vmem:[#allocation10 + $0x10] sm:$0xff]
    %v3665 = vld [vmem:[#allocation10 + $0x18] sm:$0xff]
    %v3666 = vld [vmem:[#allocation10 + $0x20] sm:$0xff]
    %v3667 = vld [vmem:[#allocation10 + $0x28] sm:$0xff]
    %v3668 = vld [vmem:[#allocation10 + $0x30] sm:$0xff]
    %v3669 = vld [vmem:[#allocation10 + $0x38] sm:$0xff]
    %v3670 = vld [vmem:[#allocation10 + $0x40] sm:$0xff]
    %v3671 = vld [vmem:[#allocation10 + $0x48] sm:$0xff]
    %v3672 = vld [vmem:[#allocation10 + $0x50] sm:$0xff]
    %v3673 = vld [vmem:[#allocation10 + $0x58] sm:$0xff]
    %v3674 = vld [vmem:[#allocation10 + $0x60] sm:$0xff]
    %v3675 = vld [vmem:[#allocation10 + $0x68] sm:$0xff]
    %v3676 = vld [vmem:[#allocation10 + $0x70] sm:$0xff]
    %v3677 = vld [vmem:[#allocation10 + $0x78] sm:$0xff]
    %v3678 = vld [vmem:[#allocation10 + $0x80] sm:$0xff]
    %v3679 = vld [vmem:[#allocation10 + $0x88] sm:$0xff]
    %v3680 = vld [vmem:[#allocation10 + $0x90] sm:$0xff]
    %v3681 = vld [vmem:[#allocation10 + $0x98] sm:$0xff]
    %v3682 = vld [vmem:[#allocation10 + $0xa0] sm:$0xff]
    %v3683 = vld [vmem:[#allocation10 + $0xa8] sm:$0xff]
    %v3684 = vld [vmem:[#allocation10 + $0xb0] sm:$0xff]
    %v3685 = vld [vmem:[#allocation10 + $0xb8] sm:$0xff]
    %v3686 = vld [vmem:[#allocation10 + $0xc0] sm:$0xff]
    %v3687 = vld [vmem:[#allocation10 + $0xc8] sm:$0xff]
    %v3688 = vld [vmem:[#allocation10 + $0xd0] sm:$0xff]
    %v3689 = vld [vmem:[#allocation10 + $0xd8] sm:$0xff]
    %v3690 = vld [vmem:[#allocation10 + $0xe0] sm:$0xff]
    %v3691 = vld [vmem:[#allocation10 + $0xe8] sm:$0xff]
    %v3692 = vld [vmem:[#allocation10 + $0xf0] sm:$0xff]
    %v3693 = vld [vmem:[#allocation10 + $0xf8] sm:$0xff]
    %v3694 = vld [vmem:[#allocation10 + $0x100] sm:$0xff]
    %v3695 = vld [vmem:[#allocation10 + $0x108] sm:$0xff]
    %v3696 = vld [vmem:[#allocation10 + $0x110] sm:$0xff]
    %v3697 = vld [vmem:[#allocation10 + $0x118] sm:$0xff]
    %v3698 = vld [vmem:[#allocation10 + $0x120] sm:$0xff]
    %v3699 = vld [vmem:[#allocation10 + $0x128] sm:$0xff]
    %v3700 = vld [vmem:[#allocation10 + $0x130] sm:$0xff]
    %v3701 = vld [vmem:[#allocation10 + $0x138] sm:$0xff]
    %v3702 = vld [vmem:[#allocation10 + $0x140] sm:$0xff]
    %v3703 = vld [vmem:[#allocation10 + $0x148] sm:$0xff]
    %v3704 = vld [vmem:[#allocation10 + $0x150] sm:$0xff]
    %v3705 = vld [vmem:[#allocation10 + $0x158] sm:$0xff]
    %v3706 = vld [vmem:[#allocation10 + $0x160] sm:$0xff]
    %v3707 = vld [vmem:[#allocation10 + $0x168] sm:$0xff]
    %v3708 = vld [vmem:[#allocation10 + $0x170] sm:$0xff]
    %v3709 = vld [vmem:[#allocation10 + $0x178] sm:$0xff]
    %3710 = vmatprep.subr.mxu0 %v3708
    %3711 = vmatpush1.msra.mxu0 %v3707
    %3712 = vmatprep.subr.mxu0 %v3705
    %3713 = vmatpush1.msra.mxu0 %v3704
    %3714 = vmatprep.subr.mxu0 %v3702
    %3715 = vmatpush1.msra.mxu0 %v3701
    %3716 = vmatprep.subr.mxu0 %v3699
    %3717 = vmatpush1.msra.mxu0 %v3698
    %3718 = vmatprep.subr.mxu0 %v3696
    %3719 = vmatpush1.msra.mxu0 %v3695
    %3720 = vmatprep.subr.mxu0 %v3693
    %3721 = vmatpush1.msra.mxu0 %v3692
    %3722 = vmatprep.subr.mxu0 %v3690
    %3723 = vmatpush1.msra.mxu0 %v3689
    %3724 = vmatprep.subr.mxu0 %v3687
    %3725 = vmatpush1.msra.mxu0 %v3686
    %3726 = vmatprep.subr.mxu0 %v3684
    %3727 = vmatpush1.msra.mxu0 %v3683
    %3728 = vmatprep.subr.mxu0 %v3681
    %3729 = vmatpush1.msra.mxu0 %v3680
    %3730 = vmatprep.subr.mxu0 %v3678
    %3731 = vmatpush1.msra.mxu0 %v3677
    %3732 = vmatprep.subr.mxu0 %v3675
    %3733 = vmatpush1.msra.mxu0 %v3674
    %3734 = vmatprep.subr.mxu0 %v3672
    %3735 = vmatpush1.msra.mxu0 %v3671
    %3736 = vmatprep.subr.mxu0 %v3669
    %3737 = vmatpush1.msra.mxu0 %v3668
    %3738 = vmatprep.subr.mxu0 %v3666
    %3739 = vmatpush1.msra.mxu0 %v3665
    %3740 = vmatprep.subr.mxu0 %v3663
    %3741 = vmatpush1.msra.mxu0 %v3662
    %3742 = vmatprep.subr.mxu0 0.0
    %3743 = vmatpush2.msra.mxu0 0.0
    %3744 = vmatprep.subr.mxu0 0.0
    %3745 = vmatpush2.msra.mxu0 0.0
    %3746 = vmatprep.subr.mxu0 0.0
    %3747 = vmatpush2.msra.mxu0 0.0
    %3748 = vmatprep.subr.mxu0 0.0
    %3749 = vmatpush2.msra.mxu0 0.0
    %3750 = vmatprep.subr.mxu0 0.0
    %3751 = vmatpush2.msra.mxu0 0.0
    %3752 = vmatprep.subr.mxu0 0.0
    %3753 = vmatpush2.msra.mxu0 0.0
    %3754 = vmatprep.subr.mxu0 0.0
    %3755 = vmatpush2.msra.mxu0 0.0
    %3756 = vmatprep.subr.mxu0 0.0
    %3757 = vmatpush2.msra.mxu0 0.0
    %3758 = vmatprep.subr.mxu0 0.0
    %3759 = vmatpush2.msra.mxu0 0.0
    %3760 = vmatprep.subr.mxu0 0.0
    %3761 = vmatpush2.msra.mxu0 0.0
    %3762 = vmatprep.subr.mxu0 0.0
    %3763 = vmatpush2.msra.mxu0 0.0
    %3764 = vmatprep.subr.mxu0 0.0
    %3765 = vmatpush2.msra.mxu0 0.0
    %3766 = vmatprep.subr.mxu0 0.0
    %3767 = vmatpush2.msra.mxu0 0.0
    %3768 = vmatprep.subr.mxu0 0.0
    %3769 = vmatpush2.msra.mxu0 0.0
    %3770 = vmatprep.subr.mxu0 0.0
    %3771 = vmatpush2.msra.mxu0 0.0
    %3772 = vmatprep.subr.mxu0 0.0
    %3773 = vmatpush2.msra.mxu0 0.0
    %3774 = vmatprep.mubr.f32.mxu0 0.0
    %3775 = vmatmul.mubr.f32.gmra.mxu0 %v3655
    %v3776 = vpop.f32.mrf.mxu0
    %v3777 = vadd.f32 0.0, %v3776
    %v3778 = vpop.f32.mrf.mxu0
    %v3779 = vadd.f32 0.0, %v3778
    %3780 = vdwg.mxu0
    %3781 = vmatprep.subr.mxu0 0.0
    %3782 = vmatpush1.msra.mxu0 %v3709
    %3783 = vmatprep.subr.mxu0 0.0
    %3784 = vmatpush1.msra.mxu0 %v3706
    %3785 = vmatprep.subr.mxu0 0.0
    %3786 = vmatpush1.msra.mxu0 %v3703
    %3787 = vmatprep.subr.mxu0 0.0
    %3788 = vmatpush1.msra.mxu0 %v3700
    %3789 = vmatprep.subr.mxu0 0.0
    %3790 = vmatpush1.msra.mxu0 %v3697
    %3791 = vmatprep.subr.mxu0 0.0
    %3792 = vmatpush1.msra.mxu0 %v3694
    %3793 = vmatprep.subr.mxu0 0.0
    %3794 = vmatpush1.msra.mxu0 %v3691
    %3795 = vmatprep.subr.mxu0 0.0
    %3796 = vmatpush1.msra.mxu0 %v3688
    %3797 = vmatprep.subr.mxu0 0.0
    %3798 = vmatpush1.msra.mxu0 %v3685
    %3799 = vmatprep.subr.mxu0 0.0
    %3800 = vmatpush1.msra.mxu0 %v3682
    %3801 = vmatprep.subr.mxu0 0.0
    %3802 = vmatpush1.msra.mxu0 %v3679
    %3803 = vmatprep.subr.mxu0 0.0
    %3804 = vmatpush1.msra.mxu0 %v3676
    %3805 = vmatprep.subr.mxu0 0.0
    %3806 = vmatpush1.msra.mxu0 %v3673
    %3807 = vmatprep.subr.mxu0 0.0
    %3808 = vmatpush1.msra.mxu0 %v3670
    %3809 = vmatprep.subr.mxu0 0.0
    %3810 = vmatpush1.msra.mxu0 %v3667
    %3811 = vmatprep.subr.mxu0 0.0
    %3812 = vmatpush1.msra.mxu0 %v3664
    %3813 = vmatprep.subr.mxu0 0.0
    %3814 = vmatpush2.msra.mxu0 0.0
    %3815 = vmatprep.subr.mxu0 0.0
    %3816 = vmatpush2.msra.mxu0 0.0
    %3817 = vmatprep.subr.mxu0 0.0
    %3818 = vmatpush2.msra.mxu0 0.0
    %3819 = vmatprep.subr.mxu0 0.0
    %3820 = vmatpush2.msra.mxu0 0.0
    %3821 = vmatprep.subr.mxu0 0.0
    %3822 = vmatpush2.msra.mxu0 0.0
    %3823 = vmatprep.subr.mxu0 0.0
    %3824 = vmatpush2.msra.mxu0 0.0
    %3825 = vmatprep.subr.mxu0 0.0
    %3826 = vmatpush2.msra.mxu0 0.0
    %3827 = vmatprep.subr.mxu0 0.0
    %3828 = vmatpush2.msra.mxu0 0.0
    %3829 = vmatprep.subr.mxu0 0.0
    %3830 = vmatpush2.msra.mxu0 0.0
    %3831 = vmatprep.subr.mxu0 0.0
    %3832 = vmatpush2.msra.mxu0 0.0
    %3833 = vmatprep.subr.mxu0 0.0
    %3834 = vmatpush2.msra.mxu0 0.0
    %3835 = vmatprep.subr.mxu0 0.0
    %3836 = vmatpush2.msra.mxu0 0.0
    %3837 = vmatprep.subr.mxu0 0.0
    %3838 = vmatpush2.msra.mxu0 0.0
    %3839 = vmatprep.subr.mxu0 0.0
    %3840 = vmatpush2.msra.mxu0 0.0
    %3841 = vmatprep.subr.mxu0 0.0
    %3842 = vmatpush2.msra.mxu0 0.0
    %3843 = vmatprep.subr.mxu0 0.0
    %3844 = vmatpush2.msra.mxu0 0.0
    %3845 = vmatprep.mubr.f32.mxu0 0.0
    %3846 = vmatmul.mubr.f32.gmra.mxu0 %v3655
    %v3847 = vpop.f32.mrf.mxu0
    %v3848 = vadd.f32 0.0, %v3847
    %v3849 = vpop.f32.mrf.mxu0
    %3850 = vdwg.mxu0
    %v3851 = vadd.f32 %v3659, %v3777
    %v3852 = vxor.u32 %v3851, 2147483648
    %v3853 = vmul.f32 %v3852, 1.442695
    %v3854 = vpow.pop %v3853
    %v3855 = vadd.f32 %v3854, 1.0
    %v3856 = vrcp.pop %v3855
    %v3857 = vmul.f32 1.0, %v3856
    %v3858 = vadd.f32 %v3660, %v3779
    %v3859 = vxor.u32 %v3858, 2147483648
    %v3860 = vmul.f32 %v3859, 1.442695
    %v3861 = vpow.pop %v3860
    %v3862 = vadd.f32 %v3861, 1.0
    %v3863 = vrcp.pop %v3862
    %v3864 = vmul.f32 1.0, %v3863
    %v3865 = vadd.f32 %v3848, %v368
    %v3866 = vmul.f32 %v3857, %v3865
    %v3867 = vadd.f32 %v3661, %v3866
    %v3868 = vtanh.pop %v3867
    %v3869 = vsub.f32 1.0, %v3864
    %v3870 = vmul.f32 %v3869, %v3868
    %v3871 = vmul.f32 %v3864, %v3655
    %v3872 = vadd.f32 %v3870, %v3871
    %s3873 = scalar_lea.vmem [#allocation3], 16
    %3874 = vst [vmem:[%s3873] sm:$0xff] %v3872
    %s3875 = scalar_lea.vmem [#allocation2], 24
    %v3876 = vld [vmem:[%s3875] sm:$0xff]
    %v3877 = vld [vmem:[%s3875 + $0x8] sm:$0xff]
    %v3878 = vld [vmem:[%s3875 + $0x10] sm:$0xff]
    %v3879 = vld [vmem:[#allocation10] sm:$0xff]
    %v3880 = vld [vmem:[#allocation10 + $0x8] sm:$0xff]
    %v3881 = vld [vmem:[#allocation10 + $0x10] sm:$0xff]
    %v3882 = vld [vmem:[#allocation10 + $0x18] sm:$0xff]
    %v3883 = vld [vmem:[#allocation10 + $0x20] sm:$0xff]
    %v3884 = vld [vmem:[#allocation10 + $0x28] sm:$0xff]
    %v3885 = vld [vmem:[#allocation10 + $0x30] sm:$0xff]
    %v3886 = vld [vmem:[#allocation10 + $0x38] sm:$0xff]
    %v3887 = vld [vmem:[#allocation10 + $0x40] sm:$0xff]
    %v3888 = vld [vmem:[#allocation10 + $0x48] sm:$0xff]
    %v3889 = vld [vmem:[#allocation10 + $0x50] sm:$0xff]
    %v3890 = vld [vmem:[#allocation10 + $0x58] sm:$0xff]
    %v3891 = vld [vmem:[#allocation10 + $0x60] sm:$0xff]
    %v3892 = vld [vmem:[#allocation10 + $0x68] sm:$0xff]
    %v3893 = vld [vmem:[#allocation10 + $0x70] sm:$0xff]
    %v3894 = vld [vmem:[#allocation10 + $0x78] sm:$0xff]
    %v3895 = vld [vmem:[#allocation10 + $0x80] sm:$0xff]
    %v3896 = vld [vmem:[#allocation10 + $0x88] sm:$0xff]
    %v3897 = vld [vmem:[#allocation10 + $0x90] sm:$0xff]
    %v3898 = vld [vmem:[#allocation10 + $0x98] sm:$0xff]
    %v3899 = vld [vmem:[#allocation10 + $0xa0] sm:$0xff]
    %v3900 = vld [vmem:[#allocation10 + $0xa8] sm:$0xff]
    %v3901 = vld [vmem:[#allocation10 + $0xb0] sm:$0xff]
    %v3902 = vld [vmem:[#allocation10 + $0xb8] sm:$0xff]
    %v3903 = vld [vmem:[#allocation10 + $0xc0] sm:$0xff]
    %v3904 = vld [vmem:[#allocation10 + $0xc8] sm:$0xff]
    %v3905 = vld [vmem:[#allocation10 + $0xd0] sm:$0xff]
    %v3906 = vld [vmem:[#allocation10 + $0xd8] sm:$0xff]
    %v3907 = vld [vmem:[#allocation10 + $0xe0] sm:$0xff]
    %v3908 = vld [vmem:[#allocation10 + $0xe8] sm:$0xff]
    %v3909 = vld [vmem:[#allocation10 + $0xf0] sm:$0xff]
    %v3910 = vld [vmem:[#allocation10 + $0xf8] sm:$0xff]
    %v3911 = vld [vmem:[#allocation10 + $0x100] sm:$0xff]
    %v3912 = vld [vmem:[#allocation10 + $0x108] sm:$0xff]
    %v3913 = vld [vmem:[#allocation10 + $0x110] sm:$0xff]
    %v3914 = vld [vmem:[#allocation10 + $0x118] sm:$0xff]
    %v3915 = vld [vmem:[#allocation10 + $0x120] sm:$0xff]
    %v3916 = vld [vmem:[#allocation10 + $0x128] sm:$0xff]
    %v3917 = vld [vmem:[#allocation10 + $0x130] sm:$0xff]
    %v3918 = vld [vmem:[#allocation10 + $0x138] sm:$0xff]
    %v3919 = vld [vmem:[#allocation10 + $0x140] sm:$0xff]
    %v3920 = vld [vmem:[#allocation10 + $0x148] sm:$0xff]
    %v3921 = vld [vmem:[#allocation10 + $0x150] sm:$0xff]
    %v3922 = vld [vmem:[#allocation10 + $0x158] sm:$0xff]
    %v3923 = vld [vmem:[#allocation10 + $0x160] sm:$0xff]
    %v3924 = vld [vmem:[#allocation10 + $0x168] sm:$0xff]
    %v3925 = vld [vmem:[#allocation10 + $0x170] sm:$0xff]
    %v3926 = vld [vmem:[#allocation10 + $0x178] sm:$0xff]
    %3927 = vmatprep.subr.mxu0 %v3925
    %3928 = vmatpush1.msra.mxu0 %v3924
    %3929 = vmatprep.subr.mxu0 %v3922
    %3930 = vmatpush1.msra.mxu0 %v3921
    %3931 = vmatprep.subr.mxu0 %v3919
    %3932 = vmatpush1.msra.mxu0 %v3918
    %3933 = vmatprep.subr.mxu0 %v3916
    %3934 = vmatpush1.msra.mxu0 %v3915
    %3935 = vmatprep.subr.mxu0 %v3913
    %3936 = vmatpush1.msra.mxu0 %v3912
    %3937 = vmatprep.subr.mxu0 %v3910
    %3938 = vmatpush1.msra.mxu0 %v3909
    %3939 = vmatprep.subr.mxu0 %v3907
    %3940 = vmatpush1.msra.mxu0 %v3906
    %3941 = vmatprep.subr.mxu0 %v3904
    %3942 = vmatpush1.msra.mxu0 %v3903
    %3943 = vmatprep.subr.mxu0 %v3901
    %3944 = vmatpush1.msra.mxu0 %v3900
    %3945 = vmatprep.subr.mxu0 %v3898
    %3946 = vmatpush1.msra.mxu0 %v3897
    %3947 = vmatprep.subr.mxu0 %v3895
    %3948 = vmatpush1.msra.mxu0 %v3894
    %3949 = vmatprep.subr.mxu0 %v3892
    %3950 = vmatpush1.msra.mxu0 %v3891
    %3951 = vmatprep.subr.mxu0 %v3889
    %3952 = vmatpush1.msra.mxu0 %v3888
    %3953 = vmatprep.subr.mxu0 %v3886
    %3954 = vmatpush1.msra.mxu0 %v3885
    %3955 = vmatprep.subr.mxu0 %v3883
    %3956 = vmatpush1.msra.mxu0 %v3882
    %3957 = vmatprep.subr.mxu0 %v3880
    %3958 = vmatpush1.msra.mxu0 %v3879
    %3959 = vmatprep.subr.mxu0 0.0
    %3960 = vmatpush2.msra.mxu0 0.0
    %3961 = vmatprep.subr.mxu0 0.0
    %3962 = vmatpush2.msra.mxu0 0.0
    %3963 = vmatprep.subr.mxu0 0.0
    %3964 = vmatpush2.msra.mxu0 0.0
    %3965 = vmatprep.subr.mxu0 0.0
    %3966 = vmatpush2.msra.mxu0 0.0
    %3967 = vmatprep.subr.mxu0 0.0
    %3968 = vmatpush2.msra.mxu0 0.0
    %3969 = vmatprep.subr.mxu0 0.0
    %3970 = vmatpush2.msra.mxu0 0.0
    %3971 = vmatprep.subr.mxu0 0.0
    %3972 = vmatpush2.msra.mxu0 0.0
    %3973 = vmatprep.subr.mxu0 0.0
    %3974 = vmatpush2.msra.mxu0 0.0
    %3975 = vmatprep.subr.mxu0 0.0
    %3976 = vmatpush2.msra.mxu0 0.0
    %3977 = vmatprep.subr.mxu0 0.0
    %3978 = vmatpush2.msra.mxu0 0.0
    %3979 = vmatprep.subr.mxu0 0.0
    %3980 = vmatpush2.msra.mxu0 0.0
    %3981 = vmatprep.subr.mxu0 0.0
    %3982 = vmatpush2.msra.mxu0 0.0
    %3983 = vmatprep.subr.mxu0 0.0
    %3984 = vmatpush2.msra.mxu0 0.0
    %3985 = vmatprep.subr.mxu0 0.0
    %3986 = vmatpush2.msra.mxu0 0.0
    %3987 = vmatprep.subr.mxu0 0.0
    %3988 = vmatpush2.msra.mxu0 0.0
    %3989 = vmatprep.subr.mxu0 0.0
    %3990 = vmatpush2.msra.mxu0 0.0
    %3991 = vmatprep.mubr.f32.mxu0 0.0
    %3992 = vmatmul.mubr.f32.gmra.mxu0 %v3872
    %v3993 = vpop.f32.mrf.mxu0
    %v3994 = vadd.f32 0.0, %v3993
    %v3995 = vpop.f32.mrf.mxu0
    %v3996 = vadd.f32 0.0, %v3995
    %3997 = vdwg.mxu0
    %3998 = vmatprep.subr.mxu0 0.0
    %3999 = vmatpush1.msra.mxu0 %v3926
    %4000 = vmatprep.subr.mxu0 0.0
    %4001 = vmatpush1.msra.mxu0 %v3923
    %4002 = vmatprep.subr.mxu0 0.0
    %4003 = vmatpush1.msra.mxu0 %v3920
    %4004 = vmatprep.subr.mxu0 0.0
    %4005 = vmatpush1.msra.mxu0 %v3917
    %4006 = vmatprep.subr.mxu0 0.0
    %4007 = vmatpush1.msra.mxu0 %v3914
    %4008 = vmatprep.subr.mxu0 0.0
    %4009 = vmatpush1.msra.mxu0 %v3911
    %4010 = vmatprep.subr.mxu0 0.0
    %4011 = vmatpush1.msra.mxu0 %v3908
    %4012 = vmatprep.subr.mxu0 0.0
    %4013 = vmatpush1.msra.mxu0 %v3905
    %4014 = vmatprep.subr.mxu0 0.0
    %4015 = vmatpush1.msra.mxu0 %v3902
    %4016 = vmatprep.subr.mxu0 0.0
    %4017 = vmatpush1.msra.mxu0 %v3899
    %4018 = vmatprep.subr.mxu0 0.0
    %4019 = vmatpush1.msra.mxu0 %v3896
    %4020 = vmatprep.subr.mxu0 0.0
    %4021 = vmatpush1.msra.mxu0 %v3893
    %4022 = vmatprep.subr.mxu0 0.0
    %4023 = vmatpush1.msra.mxu0 %v3890
    %4024 = vmatprep.subr.mxu0 0.0
    %4025 = vmatpush1.msra.mxu0 %v3887
    %4026 = vmatprep.subr.mxu0 0.0
    %4027 = vmatpush1.msra.mxu0 %v3884
    %4028 = vmatprep.subr.mxu0 0.0
    %4029 = vmatpush1.msra.mxu0 %v3881
    %4030 = vmatprep.subr.mxu0 0.0
    %4031 = vmatpush2.msra.mxu0 0.0
    %4032 = vmatprep.subr.mxu0 0.0
    %4033 = vmatpush2.msra.mxu0 0.0
    %4034 = vmatprep.subr.mxu0 0.0
    %4035 = vmatpush2.msra.mxu0 0.0
    %4036 = vmatprep.subr.mxu0 0.0
    %4037 = vmatpush2.msra.mxu0 0.0
    %4038 = vmatprep.subr.mxu0 0.0
    %4039 = vmatpush2.msra.mxu0 0.0
    %4040 = vmatprep.subr.mxu0 0.0
    %4041 = vmatpush2.msra.mxu0 0.0
    %4042 = vmatprep.subr.mxu0 0.0
    %4043 = vmatpush2.msra.mxu0 0.0
    %4044 = vmatprep.subr.mxu0 0.0
    %4045 = vmatpush2.msra.mxu0 0.0
    %4046 = vmatprep.subr.mxu0 0.0
    %4047 = vmatpush2.msra.mxu0 0.0
    %4048 = vmatprep.subr.mxu0 0.0
    %4049 = vmatpush2.msra.mxu0 0.0
    %4050 = vmatprep.subr.mxu0 0.0
    %4051 = vmatpush2.msra.mxu0 0.0
    %4052 = vmatprep.subr.mxu0 0.0
    %4053 = vmatpush2.msra.mxu0 0.0
    %4054 = vmatprep.subr.mxu0 0.0
    %4055 = vmatpush2.msra.mxu0 0.0
    %4056 = vmatprep.subr.mxu0 0.0
    %4057 = vmatpush2.msra.mxu0 0.0
    %4058 = vmatprep.subr.mxu0 0.0
    %4059 = vmatpush2.msra.mxu0 0.0
    %4060 = vmatprep.subr.mxu0 0.0
    %4061 = vmatpush2.msra.mxu0 0.0
    %4062 = vmatprep.mubr.f32.mxu0 0.0
    %4063 = vmatmul.mubr.f32.gmra.mxu0 %v3872
    %v4064 = vpop.f32.mrf.mxu0
    %v4065 = vadd.f32 0.0, %v4064
    %v4066 = vpop.f32.mrf.mxu0
    %4067 = vdwg.mxu0
    %v4068 = vadd.f32 %v3876, %v3994
    %v4069 = vxor.u32 %v4068, 2147483648
    %v4070 = vmul.f32 %v4069, 1.442695
    %v4071 = vpow.pop %v4070
    %v4072 = vadd.f32 %v4071, 1.0
    %v4073 = vrcp.pop %v4072
    %v4074 = vmul.f32 1.0, %v4073
    %v4075 = vadd.f32 %v3877, %v3996
    %v4076 = vxor.u32 %v4075, 2147483648
    %v4077 = vmul.f32 %v4076, 1.442695
    %v4078 = vpow.pop %v4077
    %v4079 = vadd.f32 %v4078, 1.0
    %v4080 = vrcp.pop %v4079
    %v4081 = vmul.f32 1.0, %v4080
    %v4082 = vadd.f32 %v4065, %v368
    %v4083 = vmul.f32 %v4074, %v4082
    %v4084 = vadd.f32 %v3878, %v4083
    %v4085 = vtanh.pop %v4084
    %v4086 = vsub.f32 1.0, %v4081
    %v4087 = vmul.f32 %v4086, %v4085
    %v4088 = vmul.f32 %v4081, %v3872
    %v4089 = vadd.f32 %v4087, %v4088
    %s4090 = scalar_lea.vmem [#allocation3], 8
    %4091 = vst [vmem:[%s4090] sm:$0xff] %v4089
    %v4092 = vld [vmem:[#allocation2] sm:$0xff]
    %v4093 = vld [vmem:[#allocation2 + $0x8] sm:$0xff]
    %v4094 = vld [vmem:[#allocation2 + $0x10] sm:$0xff]
    %v4095 = vld [vmem:[#allocation10] sm:$0xff]
    %v4096 = vld [vmem:[#allocation10 + $0x8] sm:$0xff]
    %v4097 = vld [vmem:[#allocation10 + $0x10] sm:$0xff]
    %v4098 = vld [vmem:[#allocation10 + $0x18] sm:$0xff]
    %v4099 = vld [vmem:[#allocation10 + $0x20] sm:$0xff]
    %v4100 = vld [vmem:[#allocation10 + $0x28] sm:$0xff]
    %v4101 = vld [vmem:[#allocation10 + $0x30] sm:$0xff]
    %v4102 = vld [vmem:[#allocation10 + $0x38] sm:$0xff]
    %v4103 = vld [vmem:[#allocation10 + $0x40] sm:$0xff]
    %v4104 = vld [vmem:[#allocation10 + $0x48] sm:$0xff]
    %v4105 = vld [vmem:[#allocation10 + $0x50] sm:$0xff]
    %v4106 = vld [vmem:[#allocation10 + $0x58] sm:$0xff]
    %v4107 = vld [vmem:[#allocation10 + $0x60] sm:$0xff]
    %v4108 = vld [vmem:[#allocation10 + $0x68] sm:$0xff]
    %v4109 = vld [vmem:[#allocation10 + $0x70] sm:$0xff]
    %v4110 = vld [vmem:[#allocation10 + $0x78] sm:$0xff]
    %v4111 = vld [vmem:[#allocation10 + $0x80] sm:$0xff]
    %v4112 = vld [vmem:[#allocation10 + $0x88] sm:$0xff]
    %v4113 = vld [vmem:[#allocation10 + $0x90] sm:$0xff]
    %v4114 = vld [vmem:[#allocation10 + $0x98] sm:$0xff]
    %v4115 = vld [vmem:[#allocation10 + $0xa0] sm:$0xff]
    %v4116 = vld [vmem:[#allocation10 + $0xa8] sm:$0xff]
    %v4117 = vld [vmem:[#allocation10 + $0xb0] sm:$0xff]
    %v4118 = vld [vmem:[#allocation10 + $0xb8] sm:$0xff]
    %v4119 = vld [vmem:[#allocation10 + $0xc0] sm:$0xff]
    %v4120 = vld [vmem:[#allocation10 + $0xc8] sm:$0xff]
    %v4121 = vld [vmem:[#allocation10 + $0xd0] sm:$0xff]
    %v4122 = vld [vmem:[#allocation10 + $0xd8] sm:$0xff]
    %v4123 = vld [vmem:[#allocation10 + $0xe0] sm:$0xff]
    %v4124 = vld [vmem:[#allocation10 + $0xe8] sm:$0xff]
    %v4125 = vld [vmem:[#allocation10 + $0xf0] sm:$0xff]
    %v4126 = vld [vmem:[#allocation10 + $0xf8] sm:$0xff]
    %v4127 = vld [vmem:[#allocation10 + $0x100] sm:$0xff]
    %v4128 = vld [vmem:[#allocation10 + $0x108] sm:$0xff]
    %v4129 = vld [vmem:[#allocation10 + $0x110] sm:$0xff]
    %v4130 = vld [vmem:[#allocation10 + $0x118] sm:$0xff]
    %v4131 = vld [vmem:[#allocation10 + $0x120] sm:$0xff]
    %v4132 = vld [vmem:[#allocation10 + $0x128] sm:$0xff]
    %v4133 = vld [vmem:[#allocation10 + $0x130] sm:$0xff]
    %v4134 = vld [vmem:[#allocation10 + $0x138] sm:$0xff]
    %v4135 = vld [vmem:[#allocation10 + $0x140] sm:$0xff]
    %v4136 = vld [vmem:[#allocation10 + $0x148] sm:$0xff]
    %v4137 = vld [vmem:[#allocation10 + $0x150] sm:$0xff]
    %v4138 = vld [vmem:[#allocation10 + $0x158] sm:$0xff]
    %v4139 = vld [vmem:[#allocation10 + $0x160] sm:$0xff]
    %v4140 = vld [vmem:[#allocation10 + $0x168] sm:$0xff]
    %v4141 = vld [vmem:[#allocation10 + $0x170] sm:$0xff]
    %v4142 = vld [vmem:[#allocation10 + $0x178] sm:$0xff]
    %4143 = vmatprep.subr.mxu0 %v4141
    %4144 = vmatpush1.msra.mxu0 %v4140
    %4145 = vmatprep.subr.mxu0 %v4138
    %4146 = vmatpush1.msra.mxu0 %v4137
    %4147 = vmatprep.subr.mxu0 %v4135
    %4148 = vmatpush1.msra.mxu0 %v4134
    %4149 = vmatprep.subr.mxu0 %v4132
    %4150 = vmatpush1.msra.mxu0 %v4131
    %4151 = vmatprep.subr.mxu0 %v4129
    %4152 = vmatpush1.msra.mxu0 %v4128
    %4153 = vmatprep.subr.mxu0 %v4126
    %4154 = vmatpush1.msra.mxu0 %v4125
    %4155 = vmatprep.subr.mxu0 %v4123
    %4156 = vmatpush1.msra.mxu0 %v4122
    %4157 = vmatprep.subr.mxu0 %v4120
    %4158 = vmatpush1.msra.mxu0 %v4119
    %4159 = vmatprep.subr.mxu0 %v4117
    %4160 = vmatpush1.msra.mxu0 %v4116
    %4161 = vmatprep.subr.mxu0 %v4114
    %4162 = vmatpush1.msra.mxu0 %v4113
    %4163 = vmatprep.subr.mxu0 %v4111
    %4164 = vmatpush1.msra.mxu0 %v4110
    %4165 = vmatprep.subr.mxu0 %v4108
    %4166 = vmatpush1.msra.mxu0 %v4107
    %4167 = vmatprep.subr.mxu0 %v4105
    %4168 = vmatpush1.msra.mxu0 %v4104
    %4169 = vmatprep.subr.mxu0 %v4102
    %4170 = vmatpush1.msra.mxu0 %v4101
    %4171 = vmatprep.subr.mxu0 %v4099
    %4172 = vmatpush1.msra.mxu0 %v4098
    %4173 = vmatprep.subr.mxu0 %v4096
    %4174 = vmatpush1.msra.mxu0 %v4095
    %4175 = vmatprep.subr.mxu0 0.0
    %4176 = vmatpush2.msra.mxu0 0.0
    %4177 = vmatprep.subr.mxu0 0.0
    %4178 = vmatpush2.msra.mxu0 0.0
    %4179 = vmatprep.subr.mxu0 0.0
    %4180 = vmatpush2.msra.mxu0 0.0
    %4181 = vmatprep.subr.mxu0 0.0
    %4182 = vmatpush2.msra.mxu0 0.0
    %4183 = vmatprep.subr.mxu0 0.0
    %4184 = vmatpush2.msra.mxu0 0.0
    %4185 = vmatprep.subr.mxu0 0.0
    %4186 = vmatpush2.msra.mxu0 0.0
    %4187 = vmatprep.subr.mxu0 0.0
    %4188 = vmatpush2.msra.mxu0 0.0
    %4189 = vmatprep.subr.mxu0 0.0
    %4190 = vmatpush2.msra.mxu0 0.0
    %4191 = vmatprep.subr.mxu0 0.0
    %4192 = vmatpush2.msra.mxu0 0.0
    %4193 = vmatprep.subr.mxu0 0.0
    %4194 = vmatpush2.msra.mxu0 0.0
    %4195 = vmatprep.subr.mxu0 0.0
    %4196 = vmatpush2.msra.mxu0 0.0
    %4197 = vmatprep.subr.mxu0 0.0
    %4198 = vmatpush2.msra.mxu0 0.0
    %4199 = vmatprep.subr.mxu0 0.0
    %4200 = vmatpush2.msra.mxu0 0.0
    %4201 = vmatprep.subr.mxu0 0.0
    %4202 = vmatpush2.msra.mxu0 0.0
    %4203 = vmatprep.subr.mxu0 0.0
    %4204 = vmatpush2.msra.mxu0 0.0
    %4205 = vmatprep.subr.mxu0 0.0
    %4206 = vmatpush2.msra.mxu0 0.0
    %4207 = vmatprep.mubr.f32.mxu0 0.0
    %4208 = vmatmul.mubr.f32.gmra.mxu0 %v4089
    %v4209 = vpop.f32.mrf.mxu0
    %v4210 = vadd.f32 0.0, %v4209
    %v4211 = vpop.f32.mrf.mxu0
    %v4212 = vadd.f32 0.0, %v4211
    %4213 = vdwg.mxu0
    %4214 = vmatprep.subr.mxu0 0.0
    %4215 = vmatpush1.msra.mxu0 %v4142
    %4216 = vmatprep.subr.mxu0 0.0
    %4217 = vmatpush1.msra.mxu0 %v4139
    %4218 = vmatprep.subr.mxu0 0.0
    %4219 = vmatpush1.msra.mxu0 %v4136
    %4220 = vmatprep.subr.mxu0 0.0
    %4221 = vmatpush1.msra.mxu0 %v4133
    %4222 = vmatprep.subr.mxu0 0.0
    %4223 = vmatpush1.msra.mxu0 %v4130
    %4224 = vmatprep.subr.mxu0 0.0
    %4225 = vmatpush1.msra.mxu0 %v4127
    %4226 = vmatprep.subr.mxu0 0.0
    %4227 = vmatpush1.msra.mxu0 %v4124
    %4228 = vmatprep.subr.mxu0 0.0
    %4229 = vmatpush1.msra.mxu0 %v4121
    %4230 = vmatprep.subr.mxu0 0.0
    %4231 = vmatpush1.msra.mxu0 %v4118
    %4232 = vmatprep.subr.mxu0 0.0
    %4233 = vmatpush1.msra.mxu0 %v4115
    %4234 = vmatprep.subr.mxu0 0.0
    %4235 = vmatpush1.msra.mxu0 %v4112
    %4236 = vmatprep.subr.mxu0 0.0
    %4237 = vmatpush1.msra.mxu0 %v4109
    %4238 = vmatprep.subr.mxu0 0.0
    %4239 = vmatpush1.msra.mxu0 %v4106
    %4240 = vmatprep.subr.mxu0 0.0
    %4241 = vmatpush1.msra.mxu0 %v4103
    %4242 = vmatprep.subr.mxu0 0.0
    %4243 = vmatpush1.msra.mxu0 %v4100
    %4244 = vmatprep.subr.mxu0 0.0
    %4245 = vmatpush1.msra.mxu0 %v4097
    %4246 = vmatprep.subr.mxu0 0.0
    %4247 = vmatpush2.msra.mxu0 0.0
    %4248 = vmatprep.subr.mxu0 0.0
    %4249 = vmatpush2.msra.mxu0 0.0
    %4250 = vmatprep.subr.mxu0 0.0
    %4251 = vmatpush2.msra.mxu0 0.0
    %4252 = vmatprep.subr.mxu0 0.0
    %4253 = vmatpush2.msra.mxu0 0.0
    %4254 = vmatprep.subr.mxu0 0.0
    %4255 = vmatpush2.msra.mxu0 0.0
    %4256 = vmatprep.subr.mxu0 0.0
    %4257 = vmatpush2.msra.mxu0 0.0
    %4258 = vmatprep.subr.mxu0 0.0
    %4259 = vmatpush2.msra.mxu0 0.0
    %4260 = vmatprep.subr.mxu0 0.0
    %4261 = vmatpush2.msra.mxu0 0.0
    %4262 = vmatprep.subr.mxu0 0.0
    %4263 = vmatpush2.msra.mxu0 0.0
    %4264 = vmatprep.subr.mxu0 0.0
    %4265 = vmatpush2.msra.mxu0 0.0
    %4266 = vmatprep.subr.mxu0 0.0
    %4267 = vmatpush2.msra.mxu0 0.0
    %4268 = vmatprep.subr.mxu0 0.0
    %4269 = vmatpush2.msra.mxu0 0.0
    %4270 = vmatprep.subr.mxu0 0.0
    %4271 = vmatpush2.msra.mxu0 0.0
    %4272 = vmatprep.subr.mxu0 0.0
    %4273 = vmatpush2.msra.mxu0 0.0
    %4274 = vmatprep.subr.mxu0 0.0
    %4275 = vmatpush2.msra.mxu0 0.0
    %4276 = vmatprep.subr.mxu0 0.0
    %4277 = vmatpush2.msra.mxu0 0.0
    %4278 = vmatprep.mubr.f32.mxu0 0.0
    %4279 = vmatmul.mubr.f32.gmra.mxu0 %v4089
    %v4280 = vpop.f32.mrf.mxu0
    %v4281 = vadd.f32 0.0, %v4280
    %v4282 = vpop.f32.mrf.mxu0
    %4283 = vdwg.mxu0
    %v4284 = vadd.f32 %v4092, %v4210
    %v4285 = vxor.u32 %v4284, 2147483648
    %v4286 = vmul.f32 %v4285, 1.442695
    %v4287 = vpow.pop %v4286
    %v4288 = vadd.f32 %v4287, 1.0
    %v4289 = vrcp.pop %v4288
    %v4290 = vmul.f32 1.0, %v4289
    %v4291 = vadd.f32 %v4093, %v4212
    %v4292 = vxor.u32 %v4291, 2147483648
    %v4293 = vmul.f32 %v4292, 1.442695
    %v4294 = vpow.pop %v4293
    %v4295 = vadd.f32 %v4294, 1.0
    %v4296 = vrcp.pop %v4295
    %v4297 = vmul.f32 1.0, %v4296
    %v4298 = vadd.f32 %v4281, %v368
    %v4299 = vmul.f32 %v4290, %v4298
    %v4300 = vadd.f32 %v4094, %v4299
    %v4301 = vtanh.pop %v4300
    %v4302 = vsub.f32 1.0, %v4297
    %v4303 = vmul.f32 %v4302, %v4301
    %v4304 = vmul.f32 %v4297, %v4089
    %v4305 = vadd.f32 %v4303, %v4304
    %4306 = vst [vmem:[#allocation3] sm:$0xff] %v4305
    %v4307 = vld [vmem:[#allocation3] sm:$0xff]
    %v4308 = vld [vmem:[#allocation3 + $0x8] sm:$0xff]
    %v4309 = vld [vmem:[#allocation3 + $0x10] sm:$0xff]
    %v4310 = vld [vmem:[#allocation3 + $0x18] sm:$0xff]
    %v4311 = vld [vmem:[#allocation3 + $0x20] sm:$0xff]
    %v4312 = vld [vmem:[#allocation3 + $0x28] sm:$0xff]
    %v4313 = vld [vmem:[#allocation3 + $0x30] sm:$0xff]
    %v4314 = vld [vmem:[#allocation3 + $0x38] sm:$0xff]
    %v4315 = vld [vmem:[#allocation3 + $0x40] sm:$0xff]
    %v4316 = vld [vmem:[#allocation3 + $0x48] sm:$0xff]
    %v4317 = vld [vmem:[#allocation3 + $0x50] sm:$0xff]
    %v4318 = vld [vmem:[#allocation3 + $0x58] sm:$0xff]
    %v4319 = vld [vmem:[#allocation3 + $0x60] sm:$0xff]
    %v4320 = vld [vmem:[#allocation3 + $0x68] sm:$0xff]
    %v4321 = vld [vmem:[#allocation3 + $0x70] sm:$0xff]
    %v4322 = vld [vmem:[#allocation3 + $0x78] sm:$0xff]
    %v4323 = vld [vmem:[#allocation12] sm:$0xff]
    %v4324 = vld [vmem:[#allocation12 + $0x8] sm:$0xff]
    %v4325 = vld [vmem:[#allocation12 + $0x10] sm:$0xff]
    %v4326 = vld [vmem:[#allocation12 + $0x18] sm:$0xff]
    %v4327 = vld [vmem:[#allocation12 + $0x20] sm:$0xff]
    %v4328 = vld [vmem:[#allocation12 + $0x28] sm:$0xff]
    %v4329 = vld [vmem:[#allocation12 + $0x30] sm:$0xff]
    %v4330 = vld [vmem:[#allocation12 + $0x38] sm:$0xff]
    %v4331 = vld [vmem:[#allocation12 + $0x40] sm:$0xff]
    %v4332 = vld [vmem:[#allocation12 + $0x48] sm:$0xff]
    %v4333 = vld [vmem:[#allocation12 + $0x50] sm:$0xff]
    %v4334 = vld [vmem:[#allocation12 + $0x58] sm:$0xff]
    %v4335 = vld [vmem:[#allocation12 + $0x60] sm:$0xff]
    %v4336 = vld [vmem:[#allocation12 + $0x68] sm:$0xff]
    %v4337 = vld [vmem:[#allocation12 + $0x70] sm:$0xff]
    %v4338 = vld [vmem:[#allocation12 + $0x78] sm:$0xff]
    %v4339 = vld [vmem:[%s10] sm:$0x1]
    %v4341 = vlaneseq
    %v4342 = vshrl.u32 %v4341, 7
    %v4343 = vsub.s32 0, %v4342
    %v4344 = vrot.slane %v4339, %v4343
    %4346 = vmatprep.subr.mxu0 0.0
    %4347 = vmatpush1.msra.mxu0 %v4338
    %4348 = vmatprep.subr.mxu0 0.0
    %4349 = vmatpush1.msra.mxu0 %v4337
    %4350 = vmatprep.subr.mxu0 0.0
    %4351 = vmatpush1.msra.mxu0 %v4336
    %4352 = vmatprep.subr.mxu0 0.0
    %4353 = vmatpush1.msra.mxu0 %v4335
    %4354 = vmatprep.subr.mxu0 0.0
    %4355 = vmatpush1.msra.mxu0 %v4334
    %4356 = vmatprep.subr.mxu0 0.0
    %4357 = vmatpush1.msra.mxu0 %v4333
    %4358 = vmatprep.subr.mxu0 0.0
    %4359 = vmatpush1.msra.mxu0 %v4332
    %4360 = vmatprep.subr.mxu0 0.0
    %4361 = vmatpush1.msra.mxu0 %v4331
    %4362 = vmatprep.subr.mxu0 0.0
    %4363 = vmatpush1.msra.mxu0 %v4330
    %4364 = vmatprep.subr.mxu0 0.0
    %4365 = vmatpush1.msra.mxu0 %v4329
    %4366 = vmatprep.subr.mxu0 0.0
    %4367 = vmatpush1.msra.mxu0 %v4328
    %4368 = vmatprep.subr.mxu0 0.0
    %4369 = vmatpush1.msra.mxu0 %v4327
    %4370 = vmatprep.subr.mxu0 0.0
    %4371 = vmatpush1.msra.mxu0 %v4326
    %4372 = vmatprep.subr.mxu0 0.0
    %4373 = vmatpush1.msra.mxu0 %v4325
    %4374 = vmatprep.subr.mxu0 0.0
    %4375 = vmatpush1.msra.mxu0 %v4324
    %4376 = vmatprep.subr.mxu0 0.0
    %4377 = vmatpush1.msra.mxu0 %v4323
    %4378 = vmatprep.subr.mxu0 0.0
    %4379 = vmatpush2.msra.mxu0 0.0
    %4380 = vmatprep.subr.mxu0 0.0
    %4381 = vmatpush2.msra.mxu0 0.0
    %4382 = vmatprep.subr.mxu0 0.0
    %4383 = vmatpush2.msra.mxu0 0.0
    %4384 = vmatprep.subr.mxu0 0.0
    %4385 = vmatpush2.msra.mxu0 0.0
    %4386 = vmatprep.subr.mxu0 0.0
    %4387 = vmatpush2.msra.mxu0 0.0
    %4388 = vmatprep.subr.mxu0 0.0
    %4389 = vmatpush2.msra.mxu0 0.0
    %4390 = vmatprep.subr.mxu0 0.0
    %4391 = vmatpush2.msra.mxu0 0.0
    %4392 = vmatprep.subr.mxu0 0.0
    %4393 = vmatpush2.msra.mxu0 0.0
    %4394 = vmatprep.subr.mxu0 0.0
    %4395 = vmatpush2.msra.mxu0 0.0
    %4396 = vmatprep.subr.mxu0 0.0
    %4397 = vmatpush2.msra.mxu0 0.0
    %4398 = vmatprep.subr.mxu0 0.0
    %4399 = vmatpush2.msra.mxu0 0.0
    %4400 = vmatprep.subr.mxu0 0.0
    %4401 = vmatpush2.msra.mxu0 0.0
    %4402 = vmatprep.subr.mxu0 0.0
    %4403 = vmatpush2.msra.mxu0 0.0
    %4404 = vmatprep.subr.mxu0 0.0
    %4405 = vmatpush2.msra.mxu0 0.0
    %4406 = vmatprep.subr.mxu0 0.0
    %4407 = vmatpush2.msra.mxu0 0.0
    %4408 = vmatprep.subr.mxu0 0.0
    %4409 = vmatpush2.msra.mxu0 0.0
    %4410 = vmatprep.mubr.f32.mxu0 0.0
    %4411 = vmatmul.mubr.f32.gmra.mxu0 %v4307
    %v4412 = vpop.f32.mrf.mxu0
    %v4413 = vadd.f32 %v4344, %v4412
    %v4414 = vpop.f32.mrf.mxu0
    %4415 = vmatprep.mubr.f32.mxu0 0.0
    %4416 = vmatmul.mubr.f32.gmra.mxu0 %v4308
    %v4417 = vpop.f32.mrf.mxu0
    %v4418 = vadd.f32 %v4344, %v4417
    %v4419 = vpop.f32.mrf.mxu0
    %4420 = vmatprep.mubr.f32.mxu0 0.0
    %4421 = vmatmul.mubr.f32.gmra.mxu0 %v4309
    %v4422 = vpop.f32.mrf.mxu0
    %v4423 = vadd.f32 %v4344, %v4422
    %v4424 = vpop.f32.mrf.mxu0
    %4425 = vmatprep.mubr.f32.mxu0 0.0
    %4426 = vmatmul.mubr.f32.gmra.mxu0 %v4310
    %v4427 = vpop.f32.mrf.mxu0
    %v4428 = vadd.f32 %v4344, %v4427
    %v4429 = vpop.f32.mrf.mxu0
    %4430 = vmatprep.mubr.f32.mxu0 0.0
    %4431 = vmatmul.mubr.f32.gmra.mxu0 %v4311
    %v4432 = vpop.f32.mrf.mxu0
    %v4433 = vadd.f32 %v4344, %v4432
    %v4434 = vpop.f32.mrf.mxu0
    %4435 = vmatprep.mubr.f32.mxu0 0.0
    %4436 = vmatmul.mubr.f32.gmra.mxu0 %v4312
    %v4437 = vpop.f32.mrf.mxu0
    %v4438 = vadd.f32 %v4344, %v4437
    %v4439 = vpop.f32.mrf.mxu0
    %4440 = vmatprep.mubr.f32.mxu0 0.0
    %4441 = vmatmul.mubr.f32.gmra.mxu0 %v4313
    %v4442 = vpop.f32.mrf.mxu0
    %v4443 = vadd.f32 %v4344, %v4442
    %v4444 = vpop.f32.mrf.mxu0
    %4445 = vmatprep.mubr.f32.mxu0 0.0
    %4446 = vmatmul.mubr.f32.gmra.mxu0 %v4314
    %v4447 = vpop.f32.mrf.mxu0
    %v4448 = vadd.f32 %v4344, %v4447
    %v4449 = vpop.f32.mrf.mxu0
    %4450 = vmatprep.mubr.f32.mxu0 0.0
    %4451 = vmatmul.mubr.f32.gmra.mxu0 %v4315
    %v4452 = vpop.f32.mrf.mxu0
    %v4453 = vadd.f32 %v4344, %v4452
    %v4454 = vpop.f32.mrf.mxu0
    %4455 = vmatprep.mubr.f32.mxu0 0.0
    %4456 = vmatmul.mubr.f32.gmra.mxu0 %v4316
    %v4457 = vpop.f32.mrf.mxu0
    %v4458 = vadd.f32 %v4344, %v4457
    %v4459 = vpop.f32.mrf.mxu0
    %4460 = vmatprep.mubr.f32.mxu0 0.0
    %4461 = vmatmul.mubr.f32.gmra.mxu0 %v4317
    %v4462 = vpop.f32.mrf.mxu0
    %v4463 = vadd.f32 %v4344, %v4462
    %v4464 = vpop.f32.mrf.mxu0
    %4465 = vmatprep.mubr.f32.mxu0 0.0
    %4466 = vmatmul.mubr.f32.gmra.mxu0 %v4318
    %v4467 = vpop.f32.mrf.mxu0
    %v4468 = vadd.f32 %v4344, %v4467
    %v4469 = vpop.f32.mrf.mxu0
    %4470 = vmatprep.mubr.f32.mxu0 0.0
    %4471 = vmatmul.mubr.f32.gmra.mxu0 %v4319
    %v4472 = vpop.f32.mrf.mxu0
    %v4473 = vadd.f32 %v4344, %v4472
    %v4474 = vpop.f32.mrf.mxu0
    %4475 = vmatprep.mubr.f32.mxu0 0.0
    %4476 = vmatmul.mubr.f32.gmra.mxu0 %v4320
    %v4477 = vpop.f32.mrf.mxu0
    %v4478 = vadd.f32 %v4344, %v4477
    %v4479 = vpop.f32.mrf.mxu0
    %4480 = vmatprep.mubr.f32.mxu0 0.0
    %4481 = vmatmul.mubr.f32.gmra.mxu0 %v4321
    %v4482 = vpop.f32.mrf.mxu0
    %v4483 = vadd.f32 %v4344, %v4482
    %v4484 = vpop.f32.mrf.mxu0
    %4485 = vmatprep.mubr.f32.mxu0 0.0
    %4486 = vmatmul.mubr.f32.gmra.mxu0 %v4322
    %v4487 = vpop.f32.mrf.mxu0
    %v4488 = vadd.f32 %v4344, %v4487
    %v4489 = vpop.f32.mrf.mxu0
    %4490 = vdwg.mxu0
    %4491 = vst [vmem:[#allocation13] sm:$0xff] %v4413
    %4492 = vst [vmem:[#allocation13 + $0x8] sm:$0xff] %v4418
    %4493 = vst [vmem:[#allocation13 + $0x10] sm:$0xff] %v4423
    %4494 = vst [vmem:[#allocation13 + $0x18] sm:$0xff] %v4428
    %4495 = vst [vmem:[#allocation13 + $0x20] sm:$0xff] %v4433
    %4496 = vst [vmem:[#allocation13 + $0x28] sm:$0xff] %v4438
    %4497 = vst [vmem:[#allocation13 + $0x30] sm:$0xff] %v4443
    %4498 = vst [vmem:[#allocation13 + $0x38] sm:$0xff] %v4448
    %4499 = vst [vmem:[#allocation13 + $0x40] sm:$0xff] %v4453
    %4500 = vst [vmem:[#allocation13 + $0x48] sm:$0xff] %v4458
    %4501 = vst [vmem:[#allocation13 + $0x50] sm:$0xff] %v4463
    %4502 = vst [vmem:[#allocation13 + $0x58] sm:$0xff] %v4468
    %4503 = vst [vmem:[#allocation13 + $0x60] sm:$0xff] %v4473
    %4504 = vst [vmem:[#allocation13 + $0x68] sm:$0xff] %v4478
    %4505 = vst [vmem:[#allocation13 + $0x70] sm:$0xff] %v4483
    %4506 = vst [vmem:[#allocation13 + $0x78] sm:$0xff] %v4488
    // Predicated region
    $region66: #{tpu_custom_call.1} parent=1 // pred_check
      _
    $region67: #{tpu_custom_call.1} parent=1 // pred_check_branch
      %4508 = sbr.rel (0) target = $region69
    $region68: #{tpu_custom_call.1} parent=1 // pred_region
      %s4510 = ssub.s32 2048, 2048
      %4511 = vsyncadd [#allocation6], %s4510
      %s4512 = sshll.u32 [#allocation13], 4
      %s4513 = int_to_ptr.vmem [resolvable:$true] %s4512
      %4518 = dma.vmem_to_hbm [thread:$0]  %s4513, 2048, %s11, [#allocation6], 128, 128, 8
    $region69: #{tpu_custom_call.1} parent=1 // pred_fallthru
      _
    // Predicated region
    $region70: #{tpu_custom_call.1} parent=1 // pred_check
      _
    $region71: #{tpu_custom_call.1} parent=1 // pred_check_branch
      %4520 = sbr.rel (0) target = $region73
    $region72: #{tpu_custom_call.1} parent=1 // pred_region
      %4521 = dma.done [#allocation6], 2048
    $region73: #{tpu_custom_call.1} parent=1 // pred_fallthru
      _
    %4522 = vsyncpa [#allocation5], 1
    %4523 = vsyncpa [#allocation8], 1
    %4524 = vsyncpa [#allocation11], 1
    %4525 = vsyncpa [#allocation6], 1

</llo_original>
